<compile_context>
chip_gen: v7x
topology: tpu7x:2x2x1
jax: 0.10.0
libtpu: 0.0.40
codegen_flags: <defaults>
</compile_context>

<pallas_src>
import jax
import jax.numpy as jnp
from jax.experimental import pallas as pl
from jax.experimental.pallas import tpu as pltpu


def _linear_kernel(x_ref, w_ref, b_ref, o_ref):
    # x_ref: (M, K) bf16   w_ref: (K, tn) bf16   b_ref: (1, tn) f32
    # Single full-K MXU matmul with f32 accumulation; bias added once and the
    # result is downcast/written directly to the output block.
    o_ref[...] = (
        jnp.dot(x_ref[...], w_ref[...], preferred_element_type=jnp.float32)
        + b_ref[...]
    ).astype(o_ref.dtype)


def _tensorcores_per_chip():
    """How many TensorCores a single pallas_call grid can span.

    v5e / v6e expose 1 TC per chip; v7x exposes 2 (shared via
    dimension_semantics="parallel"). Unknown platforms fall back to 1,
    which is always correct (just a single bigger tile).
    """
    try:
        kind = jax.devices()[0].device_kind.lower()
    except Exception:
        return 1
    return 2 if "v7" in kind else 1


def _round_up(x, m):
    return (x + m - 1) // m * m


def linear_bottleneck_matmul(x_flat, w_t, b, *, n_tiles=None):
    """Computes x_flat @ w_t + b with a Pallas kernel.

    x_flat: (M, K) bfloat16 (activations, cast by caller)
    w_t:    (K, N) bfloat16 (transpose of the PyTorch (N, K) weight)
    b:      (N,)   float32
    Returns (M, N) float32.
    """
    M, K = x_flat.shape
    Kw, N = w_t.shape
    assert Kw == K, (Kw, K)

    if n_tiles is None:
        n_tiles = _tensorcores_per_chip()
    # One N-tile per TensorCore. Fall back to a single full-N tile whenever
    # the split would violate the lane=128 tiling rule.
    if n_tiles < 1 or N % n_tiles != 0 or (N // n_tiles) % 128 != 0:
        n_tiles = 1
    tn = N // n_tiles
    # Output blocks must be full-N or a multiple of 128 lanes (unmasked vst).
    assert tn == N or tn % 128 == 0, (N, tn)

    b2d = b.reshape(1, N)

    # VMEM budget for the full-K scheme: double-buffered weight slab dominates
    # plus (padded) X / output tiles and bias. Raise the scoped limit rather
    # than shrinking tn if shapes grow; cap below v7x's 64 MiB physical VMEM.
    w_bytes = K * tn * w_t.dtype.itemsize
    x_bytes = _round_up(M, 8) * K * x_flat.dtype.itemsize
    o_bytes = _round_up(M, 8) * tn * 4
    need = 2 * w_bytes + 2 * x_bytes + 2 * o_bytes + _round_up(N, 128) * 4
    vmem_limit = min(max(32 * 1024 * 1024, int(need * 1.25)),
                     56 * 1024 * 1024)

    cost = pl.CostEstimate(
        flops=2 * M * K * N,
        transcendentals=0,
        bytes_accessed=(M * K * x_flat.dtype.itemsize)
        + (K * N * w_t.dtype.itemsize)
        + (N * 4)
        + (M * N * 4),
    )

    return pl.pallas_call(
        _linear_kernel,
        out_shape=jax.ShapeDtypeStruct((M, N), jnp.float32),
        grid_spec=pl.GridSpec(
            grid=(n_tiles,),
            in_specs=[
                # Full (M, K) activation block, resident across all N tiles.
                pl.BlockSpec((M, K), lambda j: (0, 0)),
                # (K, tn) weight slab — the only real HBM traffic.
                pl.BlockSpec((K, tn), lambda j: (0, j)),
                # (1, tn) bias slice.
                pl.BlockSpec((1, tn), lambda j: (0, j)),
            ],
            out_specs=pl.BlockSpec((M, tn), lambda j: (0, j)),
        ),
        compiler_params=pltpu.CompilerParams(
            # With one tile per core there is nothing to pipeline; "parallel"
            # only serves to shard the 2 tiles across v7x's TensorCores.
            dimension_semantics=("parallel",),
            vmem_limit_bytes=vmem_limit,
        ),
        cost_estimate=cost,
    )(x_flat, w_t, b2d)


class LinearBottleneckPallas:
    """JAX/Pallas equivalent of the PyTorch LinearBottleneck module."""

    def __init__(self, width, height, hidden_dim, in_features, key):
        self.width = width
        self.height = height
        self.hidden_dim = hidden_dim
        out_features = width * height * hidden_dim

        # Deterministic init mimicking nn.Linear defaults:
        # U(-1/sqrt(in_features), 1/sqrt(in_features)) for weight and bias.
        kw, kb = jax.random.split(key)
        bound = 1.0 / (in_features ** 0.5)
        weight = jax.random.uniform(
            kw, (out_features, in_features), jnp.float32, -bound, bound
        )
        bias = jax.random.uniform(
            kb, (out_features,), jnp.float32, -bound, bound
        )
        # f32 "master" parameters (PyTorch-equivalent numerics, kept only for
        # reference/validation); the kernel streams a bf16 (K, N) copy —
        # a deliberate perf/accuracy trade-off since the weight stream is
        # >95% of all HBM bytes.
        self.weight_f32_t = jnp.transpose(weight)              # (K, N) f32
        self.weight_t = self.weight_f32_t.astype(jnp.bfloat16)  # (K, N) bf16
        self.bias = bias                                         # (N,) f32
        # TODO(synk): for repeated inference, keep weight_t resident in VMEM
        # across calls (cross-pallas_call prefetch / VMEM space constraint)
        # instead of re-streaming ~4 MiB from HBM per invocation.
        # TODO(synk): optional weight quantization (fp8 on v7x, int8+per-out
        # scales on v5e/v6e) would halve the dominant weight stream again.
        # TODO(synk): add an M ("parallel") grid axis with tm=128/256 blocks
        # if this is ever called with batch >> 2 (MXU-bound regime).

    def __call__(self, x):
        # x: (N, C, H, W) — NCHW like PyTorch.
        n = x.shape[0]
        x_flat = x.reshape(n, -1).astype(jnp.bfloat16)  # nn.Flatten semantics
        y = linear_bottleneck_matmul(x_flat, self.weight_t, self.bias)
        # torch: x.reshape(-1, height, width, hidden_dim)
        return y.reshape(-1, self.height, self.width, self.hidden_dim)


if __name__ == "__main__":
    key = jax.random.PRNGKey(0)
    k_x, k_param = jax.random.split(key)

    # Small shapes: batch=2, channels=4, spatial=16 -> in_features = 1024.
    batch, channels, H, W = 2, 4, 16, 16
    width, height, hidden_dim = 16, 16, 8  # out_features = 16*16*8 = 2048

    x = jax.random.normal(k_x, (batch, channels, H, W), jnp.float32)

    model = LinearBottleneckPallas(
        width=width,
        height=height,
        hidden_dim=hidden_dim,
        in_features=channels * H * W,
        key=k_param,
    )

    out = model(x)
    out = jax.block_until_ready(out)

    assert out.shape == (batch, height, width, hidden_dim), out.shape
    assert out.dtype == jnp.float32, out.dtype

    # 1) Exact-operand reference (bf16 inputs, f32 accumulation): verifies the
    #    kernel's matmul/bias/reshape plumbing with tight tolerance.
    x_flat_bf16 = x.reshape(batch, -1).astype(jnp.bfloat16)
    ref_bf16 = (
        jnp.dot(x_flat_bf16, model.weight_t, preferred_element_type=jnp.float32)
        + model.bias
    ).reshape(-1, height, width, hidden_dim)
    assert jnp.allclose(out, ref_bf16, atol=1e-3, rtol=1e-3)

    # 2) True f32 reference (PyTorch nn.Linear numerics): the bf16 weight /
    #    activation streaming is a stated perf/accuracy trade-off, so only a
    #    loose tolerance is expected to hold at K=1024.
    ref_f32 = (
        jnp.dot(x.reshape(batch, -1), model.weight_f32_t) + model.bias
    ).reshape(-1, height, width, hidden_dim)
    assert jnp.allclose(out, ref_f32, atol=3e-2, rtol=3e-2)

    print("KERNEL_OK")
</pallas_src>

<mosaic_0001>
module attributes {stable_mosaic.version = 11 : i64} {
  func.func @_linear_kernel(%arg0: i32, %arg1: memref<2x1024xbf16, #tpu.memory_space<vmem>>, %arg2: memref<1024x2048xbf16, #tpu.memory_space<vmem>>, %arg3: memref<1x2048xf32, #tpu.memory_space<vmem>>, %arg4: memref<2x2048xf32, #tpu.memory_space<vmem>>) attributes {dimension_semantics = [#tpu.dimension_semantics<parallel>], iteration_bounds = array<i64: 1>, scalar_prefetch = 0 : i64, scratch_operands = 0 : i64, tpu.core_type = #tpu.core_type<tc>, window_params = [{pipeline_mode = #tpu.pipeline_mode<synchronous>, transform_indices = @transform_0, window_bounds = array<i64: 2, 1024>}, {transform_indices = @transform_1, window_bounds = array<i64: 1024, 2048>}, {transform_indices = @transform_2, window_bounds = array<i64: 1, 2048>}, {transform_indices = @transform_3, window_bounds = array<i64: 2, 2048>}]} {
    %c0 = arith.constant 0 : index
    %c0_0 = arith.constant 0 : index
    %0 = vector.load %arg1[%c0, %c0_0] : memref<2x1024xbf16, #tpu.memory_space<vmem>>, vector<2x1024xbf16>
    %c0_1 = arith.constant 0 : index
    %c0_2 = arith.constant 0 : index
    %1 = vector.load %arg2[%c0_1, %c0_2] : memref<1024x2048xbf16, #tpu.memory_space<vmem>>, vector<1024x2048xbf16>
    %cst = arith.constant dense<0.000000e+00> : vector<2x2048xf32>
    %2 = tpu.matmul %0, %1, %cst {dimension_numbers = #tpu.dot_dimension_numbers<[1], [0], [0], [1], [0, 0, 1, 1], [], []>} : vector<2x1024xbf16>, vector<1024x2048xbf16>, vector<2x2048xf32> -> vector<2x2048xf32>
    %c0_3 = arith.constant 0 : index
    %c0_4 = arith.constant 0 : index
    %3 = vector.load %arg3[%c0_3, %c0_4] : memref<1x2048xf32, #tpu.memory_space<vmem>>, vector<1x2048xf32>
    %4 = vector.broadcast %3 : vector<1x2048xf32> to vector<2x2048xf32>
    %5 = arith.addf %2, %4 : vector<2x2048xf32>
    %c0_5 = arith.constant 0 : index
    %c0_6 = arith.constant 0 : index
    %6 = vector.load %arg4[%c0_5, %c0_6] : memref<2x2048xf32, #tpu.memory_space<vmem>>, vector<2x2048xf32>
    tpu.vector_store %arg4[%c0_5, %c0_6], %5 {strides = array<i32>} : memref<2x2048xf32, #tpu.memory_space<vmem>>, vector<2x2048xf32>,
    return
  }
  func.func @transform_0(%arg0: i32) -> (i32, i32) {
    %c0_i32 = arith.constant 0 : i32
    %c0_i32_0 = arith.constant 0 : i32
    %c0_i32_1 = arith.constant 0 : i32
    return %c0_i32, %c0_i32_0 : i32, i32
  }
  func.func @transform_1(%arg0: i32) -> (i32, i32) {
    %c0_i32 = arith.constant 0 : i32
    %c0_i32_0 = arith.constant 0 : i32
    return %c0_i32, %arg0 : i32, i32
  }
  func.func @transform_2(%arg0: i32) -> (i32, i32) {
    %c0_i32 = arith.constant 0 : i32
    %c0_i32_0 = arith.constant 0 : i32
    return %c0_i32, %arg0 : i32, i32
  }
  func.func @transform_3(%arg0: i32) -> (i32, i32) {
    %c0_i32 = arith.constant 0 : i32
    %c0_i32_0 = arith.constant 0 : i32
    return %c0_i32, %arg0 : i32, i32
  }
}

</mosaic_0001>

<llo_original>
// kernel: tpu_custom_call.1
$region0: #{tpu_custom_call.1}
  #allocation0 [shape = 'u32[]', space=smem, size = 0x4, offset = 0x4, fixed_abs, tag = 'smem constant byte address 0x4 - core index']
  #allocation1 [shape = 'u32[144,128]{1,0:T(1,128)}', space=vmem, size = 0x12000, scoped, tag = 'internal scratch']
  %s0 = inlined_call_operand.hbm [shape: bf16[2,1024], index: 0, kind: input, shape index: {}]
  %s1 = inlined_call_operand.hbm [shape: bf16[1024,2048], index: 1, kind: input, shape index: {}]
  %s2 = inlined_call_operand.hbm [shape: f32[1,2048], index: 2, kind: input, shape index: {}]
  %s3 = inlined_call_operand.hbm [shape: f32[2,2048], index: 3, kind: output, shape index: {}]
  %s4 = sld [smem:[#allocation0]]
  $region34: #{tpu_custom_call.1} parent=0
    _
  %s6 = ssub.s32 1, %s4
  %s7 = scalar_select 0, %s6, %s4
  $region1: #{tpu_custom_call.1} parent=0
    #allocation2 [shape = 'u8[4096]{0}', space=vmem, size = 0x1000, scoped, tag = 'input window, operand 0, single buffered']
    #allocation3 [shape = 's32[1]{0}', space=sflag, size = 0x4, scoped, tag = 'scoped memory for tpu_custom_call.1']
    #allocation4 [shape = 's32[1]{0}', space=sflag, size = 0x4, scoped, tag = 'scoped memory for tpu_custom_call.1']
    #allocation5 [shape = 'u8[4194304]{0}', space=vmem, size = 0x400000, scoped, tag = 'input window, operand 1, single buffered']
    #allocation6 [shape = 's32[1]{0}', space=sflag, size = 0x4, scoped, tag = 'scoped memory for tpu_custom_call.1']
    #allocation7 [shape = 'u8[8192]{0}', space=vmem, size = 0x2000, scoped, tag = 'input window, operand 2, single buffered']
    #allocation8 [shape = 'u8[16384]{0}', space=vmem, size = 0x4000, scoped, tag = 'output window, operand 0, single buffered']
    %8 = vsyncpa [#allocation3], 0
    %9 = vsyncpa [#allocation6], 0
    %10 = vsyncpa [#allocation4], 0
    // Predicated region
    $region2: #{tpu_custom_call.1} parent=1 // pred_check
      _
    $region3: #{tpu_custom_call.1} parent=1 // pred_check_branch
      %12 = sbr.rel (0) target = $region5
    $region4: #{tpu_custom_call.1} parent=1 // pred_region
      %s14 = ssub.s32 128, 128
      %15 = vsyncadd [#allocation3], %s14
      %s17 = sshll.u32 [#allocation2], 4
      %s18 = int_to_ptr.vmem [resolvable:$true] %s17
      %20 = dma.hbm_to_vmem [thread:$0]  %s0, 128, %s18, [#allocation3]
    $region5: #{tpu_custom_call.1} parent=1 // pred_fallthru
      _
    // Predicated region
    $region6: #{tpu_custom_call.1} parent=1 // pred_check
      _
    $region7: #{tpu_custom_call.1} parent=1 // pred_check_branch
      %22 = sbr.rel (0) target = $region9
    $region8: #{tpu_custom_call.1} parent=1 // pred_region
      %s24 = ssub.s32 131072, 131072
      %25 = vsyncadd [#allocation6], %s24
      %s26 = sshll.u32 [#allocation5], 4
      %s27 = int_to_ptr.vmem [resolvable:$true] %s26
      %32 = dma.hbm_to_vmem [thread:$0]  %s1, 131072, %s27, [#allocation6], 1024, 1024, 64
    $region9: #{tpu_custom_call.1} parent=1 // pred_fallthru
      _
    // Predicated region
    $region10: #{tpu_custom_call.1} parent=1 // pred_check
      _
    $region11: #{tpu_custom_call.1} parent=1 // pred_check_branch
      %34 = sbr.rel (0) target = $region13
    $region12: #{tpu_custom_call.1} parent=1 // pred_region
      %s36 = ssub.s32 256, 256
      %37 = vsyncadd [#allocation6], %s36
      %s39 = sshll.u32 [#allocation7], 4
      %s40 = int_to_ptr.vmem [resolvable:$true] %s39
      %42 = dma.hbm_to_vmem [thread:$0]  %s2, 256, %s40, [#allocation6]
    $region13: #{tpu_custom_call.1} parent=1 // pred_fallthru
      _
    // Predicated region
    $region14: #{tpu_custom_call.1} parent=1 // pred_check
      _
    $region15: #{tpu_custom_call.1} parent=1 // pred_check_branch
      %44 = sbr.rel (0) target = $region17
    $region16: #{tpu_custom_call.1} parent=1 // pred_region
      %45 = dma.done [#allocation3], 128
    $region17: #{tpu_custom_call.1} parent=1 // pred_fallthru
      _
    // Predicated region
    $region18: #{tpu_custom_call.1} parent=1 // pred_check
      _
    $region19: #{tpu_custom_call.1} parent=1 // pred_check_branch
      %47 = sbr.rel (0) target = $region21
    $region20: #{tpu_custom_call.1} parent=1 // pred_region
      %48 = dma.done [#allocation6], 131072
    $region21: #{tpu_custom_call.1} parent=1 // pred_fallthru
      _
    // Predicated region
    $region22: #{tpu_custom_call.1} parent=1 // pred_check
      _
    $region23: #{tpu_custom_call.1} parent=1 // pred_check_branch
      %50 = sbr.rel (0) target = $region25
    $region24: #{tpu_custom_call.1} parent=1 // pred_region
      %51 = dma.done [#allocation6], 256
    $region25: #{tpu_custom_call.1} parent=1 // pred_fallthru
      _
    %v52 = vld [vmem:[#allocation2] sm:$0xff]
    %v53 = vld [vmem:[#allocation5] sm:$0xff]
    %v54 = vld [vmem:[#allocation5 + $0x8] sm:$0xff]
    %v55 = vld [vmem:[#allocation5 + $0x10] sm:$0xff]
    %v56 = vld [vmem:[#allocation5 + $0x18] sm:$0xff]
    %v57 = vld [vmem:[#allocation5 + $0x20] sm:$0xff]
    %v58 = vld [vmem:[#allocation5 + $0x28] sm:$0xff]
    %v59 = vld [vmem:[#allocation5 + $0x30] sm:$0xff]
    %v60 = vld [vmem:[#allocation5 + $0x38] sm:$0xff]
    %v61 = vld [vmem:[#allocation5 + $0x40] sm:$0xff]
    %v62 = vld [vmem:[#allocation5 + $0x48] sm:$0xff]
    %v63 = vld [vmem:[#allocation5 + $0x50] sm:$0xff]
    %v64 = vld [vmem:[#allocation5 + $0x58] sm:$0xff]
    %v65 = vld [vmem:[#allocation5 + $0x60] sm:$0xff]
    %v66 = vld [vmem:[#allocation5 + $0x68] sm:$0xff]
    %v67 = vld [vmem:[#allocation5 + $0x70] sm:$0xff]
    %v68 = vld [vmem:[#allocation5 + $0x78] sm:$0xff]
    %v69 = vld [vmem:[#allocation5 + $0x80] sm:$0xff]
    %v70 = vld [vmem:[#allocation5 + $0x88] sm:$0xff]
    %v71 = vld [vmem:[#allocation5 + $0x90] sm:$0xff]
    %v72 = vld [vmem:[#allocation5 + $0x98] sm:$0xff]
    %v73 = vld [vmem:[#allocation5 + $0xa0] sm:$0xff]
    %v74 = vld [vmem:[#allocation5 + $0xa8] sm:$0xff]
    %v75 = vld [vmem:[#allocation5 + $0xb0] sm:$0xff]
    %v76 = vld [vmem:[#allocation5 + $0xb8] sm:$0xff]
    %v77 = vld [vmem:[#allocation5 + $0xc0] sm:$0xff]
    %v78 = vld [vmem:[#allocation5 + $0xc8] sm:$0xff]
    %v79 = vld [vmem:[#allocation5 + $0xd0] sm:$0xff]
    %v80 = vld [vmem:[#allocation5 + $0xd8] sm:$0xff]
    %v81 = vld [vmem:[#allocation5 + $0xe0] sm:$0xff]
    %v82 = vld [vmem:[#allocation5 + $0xe8] sm:$0xff]
    %v83 = vld [vmem:[#allocation5 + $0xf0] sm:$0xff]
    %v84 = vld [vmem:[#allocation5 + $0xf8] sm:$0xff]
    %v85 = vld [vmem:[#allocation5 + $0x100] sm:$0xff]
    %v86 = vld [vmem:[#allocation5 + $0x108] sm:$0xff]
    %v87 = vld [vmem:[#allocation5 + $0x110] sm:$0xff]
    %v88 = vld [vmem:[#allocation5 + $0x118] sm:$0xff]
    %v89 = vld [vmem:[#allocation5 + $0x120] sm:$0xff]
    %v90 = vld [vmem:[#allocation5 + $0x128] sm:$0xff]
    %v91 = vld [vmem:[#allocation5 + $0x130] sm:$0xff]
    %v92 = vld [vmem:[#allocation5 + $0x138] sm:$0xff]
    %v93 = vld [vmem:[#allocation5 + $0x140] sm:$0xff]
    %v94 = vld [vmem:[#allocation5 + $0x148] sm:$0xff]
    %v95 = vld [vmem:[#allocation5 + $0x150] sm:$0xff]
    %v96 = vld [vmem:[#allocation5 + $0x158] sm:$0xff]
    %v97 = vld [vmem:[#allocation5 + $0x160] sm:$0xff]
    %v98 = vld [vmem:[#allocation5 + $0x168] sm:$0xff]
    %v99 = vld [vmem:[#allocation5 + $0x170] sm:$0xff]
    %v100 = vld [vmem:[#allocation5 + $0x178] sm:$0xff]
    %v101 = vld [vmem:[#allocation5 + $0x180] sm:$0xff]
    %v102 = vld [vmem:[#allocation5 + $0x188] sm:$0xff]
    %v103 = vld [vmem:[#allocation5 + $0x190] sm:$0xff]
    %v104 = vld [vmem:[#allocation5 + $0x198] sm:$0xff]
    %v105 = vld [vmem:[#allocation5 + $0x1a0] sm:$0xff]
    %v106 = vld [vmem:[#allocation5 + $0x1a8] sm:$0xff]
    %v107 = vld [vmem:[#allocation5 + $0x1b0] sm:$0xff]
    %v108 = vld [vmem:[#allocation5 + $0x1b8] sm:$0xff]
    %v109 = vld [vmem:[#allocation5 + $0x1c0] sm:$0xff]
    %v110 = vld [vmem:[#allocation5 + $0x1c8] sm:$0xff]
    %v111 = vld [vmem:[#allocation5 + $0x1d0] sm:$0xff]
    %v112 = vld [vmem:[#allocation5 + $0x1d8] sm:$0xff]
    %v113 = vld [vmem:[#allocation5 + $0x1e0] sm:$0xff]
    %v114 = vld [vmem:[#allocation5 + $0x1e8] sm:$0xff]
    %v115 = vld [vmem:[#allocation5 + $0x1f0] sm:$0xff]
    %v116 = vld [vmem:[#allocation5 + $0x1f8] sm:$0xff]
    %v117 = vld [vmem:[#allocation5 + $0x200] sm:$0xff]
    %v118 = vld [vmem:[#allocation5 + $0x208] sm:$0xff]
    %v119 = vld [vmem:[#allocation5 + $0x210] sm:$0xff]
    %v120 = vld [vmem:[#allocation5 + $0x218] sm:$0xff]
    %v121 = vld [vmem:[#allocation5 + $0x220] sm:$0xff]
    %v122 = vld [vmem:[#allocation5 + $0x228] sm:$0xff]
    %v123 = vld [vmem:[#allocation5 + $0x230] sm:$0xff]
    %v124 = vld [vmem:[#allocation5 + $0x238] sm:$0xff]
    %v125 = vld [vmem:[#allocation5 + $0x240] sm:$0xff]
    %v126 = vld [vmem:[#allocation5 + $0x248] sm:$0xff]
    %v127 = vld [vmem:[#allocation5 + $0x250] sm:$0xff]
    %v128 = vld [vmem:[#allocation5 + $0x258] sm:$0xff]
    %v129 = vld [vmem:[#allocation5 + $0x260] sm:$0xff]
    %v130 = vld [vmem:[#allocation5 + $0x268] sm:$0xff]
    %v131 = vld [vmem:[#allocation5 + $0x270] sm:$0xff]
    %v132 = vld [vmem:[#allocation5 + $0x278] sm:$0xff]
    %v133 = vld [vmem:[#allocation5 + $0x280] sm:$0xff]
    %v134 = vld [vmem:[#allocation5 + $0x288] sm:$0xff]
    %v135 = vld [vmem:[#allocation5 + $0x290] sm:$0xff]
    %v136 = vld [vmem:[#allocation5 + $0x298] sm:$0xff]
    %v137 = vld [vmem:[#allocation5 + $0x2a0] sm:$0xff]
    %v138 = vld [vmem:[#allocation5 + $0x2a8] sm:$0xff]
    %v139 = vld [vmem:[#allocation5 + $0x2b0] sm:$0xff]
    %v140 = vld [vmem:[#allocation5 + $0x2b8] sm:$0xff]
    %v141 = vld [vmem:[#allocation5 + $0x2c0] sm:$0xff]
    %v142 = vld [vmem:[#allocation5 + $0x2c8] sm:$0xff]
    %v143 = vld [vmem:[#allocation5 + $0x2d0] sm:$0xff]
    %v144 = vld [vmem:[#allocation5 + $0x2d8] sm:$0xff]
    %v145 = vld [vmem:[#allocation5 + $0x2e0] sm:$0xff]
    %v146 = vld [vmem:[#allocation5 + $0x2e8] sm:$0xff]
    %v147 = vld [vmem:[#allocation5 + $0x2f0] sm:$0xff]
    %v148 = vld [vmem:[#allocation5 + $0x2f8] sm:$0xff]
    %v149 = vld [vmem:[#allocation5 + $0x300] sm:$0xff]
    %v150 = vld [vmem:[#allocation5 + $0x308] sm:$0xff]
    %v151 = vld [vmem:[#allocation5 + $0x310] sm:$0xff]
    %v152 = vld [vmem:[#allocation5 + $0x318] sm:$0xff]
    %v153 = vld [vmem:[#allocation5 + $0x320] sm:$0xff]
    %v154 = vld [vmem:[#allocation5 + $0x328] sm:$0xff]
    %v155 = vld [vmem:[#allocation5 + $0x330] sm:$0xff]
    %v156 = vld [vmem:[#allocation5 + $0x338] sm:$0xff]
    %v157 = vld [vmem:[#allocation5 + $0x340] sm:$0xff]
    %v158 = vld [vmem:[#allocation5 + $0x348] sm:$0xff]
    %v159 = vld [vmem:[#allocation5 + $0x350] sm:$0xff]
    %v160 = vld [vmem:[#allocation5 + $0x358] sm:$0xff]
    %v161 = vld [vmem:[#allocation5 + $0x360] sm:$0xff]
    %v162 = vld [vmem:[#allocation5 + $0x368] sm:$0xff]
    %v163 = vld [vmem:[#allocation5 + $0x370] sm:$0xff]
    %v164 = vld [vmem:[#allocation5 + $0x378] sm:$0xff]
    %v165 = vld [vmem:[#allocation5 + $0x380] sm:$0xff]
    %v166 = vld [vmem:[#allocation5 + $0x388] sm:$0xff]
    %v167 = vld [vmem:[#allocation5 + $0x390] sm:$0xff]
    %v168 = vld [vmem:[#allocation5 + $0x398] sm:$0xff]
    %v169 = vld [vmem:[#allocation5 + $0x3a0] sm:$0xff]
    %v170 = vld [vmem:[#allocation5 + $0x3a8] sm:$0xff]
    %v171 = vld [vmem:[#allocation5 + $0x3b0] sm:$0xff]
    %v172 = vld [vmem:[#allocation5 + $0x3b8] sm:$0xff]
    %v173 = vld [vmem:[#allocation5 + $0x3c0] sm:$0xff]
    %v174 = vld [vmem:[#allocation5 + $0x3c8] sm:$0xff]
    %v175 = vld [vmem:[#allocation5 + $0x3d0] sm:$0xff]
    %v176 = vld [vmem:[#allocation5 + $0x3d8] sm:$0xff]
    %v177 = vld [vmem:[#allocation5 + $0x3e0] sm:$0xff]
    %v178 = vld [vmem:[#allocation5 + $0x3e8] sm:$0xff]
    %v179 = vld [vmem:[#allocation5 + $0x3f0] sm:$0xff]
    %v180 = vld [vmem:[#allocation5 + $0x3f8] sm:$0xff]
    %v181 = vld [vmem:[#allocation5 + $0x400] sm:$0xff]
    %v182 = vld [vmem:[#allocation5 + $0x408] sm:$0xff]
    %v183 = vld [vmem:[#allocation5 + $0x410] sm:$0xff]
    %v184 = vld [vmem:[#allocation5 + $0x418] sm:$0xff]
    %v185 = vld [vmem:[#allocation5 + $0x420] sm:$0xff]
    %v186 = vld [vmem:[#allocation5 + $0x428] sm:$0xff]
    %v187 = vld [vmem:[#allocation5 + $0x430] sm:$0xff]
    %v188 = vld [vmem:[#allocation5 + $0x438] sm:$0xff]
    %v189 = vld [vmem:[#allocation5 + $0x440] sm:$0xff]
    %v190 = vld [vmem:[#allocation5 + $0x448] sm:$0xff]
    %v191 = vld [vmem:[#allocation5 + $0x450] sm:$0xff]
    %v192 = vld [vmem:[#allocation5 + $0x458] sm:$0xff]
    %v193 = vld [vmem:[#allocation5 + $0x460] sm:$0xff]
    %v194 = vld [vmem:[#allocation5 + $0x468] sm:$0xff]
    %v195 = vld [vmem:[#allocation5 + $0x470] sm:$0xff]
    %v196 = vld [vmem:[#allocation5 + $0x478] sm:$0xff]
    %v197 = vld [vmem:[#allocation5 + $0x480] sm:$0xff]
    %v198 = vld [vmem:[#allocation5 + $0x488] sm:$0xff]
    %v199 = vld [vmem:[#allocation5 + $0x490] sm:$0xff]
    %v200 = vld [vmem:[#allocation5 + $0x498] sm:$0xff]
    %v201 = vld [vmem:[#allocation5 + $0x4a0] sm:$0xff]
    %v202 = vld [vmem:[#allocation5 + $0x4a8] sm:$0xff]
    %v203 = vld [vmem:[#allocation5 + $0x4b0] sm:$0xff]
    %v204 = vld [vmem:[#allocation5 + $0x4b8] sm:$0xff]
    %v205 = vld [vmem:[#allocation5 + $0x4c0] sm:$0xff]
    %v206 = vld [vmem:[#allocation5 + $0x4c8] sm:$0xff]
    %v207 = vld [vmem:[#allocation5 + $0x4d0] sm:$0xff]
    %v208 = vld [vmem:[#allocation5 + $0x4d8] sm:$0xff]
    %v209 = vld [vmem:[#allocation5 + $0x4e0] sm:$0xff]
    %v210 = vld [vmem:[#allocation5 + $0x4e8] sm:$0xff]
    %v211 = vld [vmem:[#allocation5 + $0x4f0] sm:$0xff]
    %v212 = vld [vmem:[#allocation5 + $0x4f8] sm:$0xff]
    %v213 = vld [vmem:[#allocation5 + $0x500] sm:$0xff]
    %v214 = vld [vmem:[#allocation5 + $0x508] sm:$0xff]
    %v215 = vld [vmem:[#allocation5 + $0x510] sm:$0xff]
    %v216 = vld [vmem:[#allocation5 + $0x518] sm:$0xff]
    %v217 = vld [vmem:[#allocation5 + $0x520] sm:$0xff]
    %v218 = vld [vmem:[#allocation5 + $0x528] sm:$0xff]
    %v219 = vld [vmem:[#allocation5 + $0x530] sm:$0xff]
    %v220 = vld [vmem:[#allocation5 + $0x538] sm:$0xff]
    %v221 = vld [vmem:[#allocation5 + $0x540] sm:$0xff]
    %v222 = vld [vmem:[#allocation5 + $0x548] sm:$0xff]
    %v223 = vld [vmem:[#allocation5 + $0x550] sm:$0xff]
    %v224 = vld [vmem:[#allocation5 + $0x558] sm:$0xff]
    %v225 = vld [vmem:[#allocation5 + $0x560] sm:$0xff]
    %v226 = vld [vmem:[#allocation5 + $0x568] sm:$0xff]
    %v227 = vld [vmem:[#allocation5 + $0x570] sm:$0xff]
    %v228 = vld [vmem:[#allocation5 + $0x578] sm:$0xff]
    %v229 = vld [vmem:[#allocation5 + $0x580] sm:$0xff]
    %v230 = vld [vmem:[#allocation5 + $0x588] sm:$0xff]
    %v231 = vld [vmem:[#allocation5 + $0x590] sm:$0xff]
    %v232 = vld [vmem:[#allocation5 + $0x598] sm:$0xff]
    %v233 = vld [vmem:[#allocation5 + $0x5a0] sm:$0xff]
    %v234 = vld [vmem:[#allocation5 + $0x5a8] sm:$0xff]
    %v235 = vld [vmem:[#allocation5 + $0x5b0] sm:$0xff]
    %v236 = vld [vmem:[#allocation5 + $0x5b8] sm:$0xff]
    %v237 = vld [vmem:[#allocation5 + $0x5c0] sm:$0xff]
    %v238 = vld [vmem:[#allocation5 + $0x5c8] sm:$0xff]
    %v239 = vld [vmem:[#allocation5 + $0x5d0] sm:$0xff]
    %v240 = vld [vmem:[#allocation5 + $0x5d8] sm:$0xff]
    %v241 = vld [vmem:[#allocation5 + $0x5e0] sm:$0xff]
    %v242 = vld [vmem:[#allocation5 + $0x5e8] sm:$0xff]
    %v243 = vld [vmem:[#allocation5 + $0x5f0] sm:$0xff]
    %v244 = vld [vmem:[#allocation5 + $0x5f8] sm:$0xff]
    %v245 = vld [vmem:[#allocation5 + $0x600] sm:$0xff]
    %v246 = vld [vmem:[#allocation5 + $0x608] sm:$0xff]
    %v247 = vld [vmem:[#allocation5 + $0x610] sm:$0xff]
    %v248 = vld [vmem:[#allocation5 + $0x618] sm:$0xff]
    %v249 = vld [vmem:[#allocation5 + $0x620] sm:$0xff]
    %v250 = vld [vmem:[#allocation5 + $0x628] sm:$0xff]
    %v251 = vld [vmem:[#allocation5 + $0x630] sm:$0xff]
    %v252 = vld [vmem:[#allocation5 + $0x638] sm:$0xff]
    %v253 = vld [vmem:[#allocation5 + $0x640] sm:$0xff]
    %v254 = vld [vmem:[#allocation5 + $0x648] sm:$0xff]
    %v255 = vld [vmem:[#allocation5 + $0x650] sm:$0xff]
    %v256 = vld [vmem:[#allocation5 + $0x658] sm:$0xff]
    %v257 = vld [vmem:[#allocation5 + $0x660] sm:$0xff]
    %v258 = vld [vmem:[#allocation5 + $0x668] sm:$0xff]
    %v259 = vld [vmem:[#allocation5 + $0x670] sm:$0xff]
    %v260 = vld [vmem:[#allocation5 + $0x678] sm:$0xff]
    %v261 = vld [vmem:[#allocation5 + $0x680] sm:$0xff]
    %v262 = vld [vmem:[#allocation5 + $0x688] sm:$0xff]
    %v263 = vld [vmem:[#allocation5 + $0x690] sm:$0xff]
    %v264 = vld [vmem:[#allocation5 + $0x698] sm:$0xff]
    %v265 = vld [vmem:[#allocation5 + $0x6a0] sm:$0xff]
    %v266 = vld [vmem:[#allocation5 + $0x6a8] sm:$0xff]
    %v267 = vld [vmem:[#allocation5 + $0x6b0] sm:$0xff]
    %v268 = vld [vmem:[#allocation5 + $0x6b8] sm:$0xff]
    %v269 = vld [vmem:[#allocation5 + $0x6c0] sm:$0xff]
    %v270 = vld [vmem:[#allocation5 + $0x6c8] sm:$0xff]
    %v271 = vld [vmem:[#allocation5 + $0x6d0] sm:$0xff]
    %v272 = vld [vmem:[#allocation5 + $0x6d8] sm:$0xff]
    %v273 = vld [vmem:[#allocation5 + $0x6e0] sm:$0xff]
    %v274 = vld [vmem:[#allocation5 + $0x6e8] sm:$0xff]
    %v275 = vld [vmem:[#allocation5 + $0x6f0] sm:$0xff]
    %v276 = vld [vmem:[#allocation5 + $0x6f8] sm:$0xff]
    %v277 = vld [vmem:[#allocation5 + $0x700] sm:$0xff]
    %v278 = vld [vmem:[#allocation5 + $0x708] sm:$0xff]
    %v279 = vld [vmem:[#allocation5 + $0x710] sm:$0xff]
    %v280 = vld [vmem:[#allocation5 + $0x718] sm:$0xff]
    %v281 = vld [vmem:[#allocation5 + $0x720] sm:$0xff]
    %v282 = vld [vmem:[#allocation5 + $0x728] sm:$0xff]
    %v283 = vld [vmem:[#allocation5 + $0x730] sm:$0xff]
    %v284 = vld [vmem:[#allocation5 + $0x738] sm:$0xff]
    %v285 = vld [vmem:[#allocation5 + $0x740] sm:$0xff]
    %v286 = vld [vmem:[#allocation5 + $0x748] sm:$0xff]
    %v287 = vld [vmem:[#allocation5 + $0x750] sm:$0xff]
    %v288 = vld [vmem:[#allocation5 + $0x758] sm:$0xff]
    %v289 = vld [vmem:[#allocation5 + $0x760] sm:$0xff]
    %v290 = vld [vmem:[#allocation5 + $0x768] sm:$0xff]
    %v291 = vld [vmem:[#allocation5 + $0x770] sm:$0xff]
    %v292 = vld [vmem:[#allocation5 + $0x778] sm:$0xff]
    %v293 = vld [vmem:[#allocation5 + $0x780] sm:$0xff]
    %v294 = vld [vmem:[#allocation5 + $0x788] sm:$0xff]
    %v295 = vld [vmem:[#allocation5 + $0x790] sm:$0xff]
    %v296 = vld [vmem:[#allocation5 + $0x798] sm:$0xff]
    %v297 = vld [vmem:[#allocation5 + $0x7a0] sm:$0xff]
    %v298 = vld [vmem:[#allocation5 + $0x7a8] sm:$0xff]
    %v299 = vld [vmem:[#allocation5 + $0x7b0] sm:$0xff]
    %v300 = vld [vmem:[#allocation5 + $0x7b8] sm:$0xff]
    %v301 = vld [vmem:[#allocation5 + $0x7c0] sm:$0xff]
    %v302 = vld [vmem:[#allocation5 + $0x7c8] sm:$0xff]
    %v303 = vld [vmem:[#allocation5 + $0x7d0] sm:$0xff]
    %v304 = vld [vmem:[#allocation5 + $0x7d8] sm:$0xff]
    %v305 = vld [vmem:[#allocation5 + $0x7e0] sm:$0xff]
    %v306 = vld [vmem:[#allocation5 + $0x7e8] sm:$0xff]
    %v307 = vld [vmem:[#allocation5 + $0x7f0] sm:$0xff]
    %v308 = vld [vmem:[#allocation5 + $0x7f8] sm:$0xff]
    %v309 = vld [vmem:[#allocation5 + $0x800] sm:$0xff]
    %v310 = vld [vmem:[#allocation5 + $0x808] sm:$0xff]
    %v311 = vld [vmem:[#allocation5 + $0x810] sm:$0xff]
    %v312 = vld [vmem:[#allocation5 + $0x818] sm:$0xff]
    %v313 = vld [vmem:[#allocation5 + $0x820] sm:$0xff]
    %v314 = vld [vmem:[#allocation5 + $0x828] sm:$0xff]
    %v315 = vld [vmem:[#allocation5 + $0x830] sm:$0xff]
    %v316 = vld [vmem:[#allocation5 + $0x838] sm:$0xff]
    %v317 = vld [vmem:[#allocation5 + $0x840] sm:$0xff]
    %v318 = vld [vmem:[#allocation5 + $0x848] sm:$0xff]
    %v319 = vld [vmem:[#allocation5 + $0x850] sm:$0xff]
    %v320 = vld [vmem:[#allocation5 + $0x858] sm:$0xff]
    %v321 = vld [vmem:[#allocation5 + $0x860] sm:$0xff]
    %v322 = vld [vmem:[#allocation5 + $0x868] sm:$0xff]
    %v323 = vld [vmem:[#allocation5 + $0x870] sm:$0xff]
    %v324 = vld [vmem:[#allocation5 + $0x878] sm:$0xff]
    %v325 = vld [vmem:[#allocation5 + $0x880] sm:$0xff]
    %v326 = vld [vmem:[#allocation5 + $0x888] sm:$0xff]
    %v327 = vld [vmem:[#allocation5 + $0x890] sm:$0xff]
    %v328 = vld [vmem:[#allocation5 + $0x898] sm:$0xff]
    %v329 = vld [vmem:[#allocation5 + $0x8a0] sm:$0xff]
    %v330 = vld [vmem:[#allocation5 + $0x8a8] sm:$0xff]
    %v331 = vld [vmem:[#allocation5 + $0x8b0] sm:$0xff]
    %v332 = vld [vmem:[#allocation5 + $0x8b8] sm:$0xff]
    %v333 = vld [vmem:[#allocation5 + $0x8c0] sm:$0xff]
    %v334 = vld [vmem:[#allocation5 + $0x8c8] sm:$0xff]
    %v335 = vld [vmem:[#allocation5 + $0x8d0] sm:$0xff]
    %v336 = vld [vmem:[#allocation5 + $0x8d8] sm:$0xff]
    %v337 = vld [vmem:[#allocation5 + $0x8e0] sm:$0xff]
    %v338 = vld [vmem:[#allocation5 + $0x8e8] sm:$0xff]
    %v339 = vld [vmem:[#allocation5 + $0x8f0] sm:$0xff]
    %v340 = vld [vmem:[#allocation5 + $0x8f8] sm:$0xff]
    %v341 = vld [vmem:[#allocation5 + $0x900] sm:$0xff]
    %v342 = vld [vmem:[#allocation5 + $0x908] sm:$0xff]
    %v343 = vld [vmem:[#allocation5 + $0x910] sm:$0xff]
    %v344 = vld [vmem:[#allocation5 + $0x918] sm:$0xff]
    %v345 = vld [vmem:[#allocation5 + $0x920] sm:$0xff]
    %v346 = vld [vmem:[#allocation5 + $0x928] sm:$0xff]
    %v347 = vld [vmem:[#allocation5 + $0x930] sm:$0xff]
    %v348 = vld [vmem:[#allocation5 + $0x938] sm:$0xff]
    %v349 = vld [vmem:[#allocation5 + $0x940] sm:$0xff]
    %v350 = vld [vmem:[#allocation5 + $0x948] sm:$0xff]
    %v351 = vld [vmem:[#allocation5 + $0x950] sm:$0xff]
    %v352 = vld [vmem:[#allocation5 + $0x958] sm:$0xff]
    %v353 = vld [vmem:[#allocation5 + $0x960] sm:$0xff]
    %v354 = vld [vmem:[#allocation5 + $0x968] sm:$0xff]
    %v355 = vld [vmem:[#allocation5 + $0x970] sm:$0xff]
    %v356 = vld [vmem:[#allocation5 + $0x978] sm:$0xff]
    %v357 = vld [vmem:[#allocation5 + $0x980] sm:$0xff]
    %v358 = vld [vmem:[#allocation5 + $0x988] sm:$0xff]
    %v359 = vld [vmem:[#allocation5 + $0x990] sm:$0xff]
    %v360 = vld [vmem:[#allocation5 + $0x998] sm:$0xff]
    %v361 = vld [vmem:[#allocation5 + $0x9a0] sm:$0xff]
    %v362 = vld [vmem:[#allocation5 + $0x9a8] sm:$0xff]
    %v363 = vld [vmem:[#allocation5 + $0x9b0] sm:$0xff]
    %v364 = vld [vmem:[#allocation5 + $0x9b8] sm:$0xff]
    %v365 = vld [vmem:[#allocation5 + $0x9c0] sm:$0xff]
    %v366 = vld [vmem:[#allocation5 + $0x9c8] sm:$0xff]
    %v367 = vld [vmem:[#allocation5 + $0x9d0] sm:$0xff]
    %v368 = vld [vmem:[#allocation5 + $0x9d8] sm:$0xff]
    %v369 = vld [vmem:[#allocation5 + $0x9e0] sm:$0xff]
    %v370 = vld [vmem:[#allocation5 + $0x9e8] sm:$0xff]
    %v371 = vld [vmem:[#allocation5 + $0x9f0] sm:$0xff]
    %v372 = vld [vmem:[#allocation5 + $0x9f8] sm:$0xff]
    %v373 = vld [vmem:[#allocation5 + $0xa00] sm:$0xff]
    %v374 = vld [vmem:[#allocation5 + $0xa08] sm:$0xff]
    %v375 = vld [vmem:[#allocation5 + $0xa10] sm:$0xff]
    %v376 = vld [vmem:[#allocation5 + $0xa18] sm:$0xff]
    %v377 = vld [vmem:[#allocation5 + $0xa20] sm:$0xff]
    %v378 = vld [vmem:[#allocation5 + $0xa28] sm:$0xff]
    %v379 = vld [vmem:[#allocation5 + $0xa30] sm:$0xff]
    %v380 = vld [vmem:[#allocation5 + $0xa38] sm:$0xff]
    %v381 = vld [vmem:[#allocation5 + $0xa40] sm:$0xff]
    %v382 = vld [vmem:[#allocation5 + $0xa48] sm:$0xff]
    %v383 = vld [vmem:[#allocation5 + $0xa50] sm:$0xff]
    %v384 = vld [vmem:[#allocation5 + $0xa58] sm:$0xff]
    %v385 = vld [vmem:[#allocation5 + $0xa60] sm:$0xff]
    %v386 = vld [vmem:[#allocation5 + $0xa68] sm:$0xff]
    %v387 = vld [vmem:[#allocation5 + $0xa70] sm:$0xff]
    %v388 = vld [vmem:[#allocation5 + $0xa78] sm:$0xff]
    %v389 = vld [vmem:[#allocation5 + $0xa80] sm:$0xff]
    %v390 = vld [vmem:[#allocation5 + $0xa88] sm:$0xff]
    %v391 = vld [vmem:[#allocation5 + $0xa90] sm:$0xff]
    %v392 = vld [vmem:[#allocation5 + $0xa98] sm:$0xff]
    %v393 = vld [vmem:[#allocation5 + $0xaa0] sm:$0xff]
    %v394 = vld [vmem:[#allocation5 + $0xaa8] sm:$0xff]
    %v395 = vld [vmem:[#allocation5 + $0xab0] sm:$0xff]
    %v396 = vld [vmem:[#allocation5 + $0xab8] sm:$0xff]
    %v397 = vld [vmem:[#allocation5 + $0xac0] sm:$0xff]
    %v398 = vld [vmem:[#allocation5 + $0xac8] sm:$0xff]
    %v399 = vld [vmem:[#allocation5 + $0xad0] sm:$0xff]
    %v400 = vld [vmem:[#allocation5 + $0xad8] sm:$0xff]
    %v401 = vld [vmem:[#allocation5 + $0xae0] sm:$0xff]
    %v402 = vld [vmem:[#allocation5 + $0xae8] sm:$0xff]
    %v403 = vld [vmem:[#allocation5 + $0xaf0] sm:$0xff]
    %v404 = vld [vmem:[#allocation5 + $0xaf8] sm:$0xff]
    %v405 = vld [vmem:[#allocation5 + $0xb00] sm:$0xff]
    %v406 = vld [vmem:[#allocation5 + $0xb08] sm:$0xff]
    %v407 = vld [vmem:[#allocation5 + $0xb10] sm:$0xff]
    %v408 = vld [vmem:[#allocation5 + $0xb18] sm:$0xff]
    %v409 = vld [vmem:[#allocation5 + $0xb20] sm:$0xff]
    %v410 = vld [vmem:[#allocation5 + $0xb28] sm:$0xff]
    %v411 = vld [vmem:[#allocation5 + $0xb30] sm:$0xff]
    %v412 = vld [vmem:[#allocation5 + $0xb38] sm:$0xff]
    %v413 = vld [vmem:[#allocation5 + $0xb40] sm:$0xff]
    %v414 = vld [vmem:[#allocation5 + $0xb48] sm:$0xff]
    %v415 = vld [vmem:[#allocation5 + $0xb50] sm:$0xff]
    %v416 = vld [vmem:[#allocation5 + $0xb58] sm:$0xff]
    %v417 = vld [vmem:[#allocation5 + $0xb60] sm:$0xff]
    %v418 = vld [vmem:[#allocation5 + $0xb68] sm:$0xff]
    %v419 = vld [vmem:[#allocation5 + $0xb70] sm:$0xff]
    %v420 = vld [vmem:[#allocation5 + $0xb78] sm:$0xff]
    %v421 = vld [vmem:[#allocation5 + $0xb80] sm:$0xff]
    %v422 = vld [vmem:[#allocation5 + $0xb88] sm:$0xff]
    %v423 = vld [vmem:[#allocation5 + $0xb90] sm:$0xff]
    %v424 = vld [vmem:[#allocation5 + $0xb98] sm:$0xff]
    %v425 = vld [vmem:[#allocation5 + $0xba0] sm:$0xff]
    %v426 = vld [vmem:[#allocation5 + $0xba8] sm:$0xff]
    %v427 = vld [vmem:[#allocation5 + $0xbb0] sm:$0xff]
    %v428 = vld [vmem:[#allocation5 + $0xbb8] sm:$0xff]
    %v429 = vld [vmem:[#allocation5 + $0xbc0] sm:$0xff]
    %v430 = vld [vmem:[#allocation5 + $0xbc8] sm:$0xff]
    %v431 = vld [vmem:[#allocation5 + $0xbd0] sm:$0xff]
    %v432 = vld [vmem:[#allocation5 + $0xbd8] sm:$0xff]
    %v433 = vld [vmem:[#allocation5 + $0xbe0] sm:$0xff]
    %v434 = vld [vmem:[#allocation5 + $0xbe8] sm:$0xff]
    %v435 = vld [vmem:[#allocation5 + $0xbf0] sm:$0xff]
    %v436 = vld [vmem:[#allocation5 + $0xbf8] sm:$0xff]
    %v437 = vld [vmem:[#allocation5 + $0xc00] sm:$0xff]
    %v438 = vld [vmem:[#allocation5 + $0xc08] sm:$0xff]
    %v439 = vld [vmem:[#allocation5 + $0xc10] sm:$0xff]
    %v440 = vld [vmem:[#allocation5 + $0xc18] sm:$0xff]
    %v441 = vld [vmem:[#allocation5 + $0xc20] sm:$0xff]
    %v442 = vld [vmem:[#allocation5 + $0xc28] sm:$0xff]
    %v443 = vld [vmem:[#allocation5 + $0xc30] sm:$0xff]
    %v444 = vld [vmem:[#allocation5 + $0xc38] sm:$0xff]
    %v445 = vld [vmem:[#allocation5 + $0xc40] sm:$0xff]
    %v446 = vld [vmem:[#allocation5 + $0xc48] sm:$0xff]
    %v447 = vld [vmem:[#allocation5 + $0xc50] sm:$0xff]
    %v448 = vld [vmem:[#allocation5 + $0xc58] sm:$0xff]
    %v449 = vld [vmem:[#allocation5 + $0xc60] sm:$0xff]
    %v450 = vld [vmem:[#allocation5 + $0xc68] sm:$0xff]
    %v451 = vld [vmem:[#allocation5 + $0xc70] sm:$0xff]
    %v452 = vld [vmem:[#allocation5 + $0xc78] sm:$0xff]
    %v453 = vld [vmem:[#allocation5 + $0xc80] sm:$0xff]
    %v454 = vld [vmem:[#allocation5 + $0xc88] sm:$0xff]
    %v455 = vld [vmem:[#allocation5 + $0xc90] sm:$0xff]
    %v456 = vld [vmem:[#allocation5 + $0xc98] sm:$0xff]
    %v457 = vld [vmem:[#allocation5 + $0xca0] sm:$0xff]
    %v458 = vld [vmem:[#allocation5 + $0xca8] sm:$0xff]
    %v459 = vld [vmem:[#allocation5 + $0xcb0] sm:$0xff]
    %v460 = vld [vmem:[#allocation5 + $0xcb8] sm:$0xff]
    %v461 = vld [vmem:[#allocation5 + $0xcc0] sm:$0xff]
    %v462 = vld [vmem:[#allocation5 + $0xcc8] sm:$0xff]
    %v463 = vld [vmem:[#allocation5 + $0xcd0] sm:$0xff]
    %v464 = vld [vmem:[#allocation5 + $0xcd8] sm:$0xff]
    %v465 = vld [vmem:[#allocation5 + $0xce0] sm:$0xff]
    %v466 = vld [vmem:[#allocation5 + $0xce8] sm:$0xff]
    %v467 = vld [vmem:[#allocation5 + $0xcf0] sm:$0xff]
    %v468 = vld [vmem:[#allocation5 + $0xcf8] sm:$0xff]
    %v469 = vld [vmem:[#allocation5 + $0xd00] sm:$0xff]
    %v470 = vld [vmem:[#allocation5 + $0xd08] sm:$0xff]
    %v471 = vld [vmem:[#allocation5 + $0xd10] sm:$0xff]
    %v472 = vld [vmem:[#allocation5 + $0xd18] sm:$0xff]
    %v473 = vld [vmem:[#allocation5 + $0xd20] sm:$0xff]
    %v474 = vld [vmem:[#allocation5 + $0xd28] sm:$0xff]
    %v475 = vld [vmem:[#allocation5 + $0xd30] sm:$0xff]
    %v476 = vld [vmem:[#allocation5 + $0xd38] sm:$0xff]
    %v477 = vld [vmem:[#allocation5 + $0xd40] sm:$0xff]
    %v478 = vld [vmem:[#allocation5 + $0xd48] sm:$0xff]
    %v479 = vld [vmem:[#allocation5 + $0xd50] sm:$0xff]
    %v480 = vld [vmem:[#allocation5 + $0xd58] sm:$0xff]
    %v481 = vld [vmem:[#allocation5 + $0xd60] sm:$0xff]
    %v482 = vld [vmem:[#allocation5 + $0xd68] sm:$0xff]
    %v483 = vld [vmem:[#allocation5 + $0xd70] sm:$0xff]
    %v484 = vld [vmem:[#allocation5 + $0xd78] sm:$0xff]
    %v485 = vld [vmem:[#allocation5 + $0xd80] sm:$0xff]
    %v486 = vld [vmem:[#allocation5 + $0xd88] sm:$0xff]
    %v487 = vld [vmem:[#allocation5 + $0xd90] sm:$0xff]
    %v488 = vld [vmem:[#allocation5 + $0xd98] sm:$0xff]
    %v489 = vld [vmem:[#allocation5 + $0xda0] sm:$0xff]
    %v490 = vld [vmem:[#allocation5 + $0xda8] sm:$0xff]
    %v491 = vld [vmem:[#allocation5 + $0xdb0] sm:$0xff]
    %v492 = vld [vmem:[#allocation5 + $0xdb8] sm:$0xff]
    %v493 = vld [vmem:[#allocation5 + $0xdc0] sm:$0xff]
    %v494 = vld [vmem:[#allocation5 + $0xdc8] sm:$0xff]
    %v495 = vld [vmem:[#allocation5 + $0xdd0] sm:$0xff]
    %v496 = vld [vmem:[#allocation5 + $0xdd8] sm:$0xff]
    %v497 = vld [vmem:[#allocation5 + $0xde0] sm:$0xff]
    %v498 = vld [vmem:[#allocation5 + $0xde8] sm:$0xff]
    %v499 = vld [vmem:[#allocation5 + $0xdf0] sm:$0xff]
    %v500 = vld [vmem:[#allocation5 + $0xdf8] sm:$0xff]
    %v501 = vld [vmem:[#allocation5 + $0xe00] sm:$0xff]
    %v502 = vld [vmem:[#allocation5 + $0xe08] sm:$0xff]
    %v503 = vld [vmem:[#allocation5 + $0xe10] sm:$0xff]
    %v504 = vld [vmem:[#allocation5 + $0xe18] sm:$0xff]
    %v505 = vld [vmem:[#allocation5 + $0xe20] sm:$0xff]
    %v506 = vld [vmem:[#allocation5 + $0xe28] sm:$0xff]
    %v507 = vld [vmem:[#allocation5 + $0xe30] sm:$0xff]
    %v508 = vld [vmem:[#allocation5 + $0xe38] sm:$0xff]
    %v509 = vld [vmem:[#allocation5 + $0xe40] sm:$0xff]
    %v510 = vld [vmem:[#allocation5 + $0xe48] sm:$0xff]
    %v511 = vld [vmem:[#allocation5 + $0xe50] sm:$0xff]
    %v512 = vld [vmem:[#allocation5 + $0xe58] sm:$0xff]
    %v513 = vld [vmem:[#allocation5 + $0xe60] sm:$0xff]
    %v514 = vld [vmem:[#allocation5 + $0xe68] sm:$0xff]
    %v515 = vld [vmem:[#allocation5 + $0xe70] sm:$0xff]
    %v516 = vld [vmem:[#allocation5 + $0xe78] sm:$0xff]
    %v517 = vld [vmem:[#allocation5 + $0xe80] sm:$0xff]
    %v518 = vld [vmem:[#allocation5 + $0xe88] sm:$0xff]
    %v519 = vld [vmem:[#allocation5 + $0xe90] sm:$0xff]
    %v520 = vld [vmem:[#allocation5 + $0xe98] sm:$0xff]
    %v521 = vld [vmem:[#allocation5 + $0xea0] sm:$0xff]
    %v522 = vld [vmem:[#allocation5 + $0xea8] sm:$0xff]
    %v523 = vld [vmem:[#allocation5 + $0xeb0] sm:$0xff]
    %v524 = vld [vmem:[#allocation5 + $0xeb8] sm:$0xff]
    %v525 = vld [vmem:[#allocation5 + $0xec0] sm:$0xff]
    %v526 = vld [vmem:[#allocation5 + $0xec8] sm:$0xff]
    %v527 = vld [vmem:[#allocation5 + $0xed0] sm:$0xff]
    %v528 = vld [vmem:[#allocation5 + $0xed8] sm:$0xff]
    %v529 = vld [vmem:[#allocation5 + $0xee0] sm:$0xff]
    %v530 = vld [vmem:[#allocation5 + $0xee8] sm:$0xff]
    %v531 = vld [vmem:[#allocation5 + $0xef0] sm:$0xff]
    %v532 = vld [vmem:[#allocation5 + $0xef8] sm:$0xff]
    %v533 = vld [vmem:[#allocation5 + $0xf00] sm:$0xff]
    %v534 = vld [vmem:[#allocation5 + $0xf08] sm:$0xff]
    %v535 = vld [vmem:[#allocation5 + $0xf10] sm:$0xff]
    %v536 = vld [vmem:[#allocation5 + $0xf18] sm:$0xff]
    %v537 = vld [vmem:[#allocation5 + $0xf20] sm:$0xff]
    %v538 = vld [vmem:[#allocation5 + $0xf28] sm:$0xff]
    %v539 = vld [vmem:[#allocation5 + $0xf30] sm:$0xff]
    %v540 = vld [vmem:[#allocation5 + $0xf38] sm:$0xff]
    %v541 = vld [vmem:[#allocation5 + $0xf40] sm:$0xff]
    %v542 = vld [vmem:[#allocation5 + $0xf48] sm:$0xff]
    %v543 = vld [vmem:[#allocation5 + $0xf50] sm:$0xff]
    %v544 = vld [vmem:[#allocation5 + $0xf58] sm:$0xff]
    %v545 = vld [vmem:[#allocation5 + $0xf60] sm:$0xff]
    %v546 = vld [vmem:[#allocation5 + $0xf68] sm:$0xff]
    %v547 = vld [vmem:[#allocation5 + $0xf70] sm:$0xff]
    %v548 = vld [vmem:[#allocation5 + $0xf78] sm:$0xff]
    %v549 = vld [vmem:[#allocation5 + $0xf80] sm:$0xff]
    %v550 = vld [vmem:[#allocation5 + $0xf88] sm:$0xff]
    %v551 = vld [vmem:[#allocation5 + $0xf90] sm:$0xff]
    %v552 = vld [vmem:[#allocation5 + $0xf98] sm:$0xff]
    %v553 = vld [vmem:[#allocation5 + $0xfa0] sm:$0xff]
    %v554 = vld [vmem:[#allocation5 + $0xfa8] sm:$0xff]
    %v555 = vld [vmem:[#allocation5 + $0xfb0] sm:$0xff]
    %v556 = vld [vmem:[#allocation5 + $0xfb8] sm:$0xff]
    %v557 = vld [vmem:[#allocation5 + $0xfc0] sm:$0xff]
    %v558 = vld [vmem:[#allocation5 + $0xfc8] sm:$0xff]
    %v559 = vld [vmem:[#allocation5 + $0xfd0] sm:$0xff]
    %v560 = vld [vmem:[#allocation5 + $0xfd8] sm:$0xff]
    %v561 = vld [vmem:[#allocation5 + $0xfe0] sm:$0xff]
    %v562 = vld [vmem:[#allocation5 + $0xfe8] sm:$0xff]
    %v563 = vld [vmem:[#allocation5 + $0xff0] sm:$0xff]
    %v564 = vld [vmem:[#allocation5 + $0xff8] sm:$0xff]
    %v565 = vld [vmem:[#allocation5 + $0x1000] sm:$0xff]
    %v566 = vld [vmem:[#allocation5 + $0x1008] sm:$0xff]
    %v567 = vld [vmem:[#allocation5 + $0x1010] sm:$0xff]
    %v568 = vld [vmem:[#allocation5 + $0x1018] sm:$0xff]
    %v569 = vld [vmem:[#allocation5 + $0x1020] sm:$0xff]
    %v570 = vld [vmem:[#allocation5 + $0x1028] sm:$0xff]
    %v571 = vld [vmem:[#allocation5 + $0x1030] sm:$0xff]
    %v572 = vld [vmem:[#allocation5 + $0x1038] sm:$0xff]
    %v573 = vld [vmem:[#allocation5 + $0x1040] sm:$0xff]
    %v574 = vld [vmem:[#allocation5 + $0x1048] sm:$0xff]
    %v575 = vld [vmem:[#allocation5 + $0x1050] sm:$0xff]
    %v576 = vld [vmem:[#allocation5 + $0x1058] sm:$0xff]
    %v577 = vld [vmem:[#allocation5 + $0x1060] sm:$0xff]
    %v578 = vld [vmem:[#allocation5 + $0x1068] sm:$0xff]
    %v579 = vld [vmem:[#allocation5 + $0x1070] sm:$0xff]
    %v580 = vld [vmem:[#allocation5 + $0x1078] sm:$0xff]
    %v581 = vld [vmem:[#allocation5 + $0x1080] sm:$0xff]
    %v582 = vld [vmem:[#allocation5 + $0x1088] sm:$0xff]
    %v583 = vld [vmem:[#allocation5 + $0x1090] sm:$0xff]
    %v584 = vld [vmem:[#allocation5 + $0x1098] sm:$0xff]
    %v585 = vld [vmem:[#allocation5 + $0x10a0] sm:$0xff]
    %v586 = vld [vmem:[#allocation5 + $0x10a8] sm:$0xff]
    %v587 = vld [vmem:[#allocation5 + $0x10b0] sm:$0xff]
    %v588 = vld [vmem:[#allocation5 + $0x10b8] sm:$0xff]
    %v589 = vld [vmem:[#allocation5 + $0x10c0] sm:$0xff]
    %v590 = vld [vmem:[#allocation5 + $0x10c8] sm:$0xff]
    %v591 = vld [vmem:[#allocation5 + $0x10d0] sm:$0xff]
    %v592 = vld [vmem:[#allocation5 + $0x10d8] sm:$0xff]
    %v593 = vld [vmem:[#allocation5 + $0x10e0] sm:$0xff]
    %v594 = vld [vmem:[#allocation5 + $0x10e8] sm:$0xff]
    %v595 = vld [vmem:[#allocation5 + $0x10f0] sm:$0xff]
    %v596 = vld [vmem:[#allocation5 + $0x10f8] sm:$0xff]
    %v597 = vld [vmem:[#allocation5 + $0x1100] sm:$0xff]
    %v598 = vld [vmem:[#allocation5 + $0x1108] sm:$0xff]
    %v599 = vld [vmem:[#allocation5 + $0x1110] sm:$0xff]
    %v600 = vld [vmem:[#allocation5 + $0x1118] sm:$0xff]
    %v601 = vld [vmem:[#allocation5 + $0x1120] sm:$0xff]
    %v602 = vld [vmem:[#allocation5 + $0x1128] sm:$0xff]
    %v603 = vld [vmem:[#allocation5 + $0x1130] sm:$0xff]
    %v604 = vld [vmem:[#allocation5 + $0x1138] sm:$0xff]
    %v605 = vld [vmem:[#allocation5 + $0x1140] sm:$0xff]
    %v606 = vld [vmem:[#allocation5 + $0x1148] sm:$0xff]
    %v607 = vld [vmem:[#allocation5 + $0x1150] sm:$0xff]
    %v608 = vld [vmem:[#allocation5 + $0x1158] sm:$0xff]
    %v609 = vld [vmem:[#allocation5 + $0x1160] sm:$0xff]
    %v610 = vld [vmem:[#allocation5 + $0x1168] sm:$0xff]
    %v611 = vld [vmem:[#allocation5 + $0x1170] sm:$0xff]
    %v612 = vld [vmem:[#allocation5 + $0x1178] sm:$0xff]
    %v613 = vld [vmem:[#allocation5 + $0x1180] sm:$0xff]
    %v614 = vld [vmem:[#allocation5 + $0x1188] sm:$0xff]
    %v615 = vld [vmem:[#allocation5 + $0x1190] sm:$0xff]
    %v616 = vld [vmem:[#allocation5 + $0x1198] sm:$0xff]
    %v617 = vld [vmem:[#allocation5 + $0x11a0] sm:$0xff]
    %v618 = vld [vmem:[#allocation5 + $0x11a8] sm:$0xff]
    %v619 = vld [vmem:[#allocation5 + $0x11b0] sm:$0xff]
    %v620 = vld [vmem:[#allocation5 + $0x11b8] sm:$0xff]
    %v621 = vld [vmem:[#allocation5 + $0x11c0] sm:$0xff]
    %v622 = vld [vmem:[#allocation5 + $0x11c8] sm:$0xff]
    %v623 = vld [vmem:[#allocation5 + $0x11d0] sm:$0xff]
    %v624 = vld [vmem:[#allocation5 + $0x11d8] sm:$0xff]
    %v625 = vld [vmem:[#allocation5 + $0x11e0] sm:$0xff]
    %v626 = vld [vmem:[#allocation5 + $0x11e8] sm:$0xff]
    %v627 = vld [vmem:[#allocation5 + $0x11f0] sm:$0xff]
    %v628 = vld [vmem:[#allocation5 + $0x11f8] sm:$0xff]
    %v629 = vld [vmem:[#allocation5 + $0x1200] sm:$0xff]
    %v630 = vld [vmem:[#allocation5 + $0x1208] sm:$0xff]
    %v631 = vld [vmem:[#allocation5 + $0x1210] sm:$0xff]
    %v632 = vld [vmem:[#allocation5 + $0x1218] sm:$0xff]
    %v633 = vld [vmem:[#allocation5 + $0x1220] sm:$0xff]
    %v634 = vld [vmem:[#allocation5 + $0x1228] sm:$0xff]
    %v635 = vld [vmem:[#allocation5 + $0x1230] sm:$0xff]
    %v636 = vld [vmem:[#allocation5 + $0x1238] sm:$0xff]
    %v637 = vld [vmem:[#allocation5 + $0x1240] sm:$0xff]
    %v638 = vld [vmem:[#allocation5 + $0x1248] sm:$0xff]
    %v639 = vld [vmem:[#allocation5 + $0x1250] sm:$0xff]
    %v640 = vld [vmem:[#allocation5 + $0x1258] sm:$0xff]
    %v641 = vld [vmem:[#allocation5 + $0x1260] sm:$0xff]
    %v642 = vld [vmem:[#allocation5 + $0x1268] sm:$0xff]
    %v643 = vld [vmem:[#allocation5 + $0x1270] sm:$0xff]
    %v644 = vld [vmem:[#allocation5 + $0x1278] sm:$0xff]
    %v645 = vld [vmem:[#allocation5 + $0x1280] sm:$0xff]
    %v646 = vld [vmem:[#allocation5 + $0x1288] sm:$0xff]
    %v647 = vld [vmem:[#allocation5 + $0x1290] sm:$0xff]
    %v648 = vld [vmem:[#allocation5 + $0x1298] sm:$0xff]
    %v649 = vld [vmem:[#allocation5 + $0x12a0] sm:$0xff]
    %v650 = vld [vmem:[#allocation5 + $0x12a8] sm:$0xff]
    %v651 = vld [vmem:[#allocation5 + $0x12b0] sm:$0xff]
    %v652 = vld [vmem:[#allocation5 + $0x12b8] sm:$0xff]
    %v653 = vld [vmem:[#allocation5 + $0x12c0] sm:$0xff]
    %v654 = vld [vmem:[#allocation5 + $0x12c8] sm:$0xff]
    %v655 = vld [vmem:[#allocation5 + $0x12d0] sm:$0xff]
    %v656 = vld [vmem:[#allocation5 + $0x12d8] sm:$0xff]
    %v657 = vld [vmem:[#allocation5 + $0x12e0] sm:$0xff]
    %v658 = vld [vmem:[#allocation5 + $0x12e8] sm:$0xff]
    %v659 = vld [vmem:[#allocation5 + $0x12f0] sm:$0xff]
    %v660 = vld [vmem:[#allocation5 + $0x12f8] sm:$0xff]
    %v661 = vld [vmem:[#allocation5 + $0x1300] sm:$0xff]
    %v662 = vld [vmem:[#allocation5 + $0x1308] sm:$0xff]
    %v663 = vld [vmem:[#allocation5 + $0x1310] sm:$0xff]
    %v664 = vld [vmem:[#allocation5 + $0x1318] sm:$0xff]
    %v665 = vld [vmem:[#allocation5 + $0x1320] sm:$0xff]
    %v666 = vld [vmem:[#allocation5 + $0x1328] sm:$0xff]
    %v667 = vld [vmem:[#allocation5 + $0x1330] sm:$0xff]
    %v668 = vld [vmem:[#allocation5 + $0x1338] sm:$0xff]
    %v669 = vld [vmem:[#allocation5 + $0x1340] sm:$0xff]
    %v670 = vld [vmem:[#allocation5 + $0x1348] sm:$0xff]
    %v671 = vld [vmem:[#allocation5 + $0x1350] sm:$0xff]
    %v672 = vld [vmem:[#allocation5 + $0x1358] sm:$0xff]
    %v673 = vld [vmem:[#allocation5 + $0x1360] sm:$0xff]
    %v674 = vld [vmem:[#allocation5 + $0x1368] sm:$0xff]
    %v675 = vld [vmem:[#allocation5 + $0x1370] sm:$0xff]
    %v676 = vld [vmem:[#allocation5 + $0x1378] sm:$0xff]
    %v677 = vld [vmem:[#allocation5 + $0x1380] sm:$0xff]
    %v678 = vld [vmem:[#allocation5 + $0x1388] sm:$0xff]
    %v679 = vld [vmem:[#allocation5 + $0x1390] sm:$0xff]
    %v680 = vld [vmem:[#allocation5 + $0x1398] sm:$0xff]
    %v681 = vld [vmem:[#allocation5 + $0x13a0] sm:$0xff]
    %v682 = vld [vmem:[#allocation5 + $0x13a8] sm:$0xff]
    %v683 = vld [vmem:[#allocation5 + $0x13b0] sm:$0xff]
    %v684 = vld [vmem:[#allocation5 + $0x13b8] sm:$0xff]
    %v685 = vld [vmem:[#allocation5 + $0x13c0] sm:$0xff]
    %v686 = vld [vmem:[#allocation5 + $0x13c8] sm:$0xff]
    %v687 = vld [vmem:[#allocation5 + $0x13d0] sm:$0xff]
    %v688 = vld [vmem:[#allocation5 + $0x13d8] sm:$0xff]
    %v689 = vld [vmem:[#allocation5 + $0x13e0] sm:$0xff]
    %v690 = vld [vmem:[#allocation5 + $0x13e8] sm:$0xff]
    %v691 = vld [vmem:[#allocation5 + $0x13f0] sm:$0xff]
    %v692 = vld [vmem:[#allocation5 + $0x13f8] sm:$0xff]
    %v693 = vld [vmem:[#allocation5 + $0x1400] sm:$0xff]
    %v694 = vld [vmem:[#allocation5 + $0x1408] sm:$0xff]
    %v695 = vld [vmem:[#allocation5 + $0x1410] sm:$0xff]
    %v696 = vld [vmem:[#allocation5 + $0x1418] sm:$0xff]
    %v697 = vld [vmem:[#allocation5 + $0x1420] sm:$0xff]
    %v698 = vld [vmem:[#allocation5 + $0x1428] sm:$0xff]
    %v699 = vld [vmem:[#allocation5 + $0x1430] sm:$0xff]
    %v700 = vld [vmem:[#allocation5 + $0x1438] sm:$0xff]
    %v701 = vld [vmem:[#allocation5 + $0x1440] sm:$0xff]
    %v702 = vld [vmem:[#allocation5 + $0x1448] sm:$0xff]
    %v703 = vld [vmem:[#allocation5 + $0x1450] sm:$0xff]
    %v704 = vld [vmem:[#allocation5 + $0x1458] sm:$0xff]
    %v705 = vld [vmem:[#allocation5 + $0x1460] sm:$0xff]
    %v706 = vld [vmem:[#allocation5 + $0x1468] sm:$0xff]
    %v707 = vld [vmem:[#allocation5 + $0x1470] sm:$0xff]
    %v708 = vld [vmem:[#allocation5 + $0x1478] sm:$0xff]
    %v709 = vld [vmem:[#allocation5 + $0x1480] sm:$0xff]
    %v710 = vld [vmem:[#allocation5 + $0x1488] sm:$0xff]
    %v711 = vld [vmem:[#allocation5 + $0x1490] sm:$0xff]
    %v712 = vld [vmem:[#allocation5 + $0x1498] sm:$0xff]
    %v713 = vld [vmem:[#allocation5 + $0x14a0] sm:$0xff]
    %v714 = vld [vmem:[#allocation5 + $0x14a8] sm:$0xff]
    %v715 = vld [vmem:[#allocation5 + $0x14b0] sm:$0xff]
    %v716 = vld [vmem:[#allocation5 + $0x14b8] sm:$0xff]
    %v717 = vld [vmem:[#allocation5 + $0x14c0] sm:$0xff]
    %v718 = vld [vmem:[#allocation5 + $0x14c8] sm:$0xff]
    %v719 = vld [vmem:[#allocation5 + $0x14d0] sm:$0xff]
    %v720 = vld [vmem:[#allocation5 + $0x14d8] sm:$0xff]
    %v721 = vld [vmem:[#allocation5 + $0x14e0] sm:$0xff]
    %v722 = vld [vmem:[#allocation5 + $0x14e8] sm:$0xff]
    %v723 = vld [vmem:[#allocation5 + $0x14f0] sm:$0xff]
    %v724 = vld [vmem:[#allocation5 + $0x14f8] sm:$0xff]
    %v725 = vld [vmem:[#allocation5 + $0x1500] sm:$0xff]
    %v726 = vld [vmem:[#allocation5 + $0x1508] sm:$0xff]
    %v727 = vld [vmem:[#allocation5 + $0x1510] sm:$0xff]
    %v728 = vld [vmem:[#allocation5 + $0x1518] sm:$0xff]
    %v729 = vld [vmem:[#allocation5 + $0x1520] sm:$0xff]
    %v730 = vld [vmem:[#allocation5 + $0x1528] sm:$0xff]
    %v731 = vld [vmem:[#allocation5 + $0x1530] sm:$0xff]
    %v732 = vld [vmem:[#allocation5 + $0x1538] sm:$0xff]
    %v733 = vld [vmem:[#allocation5 + $0x1540] sm:$0xff]
    %v734 = vld [vmem:[#allocation5 + $0x1548] sm:$0xff]
    %v735 = vld [vmem:[#allocation5 + $0x1550] sm:$0xff]
    %v736 = vld [vmem:[#allocation5 + $0x1558] sm:$0xff]
    %v737 = vld [vmem:[#allocation5 + $0x1560] sm:$0xff]
    %v738 = vld [vmem:[#allocation5 + $0x1568] sm:$0xff]
    %v739 = vld [vmem:[#allocation5 + $0x1570] sm:$0xff]
    %v740 = vld [vmem:[#allocation5 + $0x1578] sm:$0xff]
    %v741 = vld [vmem:[#allocation5 + $0x1580] sm:$0xff]
    %v742 = vld [vmem:[#allocation5 + $0x1588] sm:$0xff]
    %v743 = vld [vmem:[#allocation5 + $0x1590] sm:$0xff]
    %v744 = vld [vmem:[#allocation5 + $0x1598] sm:$0xff]
    %v745 = vld [vmem:[#allocation5 + $0x15a0] sm:$0xff]
    %v746 = vld [vmem:[#allocation5 + $0x15a8] sm:$0xff]
    %v747 = vld [vmem:[#allocation5 + $0x15b0] sm:$0xff]
    %v748 = vld [vmem:[#allocation5 + $0x15b8] sm:$0xff]
    %v749 = vld [vmem:[#allocation5 + $0x15c0] sm:$0xff]
    %v750 = vld [vmem:[#allocation5 + $0x15c8] sm:$0xff]
    %v751 = vld [vmem:[#allocation5 + $0x15d0] sm:$0xff]
    %v752 = vld [vmem:[#allocation5 + $0x15d8] sm:$0xff]
    %v753 = vld [vmem:[#allocation5 + $0x15e0] sm:$0xff]
    %v754 = vld [vmem:[#allocation5 + $0x15e8] sm:$0xff]
    %v755 = vld [vmem:[#allocation5 + $0x15f0] sm:$0xff]
    %v756 = vld [vmem:[#allocation5 + $0x15f8] sm:$0xff]
    %v757 = vld [vmem:[#allocation5 + $0x1600] sm:$0xff]
    %v758 = vld [vmem:[#allocation5 + $0x1608] sm:$0xff]
    %v759 = vld [vmem:[#allocation5 + $0x1610] sm:$0xff]
    %v760 = vld [vmem:[#allocation5 + $0x1618] sm:$0xff]
    %v761 = vld [vmem:[#allocation5 + $0x1620] sm:$0xff]
    %v762 = vld [vmem:[#allocation5 + $0x1628] sm:$0xff]
    %v763 = vld [vmem:[#allocation5 + $0x1630] sm:$0xff]
    %v764 = vld [vmem:[#allocation5 + $0x1638] sm:$0xff]
    %v765 = vld [vmem:[#allocation5 + $0x1640] sm:$0xff]
    %v766 = vld [vmem:[#allocation5 + $0x1648] sm:$0xff]
    %v767 = vld [vmem:[#allocation5 + $0x1650] sm:$0xff]
    %v768 = vld [vmem:[#allocation5 + $0x1658] sm:$0xff]
    %v769 = vld [vmem:[#allocation5 + $0x1660] sm:$0xff]
    %v770 = vld [vmem:[#allocation5 + $0x1668] sm:$0xff]
    %v771 = vld [vmem:[#allocation5 + $0x1670] sm:$0xff]
    %v772 = vld [vmem:[#allocation5 + $0x1678] sm:$0xff]
    %v773 = vld [vmem:[#allocation5 + $0x1680] sm:$0xff]
    %v774 = vld [vmem:[#allocation5 + $0x1688] sm:$0xff]
    %v775 = vld [vmem:[#allocation5 + $0x1690] sm:$0xff]
    %v776 = vld [vmem:[#allocation5 + $0x1698] sm:$0xff]
    %v777 = vld [vmem:[#allocation5 + $0x16a0] sm:$0xff]
    %v778 = vld [vmem:[#allocation5 + $0x16a8] sm:$0xff]
    %v779 = vld [vmem:[#allocation5 + $0x16b0] sm:$0xff]
    %v780 = vld [vmem:[#allocation5 + $0x16b8] sm:$0xff]
    %v781 = vld [vmem:[#allocation5 + $0x16c0] sm:$0xff]
    %v782 = vld [vmem:[#allocation5 + $0x16c8] sm:$0xff]
    %v783 = vld [vmem:[#allocation5 + $0x16d0] sm:$0xff]
    %v784 = vld [vmem:[#allocation5 + $0x16d8] sm:$0xff]
    %v785 = vld [vmem:[#allocation5 + $0x16e0] sm:$0xff]
    %v786 = vld [vmem:[#allocation5 + $0x16e8] sm:$0xff]
    %v787 = vld [vmem:[#allocation5 + $0x16f0] sm:$0xff]
    %v788 = vld [vmem:[#allocation5 + $0x16f8] sm:$0xff]
    %v789 = vld [vmem:[#allocation5 + $0x1700] sm:$0xff]
    %v790 = vld [vmem:[#allocation5 + $0x1708] sm:$0xff]
    %v791 = vld [vmem:[#allocation5 + $0x1710] sm:$0xff]
    %v792 = vld [vmem:[#allocation5 + $0x1718] sm:$0xff]
    %v793 = vld [vmem:[#allocation5 + $0x1720] sm:$0xff]
    %v794 = vld [vmem:[#allocation5 + $0x1728] sm:$0xff]
    %v795 = vld [vmem:[#allocation5 + $0x1730] sm:$0xff]
    %v796 = vld [vmem:[#allocation5 + $0x1738] sm:$0xff]
    %v797 = vld [vmem:[#allocation5 + $0x1740] sm:$0xff]
    %v798 = vld [vmem:[#allocation5 + $0x1748] sm:$0xff]
    %v799 = vld [vmem:[#allocation5 + $0x1750] sm:$0xff]
    %v800 = vld [vmem:[#allocation5 + $0x1758] sm:$0xff]
    %v801 = vld [vmem:[#allocation5 + $0x1760] sm:$0xff]
    %v802 = vld [vmem:[#allocation5 + $0x1768] sm:$0xff]
    %v803 = vld [vmem:[#allocation5 + $0x1770] sm:$0xff]
    %v804 = vld [vmem:[#allocation5 + $0x1778] sm:$0xff]
    %v805 = vld [vmem:[#allocation5 + $0x1780] sm:$0xff]
    %v806 = vld [vmem:[#allocation5 + $0x1788] sm:$0xff]
    %v807 = vld [vmem:[#allocation5 + $0x1790] sm:$0xff]
    %v808 = vld [vmem:[#allocation5 + $0x1798] sm:$0xff]
    %v809 = vld [vmem:[#allocation5 + $0x17a0] sm:$0xff]
    %v810 = vld [vmem:[#allocation5 + $0x17a8] sm:$0xff]
    %v811 = vld [vmem:[#allocation5 + $0x17b0] sm:$0xff]
    %v812 = vld [vmem:[#allocation5 + $0x17b8] sm:$0xff]
    %v813 = vld [vmem:[#allocation5 + $0x17c0] sm:$0xff]
    %v814 = vld [vmem:[#allocation5 + $0x17c8] sm:$0xff]
    %v815 = vld [vmem:[#allocation5 + $0x17d0] sm:$0xff]
    %v816 = vld [vmem:[#allocation5 + $0x17d8] sm:$0xff]
    %v817 = vld [vmem:[#allocation5 + $0x17e0] sm:$0xff]
    %v818 = vld [vmem:[#allocation5 + $0x17e8] sm:$0xff]
    %v819 = vld [vmem:[#allocation5 + $0x17f0] sm:$0xff]
    %v820 = vld [vmem:[#allocation5 + $0x17f8] sm:$0xff]
    %v821 = vld [vmem:[#allocation5 + $0x1800] sm:$0xff]
    %v822 = vld [vmem:[#allocation5 + $0x1808] sm:$0xff]
    %v823 = vld [vmem:[#allocation5 + $0x1810] sm:$0xff]
    %v824 = vld [vmem:[#allocation5 + $0x1818] sm:$0xff]
    %v825 = vld [vmem:[#allocation5 + $0x1820] sm:$0xff]
    %v826 = vld [vmem:[#allocation5 + $0x1828] sm:$0xff]
    %v827 = vld [vmem:[#allocation5 + $0x1830] sm:$0xff]
    %v828 = vld [vmem:[#allocation5 + $0x1838] sm:$0xff]
    %v829 = vld [vmem:[#allocation5 + $0x1840] sm:$0xff]
    %v830 = vld [vmem:[#allocation5 + $0x1848] sm:$0xff]
    %v831 = vld [vmem:[#allocation5 + $0x1850] sm:$0xff]
    %v832 = vld [vmem:[#allocation5 + $0x1858] sm:$0xff]
    %v833 = vld [vmem:[#allocation5 + $0x1860] sm:$0xff]
    %v834 = vld [vmem:[#allocation5 + $0x1868] sm:$0xff]
    %v835 = vld [vmem:[#allocation5 + $0x1870] sm:$0xff]
    %v836 = vld [vmem:[#allocation5 + $0x1878] sm:$0xff]
    %v837 = vld [vmem:[#allocation5 + $0x1880] sm:$0xff]
    %v838 = vld [vmem:[#allocation5 + $0x1888] sm:$0xff]
    %v839 = vld [vmem:[#allocation5 + $0x1890] sm:$0xff]
    %v840 = vld [vmem:[#allocation5 + $0x1898] sm:$0xff]
    %v841 = vld [vmem:[#allocation5 + $0x18a0] sm:$0xff]
    %v842 = vld [vmem:[#allocation5 + $0x18a8] sm:$0xff]
    %v843 = vld [vmem:[#allocation5 + $0x18b0] sm:$0xff]
    %v844 = vld [vmem:[#allocation5 + $0x18b8] sm:$0xff]
    %v845 = vld [vmem:[#allocation5 + $0x18c0] sm:$0xff]
    %v846 = vld [vmem:[#allocation5 + $0x18c8] sm:$0xff]
    %v847 = vld [vmem:[#allocation5 + $0x18d0] sm:$0xff]
    %v848 = vld [vmem:[#allocation5 + $0x18d8] sm:$0xff]
    %v849 = vld [vmem:[#allocation5 + $0x18e0] sm:$0xff]
    %v850 = vld [vmem:[#allocation5 + $0x18e8] sm:$0xff]
    %v851 = vld [vmem:[#allocation5 + $0x18f0] sm:$0xff]
    %v852 = vld [vmem:[#allocation5 + $0x18f8] sm:$0xff]
    %v853 = vld [vmem:[#allocation5 + $0x1900] sm:$0xff]
    %v854 = vld [vmem:[#allocation5 + $0x1908] sm:$0xff]
    %v855 = vld [vmem:[#allocation5 + $0x1910] sm:$0xff]
    %v856 = vld [vmem:[#allocation5 + $0x1918] sm:$0xff]
    %v857 = vld [vmem:[#allocation5 + $0x1920] sm:$0xff]
    %v858 = vld [vmem:[#allocation5 + $0x1928] sm:$0xff]
    %v859 = vld [vmem:[#allocation5 + $0x1930] sm:$0xff]
    %v860 = vld [vmem:[#allocation5 + $0x1938] sm:$0xff]
    %v861 = vld [vmem:[#allocation5 + $0x1940] sm:$0xff]
    %v862 = vld [vmem:[#allocation5 + $0x1948] sm:$0xff]
    %v863 = vld [vmem:[#allocation5 + $0x1950] sm:$0xff]
    %v864 = vld [vmem:[#allocation5 + $0x1958] sm:$0xff]
    %v865 = vld [vmem:[#allocation5 + $0x1960] sm:$0xff]
    %v866 = vld [vmem:[#allocation5 + $0x1968] sm:$0xff]
    %v867 = vld [vmem:[#allocation5 + $0x1970] sm:$0xff]
    %v868 = vld [vmem:[#allocation5 + $0x1978] sm:$0xff]
    %v869 = vld [vmem:[#allocation5 + $0x1980] sm:$0xff]
    %v870 = vld [vmem:[#allocation5 + $0x1988] sm:$0xff]
    %v871 = vld [vmem:[#allocation5 + $0x1990] sm:$0xff]
    %v872 = vld [vmem:[#allocation5 + $0x1998] sm:$0xff]
    %v873 = vld [vmem:[#allocation5 + $0x19a0] sm:$0xff]
    %v874 = vld [vmem:[#allocation5 + $0x19a8] sm:$0xff]
    %v875 = vld [vmem:[#allocation5 + $0x19b0] sm:$0xff]
    %v876 = vld [vmem:[#allocation5 + $0x19b8] sm:$0xff]
    %v877 = vld [vmem:[#allocation5 + $0x19c0] sm:$0xff]
    %v878 = vld [vmem:[#allocation5 + $0x19c8] sm:$0xff]
    %v879 = vld [vmem:[#allocation5 + $0x19d0] sm:$0xff]
    %v880 = vld [vmem:[#allocation5 + $0x19d8] sm:$0xff]
    %v881 = vld [vmem:[#allocation5 + $0x19e0] sm:$0xff]
    %v882 = vld [vmem:[#allocation5 + $0x19e8] sm:$0xff]
    %v883 = vld [vmem:[#allocation5 + $0x19f0] sm:$0xff]
    %v884 = vld [vmem:[#allocation5 + $0x19f8] sm:$0xff]
    %v885 = vld [vmem:[#allocation5 + $0x1a00] sm:$0xff]
    %v886 = vld [vmem:[#allocation5 + $0x1a08] sm:$0xff]
    %v887 = vld [vmem:[#allocation5 + $0x1a10] sm:$0xff]
    %v888 = vld [vmem:[#allocation5 + $0x1a18] sm:$0xff]
    %v889 = vld [vmem:[#allocation5 + $0x1a20] sm:$0xff]
    %v890 = vld [vmem:[#allocation5 + $0x1a28] sm:$0xff]
    %v891 = vld [vmem:[#allocation5 + $0x1a30] sm:$0xff]
    %v892 = vld [vmem:[#allocation5 + $0x1a38] sm:$0xff]
    %v893 = vld [vmem:[#allocation5 + $0x1a40] sm:$0xff]
    %v894 = vld [vmem:[#allocation5 + $0x1a48] sm:$0xff]
    %v895 = vld [vmem:[#allocation5 + $0x1a50] sm:$0xff]
    %v896 = vld [vmem:[#allocation5 + $0x1a58] sm:$0xff]
    %v897 = vld [vmem:[#allocation5 + $0x1a60] sm:$0xff]
    %v898 = vld [vmem:[#allocation5 + $0x1a68] sm:$0xff]
    %v899 = vld [vmem:[#allocation5 + $0x1a70] sm:$0xff]
    %v900 = vld [vmem:[#allocation5 + $0x1a78] sm:$0xff]
    %v901 = vld [vmem:[#allocation5 + $0x1a80] sm:$0xff]
    %v902 = vld [vmem:[#allocation5 + $0x1a88] sm:$0xff]
    %v903 = vld [vmem:[#allocation5 + $0x1a90] sm:$0xff]
    %v904 = vld [vmem:[#allocation5 + $0x1a98] sm:$0xff]
    %v905 = vld [vmem:[#allocation5 + $0x1aa0] sm:$0xff]
    %v906 = vld [vmem:[#allocation5 + $0x1aa8] sm:$0xff]
    %v907 = vld [vmem:[#allocation5 + $0x1ab0] sm:$0xff]
    %v908 = vld [vmem:[#allocation5 + $0x1ab8] sm:$0xff]
    %v909 = vld [vmem:[#allocation5 + $0x1ac0] sm:$0xff]
    %v910 = vld [vmem:[#allocation5 + $0x1ac8] sm:$0xff]
    %v911 = vld [vmem:[#allocation5 + $0x1ad0] sm:$0xff]
    %v912 = vld [vmem:[#allocation5 + $0x1ad8] sm:$0xff]
    %v913 = vld [vmem:[#allocation5 + $0x1ae0] sm:$0xff]
    %v914 = vld [vmem:[#allocation5 + $0x1ae8] sm:$0xff]
    %v915 = vld [vmem:[#allocation5 + $0x1af0] sm:$0xff]
    %v916 = vld [vmem:[#allocation5 + $0x1af8] sm:$0xff]
    %v917 = vld [vmem:[#allocation5 + $0x1b00] sm:$0xff]
    %v918 = vld [vmem:[#allocation5 + $0x1b08] sm:$0xff]
    %v919 = vld [vmem:[#allocation5 + $0x1b10] sm:$0xff]
    %v920 = vld [vmem:[#allocation5 + $0x1b18] sm:$0xff]
    %v921 = vld [vmem:[#allocation5 + $0x1b20] sm:$0xff]
    %v922 = vld [vmem:[#allocation5 + $0x1b28] sm:$0xff]
    %v923 = vld [vmem:[#allocation5 + $0x1b30] sm:$0xff]
    %v924 = vld [vmem:[#allocation5 + $0x1b38] sm:$0xff]
    %v925 = vld [vmem:[#allocation5 + $0x1b40] sm:$0xff]
    %v926 = vld [vmem:[#allocation5 + $0x1b48] sm:$0xff]
    %v927 = vld [vmem:[#allocation5 + $0x1b50] sm:$0xff]
    %v928 = vld [vmem:[#allocation5 + $0x1b58] sm:$0xff]
    %v929 = vld [vmem:[#allocation5 + $0x1b60] sm:$0xff]
    %v930 = vld [vmem:[#allocation5 + $0x1b68] sm:$0xff]
    %v931 = vld [vmem:[#allocation5 + $0x1b70] sm:$0xff]
    %v932 = vld [vmem:[#allocation5 + $0x1b78] sm:$0xff]
    %v933 = vld [vmem:[#allocation5 + $0x1b80] sm:$0xff]
    %v934 = vld [vmem:[#allocation5 + $0x1b88] sm:$0xff]
    %v935 = vld [vmem:[#allocation5 + $0x1b90] sm:$0xff]
    %v936 = vld [vmem:[#allocation5 + $0x1b98] sm:$0xff]
    %v937 = vld [vmem:[#allocation5 + $0x1ba0] sm:$0xff]
    %v938 = vld [vmem:[#allocation5 + $0x1ba8] sm:$0xff]
    %v939 = vld [vmem:[#allocation5 + $0x1bb0] sm:$0xff]
    %v940 = vld [vmem:[#allocation5 + $0x1bb8] sm:$0xff]
    %v941 = vld [vmem:[#allocation5 + $0x1bc0] sm:$0xff]
    %v942 = vld [vmem:[#allocation5 + $0x1bc8] sm:$0xff]
    %v943 = vld [vmem:[#allocation5 + $0x1bd0] sm:$0xff]
    %v944 = vld [vmem:[#allocation5 + $0x1bd8] sm:$0xff]
    %v945 = vld [vmem:[#allocation5 + $0x1be0] sm:$0xff]
    %v946 = vld [vmem:[#allocation5 + $0x1be8] sm:$0xff]
    %v947 = vld [vmem:[#allocation5 + $0x1bf0] sm:$0xff]
    %v948 = vld [vmem:[#allocation5 + $0x1bf8] sm:$0xff]
    %v949 = vld [vmem:[#allocation5 + $0x1c00] sm:$0xff]
    %v950 = vld [vmem:[#allocation5 + $0x1c08] sm:$0xff]
    %v951 = vld [vmem:[#allocation5 + $0x1c10] sm:$0xff]
    %v952 = vld [vmem:[#allocation5 + $0x1c18] sm:$0xff]
    %v953 = vld [vmem:[#allocation5 + $0x1c20] sm:$0xff]
    %v954 = vld [vmem:[#allocation5 + $0x1c28] sm:$0xff]
    %v955 = vld [vmem:[#allocation5 + $0x1c30] sm:$0xff]
    %v956 = vld [vmem:[#allocation5 + $0x1c38] sm:$0xff]
    %v957 = vld [vmem:[#allocation5 + $0x1c40] sm:$0xff]
    %v958 = vld [vmem:[#allocation5 + $0x1c48] sm:$0xff]
    %v959 = vld [vmem:[#allocation5 + $0x1c50] sm:$0xff]
    %v960 = vld [vmem:[#allocation5 + $0x1c58] sm:$0xff]
    %v961 = vld [vmem:[#allocation5 + $0x1c60] sm:$0xff]
    %v962 = vld [vmem:[#allocation5 + $0x1c68] sm:$0xff]
    %v963 = vld [vmem:[#allocation5 + $0x1c70] sm:$0xff]
    %v964 = vld [vmem:[#allocation5 + $0x1c78] sm:$0xff]
    %v965 = vld [vmem:[#allocation5 + $0x1c80] sm:$0xff]
    %v966 = vld [vmem:[#allocation5 + $0x1c88] sm:$0xff]
    %v967 = vld [vmem:[#allocation5 + $0x1c90] sm:$0xff]
    %v968 = vld [vmem:[#allocation5 + $0x1c98] sm:$0xff]
    %v969 = vld [vmem:[#allocation5 + $0x1ca0] sm:$0xff]
    %v970 = vld [vmem:[#allocation5 + $0x1ca8] sm:$0xff]
    %v971 = vld [vmem:[#allocation5 + $0x1cb0] sm:$0xff]
    %v972 = vld [vmem:[#allocation5 + $0x1cb8] sm:$0xff]
    %v973 = vld [vmem:[#allocation5 + $0x1cc0] sm:$0xff]
    %v974 = vld [vmem:[#allocation5 + $0x1cc8] sm:$0xff]
    %v975 = vld [vmem:[#allocation5 + $0x1cd0] sm:$0xff]
    %v976 = vld [vmem:[#allocation5 + $0x1cd8] sm:$0xff]
    %v977 = vld [vmem:[#allocation5 + $0x1ce0] sm:$0xff]
    %v978 = vld [vmem:[#allocation5 + $0x1ce8] sm:$0xff]
    %v979 = vld [vmem:[#allocation5 + $0x1cf0] sm:$0xff]
    %v980 = vld [vmem:[#allocation5 + $0x1cf8] sm:$0xff]
    %v981 = vld [vmem:[#allocation5 + $0x1d00] sm:$0xff]
    %v982 = vld [vmem:[#allocation5 + $0x1d08] sm:$0xff]
    %v983 = vld [vmem:[#allocation5 + $0x1d10] sm:$0xff]
    %v984 = vld [vmem:[#allocation5 + $0x1d18] sm:$0xff]
    %v985 = vld [vmem:[#allocation5 + $0x1d20] sm:$0xff]
    %v986 = vld [vmem:[#allocation5 + $0x1d28] sm:$0xff]
    %v987 = vld [vmem:[#allocation5 + $0x1d30] sm:$0xff]
    %v988 = vld [vmem:[#allocation5 + $0x1d38] sm:$0xff]
    %v989 = vld [vmem:[#allocation5 + $0x1d40] sm:$0xff]
    %v990 = vld [vmem:[#allocation5 + $0x1d48] sm:$0xff]
    %v991 = vld [vmem:[#allocation5 + $0x1d50] sm:$0xff]
    %v992 = vld [vmem:[#allocation5 + $0x1d58] sm:$0xff]
    %v993 = vld [vmem:[#allocation5 + $0x1d60] sm:$0xff]
    %v994 = vld [vmem:[#allocation5 + $0x1d68] sm:$0xff]
    %v995 = vld [vmem:[#allocation5 + $0x1d70] sm:$0xff]
    %v996 = vld [vmem:[#allocation5 + $0x1d78] sm:$0xff]
    %v997 = vld [vmem:[#allocation5 + $0x1d80] sm:$0xff]
    %v998 = vld [vmem:[#allocation5 + $0x1d88] sm:$0xff]
    %v999 = vld [vmem:[#allocation5 + $0x1d90] sm:$0xff]
    %v1000 = vld [vmem:[#allocation5 + $0x1d98] sm:$0xff]
    %v1001 = vld [vmem:[#allocation5 + $0x1da0] sm:$0xff]
    %v1002 = vld [vmem:[#allocation5 + $0x1da8] sm:$0xff]
    %v1003 = vld [vmem:[#allocation5 + $0x1db0] sm:$0xff]
    %v1004 = vld [vmem:[#allocation5 + $0x1db8] sm:$0xff]
    %v1005 = vld [vmem:[#allocation5 + $0x1dc0] sm:$0xff]
    %v1006 = vld [vmem:[#allocation5 + $0x1dc8] sm:$0xff]
    %v1007 = vld [vmem:[#allocation5 + $0x1dd0] sm:$0xff]
    %v1008 = vld [vmem:[#allocation5 + $0x1dd8] sm:$0xff]
    %v1009 = vld [vmem:[#allocation5 + $0x1de0] sm:$0xff]
    %v1010 = vld [vmem:[#allocation5 + $0x1de8] sm:$0xff]
    %v1011 = vld [vmem:[#allocation5 + $0x1df0] sm:$0xff]
    %v1012 = vld [vmem:[#allocation5 + $0x1df8] sm:$0xff]
    %v1013 = vld [vmem:[#allocation5 + $0x1e00] sm:$0xff]
    %v1014 = vld [vmem:[#allocation5 + $0x1e08] sm:$0xff]
    %v1015 = vld [vmem:[#allocation5 + $0x1e10] sm:$0xff]
    %v1016 = vld [vmem:[#allocation5 + $0x1e18] sm:$0xff]
    %v1017 = vld [vmem:[#allocation5 + $0x1e20] sm:$0xff]
    %v1018 = vld [vmem:[#allocation5 + $0x1e28] sm:$0xff]
    %v1019 = vld [vmem:[#allocation5 + $0x1e30] sm:$0xff]
    %v1020 = vld [vmem:[#allocation5 + $0x1e38] sm:$0xff]
    %v1021 = vld [vmem:[#allocation5 + $0x1e40] sm:$0xff]
    %v1022 = vld [vmem:[#allocation5 + $0x1e48] sm:$0xff]
    %v1023 = vld [vmem:[#allocation5 + $0x1e50] sm:$0xff]
    %v1024 = vld [vmem:[#allocation5 + $0x1e58] sm:$0xff]
    %v1025 = vld [vmem:[#allocation5 + $0x1e60] sm:$0xff]
    %v1026 = vld [vmem:[#allocation5 + $0x1e68] sm:$0xff]
    %v1027 = vld [vmem:[#allocation5 + $0x1e70] sm:$0xff]
    %v1028 = vld [vmem:[#allocation5 + $0x1e78] sm:$0xff]
    %v1029 = vld [vmem:[#allocation5 + $0x1e80] sm:$0xff]
    %v1030 = vld [vmem:[#allocation5 + $0x1e88] sm:$0xff]
    %v1031 = vld [vmem:[#allocation5 + $0x1e90] sm:$0xff]
    %v1032 = vld [vmem:[#allocation5 + $0x1e98] sm:$0xff]
    %v1033 = vld [vmem:[#allocation5 + $0x1ea0] sm:$0xff]
    %v1034 = vld [vmem:[#allocation5 + $0x1ea8] sm:$0xff]
    %v1035 = vld [vmem:[#allocation5 + $0x1eb0] sm:$0xff]
    %v1036 = vld [vmem:[#allocation5 + $0x1eb8] sm:$0xff]
    %v1037 = vld [vmem:[#allocation5 + $0x1ec0] sm:$0xff]
    %v1038 = vld [vmem:[#allocation5 + $0x1ec8] sm:$0xff]
    %v1039 = vld [vmem:[#allocation5 + $0x1ed0] sm:$0xff]
    %v1040 = vld [vmem:[#allocation5 + $0x1ed8] sm:$0xff]
    %v1041 = vld [vmem:[#allocation5 + $0x1ee0] sm:$0xff]
    %v1042 = vld [vmem:[#allocation5 + $0x1ee8] sm:$0xff]
    %v1043 = vld [vmem:[#allocation5 + $0x1ef0] sm:$0xff]
    %v1044 = vld [vmem:[#allocation5 + $0x1ef8] sm:$0xff]
    %v1045 = vld [vmem:[#allocation5 + $0x1f00] sm:$0xff]
    %v1046 = vld [vmem:[#allocation5 + $0x1f08] sm:$0xff]
    %v1047 = vld [vmem:[#allocation5 + $0x1f10] sm:$0xff]
    %v1048 = vld [vmem:[#allocation5 + $0x1f18] sm:$0xff]
    %v1049 = vld [vmem:[#allocation5 + $0x1f20] sm:$0xff]
    %v1050 = vld [vmem:[#allocation5 + $0x1f28] sm:$0xff]
    %v1051 = vld [vmem:[#allocation5 + $0x1f30] sm:$0xff]
    %v1052 = vld [vmem:[#allocation5 + $0x1f38] sm:$0xff]
    %v1053 = vld [vmem:[#allocation5 + $0x1f40] sm:$0xff]
    %v1054 = vld [vmem:[#allocation5 + $0x1f48] sm:$0xff]
    %v1055 = vld [vmem:[#allocation5 + $0x1f50] sm:$0xff]
    %v1056 = vld [vmem:[#allocation5 + $0x1f58] sm:$0xff]
    %v1057 = vld [vmem:[#allocation5 + $0x1f60] sm:$0xff]
    %v1058 = vld [vmem:[#allocation5 + $0x1f68] sm:$0xff]
    %v1059 = vld [vmem:[#allocation5 + $0x1f70] sm:$0xff]
    %v1060 = vld [vmem:[#allocation5 + $0x1f78] sm:$0xff]
    %v1061 = vld [vmem:[#allocation5 + $0x1f80] sm:$0xff]
    %v1062 = vld [vmem:[#allocation5 + $0x1f88] sm:$0xff]
    %v1063 = vld [vmem:[#allocation5 + $0x1f90] sm:$0xff]
    %v1064 = vld [vmem:[#allocation5 + $0x1f98] sm:$0xff]
    %v1065 = vld [vmem:[#allocation5 + $0x1fa0] sm:$0xff]
    %v1066 = vld [vmem:[#allocation5 + $0x1fa8] sm:$0xff]
    %v1067 = vld [vmem:[#allocation5 + $0x1fb0] sm:$0xff]
    %v1068 = vld [vmem:[#allocation5 + $0x1fb8] sm:$0xff]
    %v1069 = vld [vmem:[#allocation5 + $0x1fc0] sm:$0xff]
    %v1070 = vld [vmem:[#allocation5 + $0x1fc8] sm:$0xff]
    %v1071 = vld [vmem:[#allocation5 + $0x1fd0] sm:$0xff]
    %v1072 = vld [vmem:[#allocation5 + $0x1fd8] sm:$0xff]
    %v1073 = vld [vmem:[#allocation5 + $0x1fe0] sm:$0xff]
    %v1074 = vld [vmem:[#allocation5 + $0x1fe8] sm:$0xff]
    %v1075 = vld [vmem:[#allocation5 + $0x1ff0] sm:$0xff]
    %v1076 = vld [vmem:[#allocation5 + $0x1ff8] sm:$0xff]
    %v1077 = vld [vmem:[#allocation7] sm:$0xff]
    %v1078 = vld [vmem:[#allocation7 + $0x8] sm:$0xff]
    %v1081 = vlaneseq
    %v1082 = vshrl.u32 %v1081, 7
    %v1083 = vsub.s32 0, %v1082
    %v1084 = vrot.slane %v1077, %v1083
    %v1085 = vlaneseq
    %v1086 = vshrl.u32 %v1085, 7
    %v1087 = vsub.s32 1, %v1086
    %v1088 = vrot.slane %v1077, %v1087
    %v1089 = vlaneseq
    %v1090 = vshrl.u32 %v1089, 7
    %v1091 = vsub.s32 2, %v1090
    %v1092 = vrot.slane %v1077, %v1091
    %v1093 = vlaneseq
    %v1094 = vshrl.u32 %v1093, 7
    %v1095 = vsub.s32 3, %v1094
    %v1096 = vrot.slane %v1077, %v1095
    %v1097 = vlaneseq
    %v1098 = vshrl.u32 %v1097, 7
    %v1099 = vsub.s32 4, %v1098
    %v1100 = vrot.slane %v1077, %v1099
    %v1101 = vlaneseq
    %v1102 = vshrl.u32 %v1101, 7
    %v1103 = vsub.s32 5, %v1102
    %v1104 = vrot.slane %v1077, %v1103
    %v1105 = vlaneseq
    %v1106 = vshrl.u32 %v1105, 7
    %v1107 = vsub.s32 6, %v1106
    %v1108 = vrot.slane %v1077, %v1107
    %v1109 = vlaneseq
    %v1110 = vshrl.u32 %v1109, 7
    %v1111 = vsub.s32 7, %v1110
    %v1112 = vrot.slane %v1077, %v1111
    %v1113 = vlaneseq
    %v1114 = vshrl.u32 %v1113, 7
    %v1115 = vsub.s32 0, %v1114
    %v1116 = vrot.slane %v1078, %v1115
    %v1117 = vlaneseq
    %v1118 = vshrl.u32 %v1117, 7
    %v1119 = vsub.s32 1, %v1118
    %v1120 = vrot.slane %v1078, %v1119
    %v1121 = vlaneseq
    %v1122 = vshrl.u32 %v1121, 7
    %v1123 = vsub.s32 2, %v1122
    %v1124 = vrot.slane %v1078, %v1123
    %v1125 = vlaneseq
    %v1126 = vshrl.u32 %v1125, 7
    %v1127 = vsub.s32 3, %v1126
    %v1128 = vrot.slane %v1078, %v1127
    %v1129 = vlaneseq
    %v1130 = vshrl.u32 %v1129, 7
    %v1131 = vsub.s32 4, %v1130
    %v1132 = vrot.slane %v1078, %v1131
    %v1133 = vlaneseq
    %v1134 = vshrl.u32 %v1133, 7
    %v1135 = vsub.s32 5, %v1134
    %v1136 = vrot.slane %v1078, %v1135
    %v1137 = vlaneseq
    %v1138 = vshrl.u32 %v1137, 7
    %v1139 = vsub.s32 6, %v1138
    %v1140 = vrot.slane %v1078, %v1139
    %v1141 = vlaneseq
    %v1142 = vshrl.u32 %v1141, 7
    %v1143 = vsub.s32 7, %v1142
    %v1144 = vrot.slane %v1078, %v1143
    %v1162 = vcombine.high %v52, %v52
    %v1164 = vunpack.c.l.s4 1966171168
    %v1165 = vunpack.c.0.s8 %v1164
    %v1166 = vlaneseq
    %v1167 = vshrl.u32 %v1166, 7
    %v1168 = vsub.s32 %v1165, %v1167
    %v1169 = vrot.slane %v52, %v1168
    %v1171 = vunpack.c.l.s4 1966171168
    %v1172 = vunpack.c.0.s8 %v1171
    %v1173 = vlaneseq
    %v1174 = vshrl.u32 %v1173, 7
    %v1175 = vsub.s32 %v1172, %v1174
    %v1176 = vrot.slane %v1162, %v1175
    %v1177 = vcombine.high %v1169, %v1169
    %v1178 = vcombine.high %v1176, %v1176
    %v1180 = vunpack.c.l.s4 1966171168
    %v1181 = vunpack.c.0.s8 %v1180
    %v1182 = vlaneseq
    %v1183 = vshrl.u32 %v1182, 7
    %v1184 = vsub.s32 %v1181, %v1183
    %v1185 = vrot.slane %v1169, %v1184
    %v1187 = vunpack.c.l.s4 1966171168
    %v1188 = vunpack.c.0.s8 %v1187
    %v1189 = vlaneseq
    %v1190 = vshrl.u32 %v1189, 7
    %v1191 = vsub.s32 %v1188, %v1190
    %v1192 = vrot.slane %v1176, %v1191
    %v1194 = vunpack.c.l.s4 1966171168
    %v1195 = vunpack.c.0.s8 %v1194
    %v1196 = vlaneseq
    %v1197 = vshrl.u32 %v1196, 7
    %v1198 = vsub.s32 %v1195, %v1197
    %v1199 = vrot.slane %v1177, %v1198
    %v1201 = vunpack.c.l.s4 1966171168
    %v1202 = vunpack.c.0.s8 %v1201
    %v1203 = vlaneseq
    %v1204 = vshrl.u32 %v1203, 7
    %v1205 = vsub.s32 %v1202, %v1204
    %v1206 = vrot.slane %v1178, %v1205
    %v1207 = vcombine.high %v1185, %v1185
    %v1208 = vcombine.high %v1192, %v1192
    %v1209 = vcombine.high %v1199, %v1199
    %v1210 = vcombine.high %v1206, %v1206
    %v2243 = vunpack.c.l.b16 %v53
    %v2244 = vunpack.c.h.b16 %v53
    %v2245 = vunpack.c.l.b16 %v54
    %v2246 = vunpack.c.h.b16 %v54
    %v2247 = vunpack.c.l.b16 %v55
    %v2248 = vunpack.c.h.b16 %v55
    %v2249 = vunpack.c.l.b16 %v56
    %v2250 = vunpack.c.h.b16 %v56
    %v2251 = vunpack.c.l.b16 %v57
    %v2252 = vunpack.c.h.b16 %v57
    %v2253 = vunpack.c.l.b16 %v58
    %v2254 = vunpack.c.h.b16 %v58
    %v2255 = vunpack.c.l.b16 %v59
    %v2256 = vunpack.c.h.b16 %v59
    %v2257 = vunpack.c.l.b16 %v60
    %v2258 = vunpack.c.h.b16 %v60
    %v2259 = vunpack.c.l.b16 %v61
    %v2260 = vunpack.c.h.b16 %v61
    %v2261 = vunpack.c.l.b16 %v62
    %v2262 = vunpack.c.h.b16 %v62
    %v2263 = vunpack.c.l.b16 %v63
    %v2264 = vunpack.c.h.b16 %v63
    %v2265 = vunpack.c.l.b16 %v64
    %v2266 = vunpack.c.h.b16 %v64
    %v2267 = vunpack.c.l.b16 %v65
    %v2268 = vunpack.c.h.b16 %v65
    %v2269 = vunpack.c.l.b16 %v66
    %v2270 = vunpack.c.h.b16 %v66
    %v2271 = vunpack.c.l.b16 %v67
    %v2272 = vunpack.c.h.b16 %v67
    %v2273 = vunpack.c.l.b16 %v68
    %v2274 = vunpack.c.h.b16 %v68
    %v2275 = vunpack.c.l.b16 %v69
    %v2276 = vunpack.c.h.b16 %v69
    %v2277 = vunpack.c.l.b16 %v70
    %v2278 = vunpack.c.h.b16 %v70
    %v2279 = vunpack.c.l.b16 %v71
    %v2280 = vunpack.c.h.b16 %v71
    %v2281 = vunpack.c.l.b16 %v72
    %v2282 = vunpack.c.h.b16 %v72
    %v2283 = vunpack.c.l.b16 %v73
    %v2284 = vunpack.c.h.b16 %v73
    %v2285 = vunpack.c.l.b16 %v74
    %v2286 = vunpack.c.h.b16 %v74
    %v2287 = vunpack.c.l.b16 %v75
    %v2288 = vunpack.c.h.b16 %v75
    %v2289 = vunpack.c.l.b16 %v76
    %v2290 = vunpack.c.h.b16 %v76
    %v2291 = vunpack.c.l.b16 %v77
    %v2292 = vunpack.c.h.b16 %v77
    %v2293 = vunpack.c.l.b16 %v78
    %v2294 = vunpack.c.h.b16 %v78
    %v2295 = vunpack.c.l.b16 %v79
    %v2296 = vunpack.c.h.b16 %v79
    %v2297 = vunpack.c.l.b16 %v80
    %v2298 = vunpack.c.h.b16 %v80
    %v2299 = vunpack.c.l.b16 %v81
    %v2300 = vunpack.c.h.b16 %v81
    %v2301 = vunpack.c.l.b16 %v82
    %v2302 = vunpack.c.h.b16 %v82
    %v2303 = vunpack.c.l.b16 %v83
    %v2304 = vunpack.c.h.b16 %v83
    %v2305 = vunpack.c.l.b16 %v84
    %v2306 = vunpack.c.h.b16 %v84
    %v2307 = vunpack.c.l.b16 %v85
    %v2308 = vunpack.c.h.b16 %v85
    %v2309 = vunpack.c.l.b16 %v86
    %v2310 = vunpack.c.h.b16 %v86
    %v2311 = vunpack.c.l.b16 %v87
    %v2312 = vunpack.c.h.b16 %v87
    %v2313 = vunpack.c.l.b16 %v88
    %v2314 = vunpack.c.h.b16 %v88
    %v2315 = vunpack.c.l.b16 %v89
    %v2316 = vunpack.c.h.b16 %v89
    %v2317 = vunpack.c.l.b16 %v90
    %v2318 = vunpack.c.h.b16 %v90
    %v2319 = vunpack.c.l.b16 %v91
    %v2320 = vunpack.c.h.b16 %v91
    %v2321 = vunpack.c.l.b16 %v92
    %v2322 = vunpack.c.h.b16 %v92
    %v2323 = vunpack.c.l.b16 %v93
    %v2324 = vunpack.c.h.b16 %v93
    %v2325 = vunpack.c.l.b16 %v94
    %v2326 = vunpack.c.h.b16 %v94
    %v2327 = vunpack.c.l.b16 %v95
    %v2328 = vunpack.c.h.b16 %v95
    %v2329 = vunpack.c.l.b16 %v96
    %v2330 = vunpack.c.h.b16 %v96
    %v2331 = vunpack.c.l.b16 %v97
    %v2332 = vunpack.c.h.b16 %v97
    %v2333 = vunpack.c.l.b16 %v98
    %v2334 = vunpack.c.h.b16 %v98
    %v2335 = vunpack.c.l.b16 %v99
    %v2336 = vunpack.c.h.b16 %v99
    %v2337 = vunpack.c.l.b16 %v100
    %v2338 = vunpack.c.h.b16 %v100
    %v2339 = vunpack.c.l.b16 %v101
    %v2340 = vunpack.c.h.b16 %v101
    %v2341 = vunpack.c.l.b16 %v102
    %v2342 = vunpack.c.h.b16 %v102
    %v2343 = vunpack.c.l.b16 %v103
    %v2344 = vunpack.c.h.b16 %v103
    %v2345 = vunpack.c.l.b16 %v104
    %v2346 = vunpack.c.h.b16 %v104
    %v2347 = vunpack.c.l.b16 %v105
    %v2348 = vunpack.c.h.b16 %v105
    %v2349 = vunpack.c.l.b16 %v106
    %v2350 = vunpack.c.h.b16 %v106
    %v2351 = vunpack.c.l.b16 %v107
    %v2352 = vunpack.c.h.b16 %v107
    %v2353 = vunpack.c.l.b16 %v108
    %v2354 = vunpack.c.h.b16 %v108
    %v2355 = vunpack.c.l.b16 %v109
    %v2356 = vunpack.c.h.b16 %v109
    %v2357 = vunpack.c.l.b16 %v110
    %v2358 = vunpack.c.h.b16 %v110
    %v2359 = vunpack.c.l.b16 %v111
    %v2360 = vunpack.c.h.b16 %v111
    %v2361 = vunpack.c.l.b16 %v112
    %v2362 = vunpack.c.h.b16 %v112
    %v2363 = vunpack.c.l.b16 %v113
    %v2364 = vunpack.c.h.b16 %v113
    %v2365 = vunpack.c.l.b16 %v114
    %v2366 = vunpack.c.h.b16 %v114
    %v2367 = vunpack.c.l.b16 %v115
    %v2368 = vunpack.c.h.b16 %v115
    %v2369 = vunpack.c.l.b16 %v116
    %v2370 = vunpack.c.h.b16 %v116
    %v2371 = vunpack.c.l.b16 %v117
    %v2372 = vunpack.c.h.b16 %v117
    %v2373 = vunpack.c.l.b16 %v118
    %v2374 = vunpack.c.h.b16 %v118
    %v2375 = vunpack.c.l.b16 %v119
    %v2376 = vunpack.c.h.b16 %v119
    %v2377 = vunpack.c.l.b16 %v120
    %v2378 = vunpack.c.h.b16 %v120
    %v2379 = vunpack.c.l.b16 %v121
    %v2380 = vunpack.c.h.b16 %v121
    %v2381 = vunpack.c.l.b16 %v122
    %v2382 = vunpack.c.h.b16 %v122
    %v2383 = vunpack.c.l.b16 %v123
    %v2384 = vunpack.c.h.b16 %v123
    %v2385 = vunpack.c.l.b16 %v124
    %v2386 = vunpack.c.h.b16 %v124
    %v2387 = vunpack.c.l.b16 %v125
    %v2388 = vunpack.c.h.b16 %v125
    %v2389 = vunpack.c.l.b16 %v126
    %v2390 = vunpack.c.h.b16 %v126
    %v2391 = vunpack.c.l.b16 %v127
    %v2392 = vunpack.c.h.b16 %v127
    %v2393 = vunpack.c.l.b16 %v128
    %v2394 = vunpack.c.h.b16 %v128
    %v2395 = vunpack.c.l.b16 %v129
    %v2396 = vunpack.c.h.b16 %v129
    %v2397 = vunpack.c.l.b16 %v130
    %v2398 = vunpack.c.h.b16 %v130
    %v2399 = vunpack.c.l.b16 %v131
    %v2400 = vunpack.c.h.b16 %v131
    %v2401 = vunpack.c.l.b16 %v132
    %v2402 = vunpack.c.h.b16 %v132
    %v2403 = vunpack.c.l.b16 %v133
    %v2404 = vunpack.c.h.b16 %v133
    %v2405 = vunpack.c.l.b16 %v134
    %v2406 = vunpack.c.h.b16 %v134
    %v2407 = vunpack.c.l.b16 %v135
    %v2408 = vunpack.c.h.b16 %v135
    %v2409 = vunpack.c.l.b16 %v136
    %v2410 = vunpack.c.h.b16 %v136
    %v2411 = vunpack.c.l.b16 %v137
    %v2412 = vunpack.c.h.b16 %v137
    %v2413 = vunpack.c.l.b16 %v138
    %v2414 = vunpack.c.h.b16 %v138
    %v2415 = vunpack.c.l.b16 %v139
    %v2416 = vunpack.c.h.b16 %v139
    %v2417 = vunpack.c.l.b16 %v140
    %v2418 = vunpack.c.h.b16 %v140
    %v2419 = vunpack.c.l.b16 %v141
    %v2420 = vunpack.c.h.b16 %v141
    %v2421 = vunpack.c.l.b16 %v142
    %v2422 = vunpack.c.h.b16 %v142
    %v2423 = vunpack.c.l.b16 %v143
    %v2424 = vunpack.c.h.b16 %v143
    %v2425 = vunpack.c.l.b16 %v144
    %v2426 = vunpack.c.h.b16 %v144
    %v2427 = vunpack.c.l.b16 %v145
    %v2428 = vunpack.c.h.b16 %v145
    %v2429 = vunpack.c.l.b16 %v146
    %v2430 = vunpack.c.h.b16 %v146
    %v2431 = vunpack.c.l.b16 %v147
    %v2432 = vunpack.c.h.b16 %v147
    %v2433 = vunpack.c.l.b16 %v148
    %v2434 = vunpack.c.h.b16 %v148
    %v2435 = vunpack.c.l.b16 %v149
    %v2436 = vunpack.c.h.b16 %v149
    %v2437 = vunpack.c.l.b16 %v150
    %v2438 = vunpack.c.h.b16 %v150
    %v2439 = vunpack.c.l.b16 %v151
    %v2440 = vunpack.c.h.b16 %v151
    %v2441 = vunpack.c.l.b16 %v152
    %v2442 = vunpack.c.h.b16 %v152
    %v2443 = vunpack.c.l.b16 %v153
    %v2444 = vunpack.c.h.b16 %v153
    %v2445 = vunpack.c.l.b16 %v154
    %v2446 = vunpack.c.h.b16 %v154
    %v2447 = vunpack.c.l.b16 %v155
    %v2448 = vunpack.c.h.b16 %v155
    %v2449 = vunpack.c.l.b16 %v156
    %v2450 = vunpack.c.h.b16 %v156
    %v2451 = vunpack.c.l.b16 %v157
    %v2452 = vunpack.c.h.b16 %v157
    %v2453 = vunpack.c.l.b16 %v158
    %v2454 = vunpack.c.h.b16 %v158
    %v2455 = vunpack.c.l.b16 %v159
    %v2456 = vunpack.c.h.b16 %v159
    %v2457 = vunpack.c.l.b16 %v160
    %v2458 = vunpack.c.h.b16 %v160
    %v2459 = vunpack.c.l.b16 %v161
    %v2460 = vunpack.c.h.b16 %v161
    %v2461 = vunpack.c.l.b16 %v162
    %v2462 = vunpack.c.h.b16 %v162
    %v2463 = vunpack.c.l.b16 %v163
    %v2464 = vunpack.c.h.b16 %v163
    %v2465 = vunpack.c.l.b16 %v164
    %v2466 = vunpack.c.h.b16 %v164
    %v2467 = vunpack.c.l.b16 %v165
    %v2468 = vunpack.c.h.b16 %v165
    %v2469 = vunpack.c.l.b16 %v166
    %v2470 = vunpack.c.h.b16 %v166
    %v2471 = vunpack.c.l.b16 %v167
    %v2472 = vunpack.c.h.b16 %v167
    %v2473 = vunpack.c.l.b16 %v168
    %v2474 = vunpack.c.h.b16 %v168
    %v2475 = vunpack.c.l.b16 %v169
    %v2476 = vunpack.c.h.b16 %v169
    %v2477 = vunpack.c.l.b16 %v170
    %v2478 = vunpack.c.h.b16 %v170
    %v2479 = vunpack.c.l.b16 %v171
    %v2480 = vunpack.c.h.b16 %v171
    %v2481 = vunpack.c.l.b16 %v172
    %v2482 = vunpack.c.h.b16 %v172
    %v2483 = vunpack.c.l.b16 %v173
    %v2484 = vunpack.c.h.b16 %v173
    %v2485 = vunpack.c.l.b16 %v174
    %v2486 = vunpack.c.h.b16 %v174
    %v2487 = vunpack.c.l.b16 %v175
    %v2488 = vunpack.c.h.b16 %v175
    %v2489 = vunpack.c.l.b16 %v176
    %v2490 = vunpack.c.h.b16 %v176
    %v2491 = vunpack.c.l.b16 %v177
    %v2492 = vunpack.c.h.b16 %v177
    %v2493 = vunpack.c.l.b16 %v178
    %v2494 = vunpack.c.h.b16 %v178
    %v2495 = vunpack.c.l.b16 %v179
    %v2496 = vunpack.c.h.b16 %v179
    %v2497 = vunpack.c.l.b16 %v180
    %v2498 = vunpack.c.h.b16 %v180
    %v2499 = vunpack.c.l.b16 %v181
    %v2500 = vunpack.c.h.b16 %v181
    %v2501 = vunpack.c.l.b16 %v182
    %v2502 = vunpack.c.h.b16 %v182
    %v2503 = vunpack.c.l.b16 %v183
    %v2504 = vunpack.c.h.b16 %v183
    %v2505 = vunpack.c.l.b16 %v184
    %v2506 = vunpack.c.h.b16 %v184
    %v2507 = vunpack.c.l.b16 %v185
    %v2508 = vunpack.c.h.b16 %v185
    %v2509 = vunpack.c.l.b16 %v186
    %v2510 = vunpack.c.h.b16 %v186
    %v2511 = vunpack.c.l.b16 %v187
    %v2512 = vunpack.c.h.b16 %v187
    %v2513 = vunpack.c.l.b16 %v188
    %v2514 = vunpack.c.h.b16 %v188
    %v2515 = vunpack.c.l.b16 %v189
    %v2516 = vunpack.c.h.b16 %v189
    %v2517 = vunpack.c.l.b16 %v190
    %v2518 = vunpack.c.h.b16 %v190
    %v2519 = vunpack.c.l.b16 %v191
    %v2520 = vunpack.c.h.b16 %v191
    %v2521 = vunpack.c.l.b16 %v192
    %v2522 = vunpack.c.h.b16 %v192
    %v2523 = vunpack.c.l.b16 %v193
    %v2524 = vunpack.c.h.b16 %v193
    %v2525 = vunpack.c.l.b16 %v194
    %v2526 = vunpack.c.h.b16 %v194
    %v2527 = vunpack.c.l.b16 %v195
    %v2528 = vunpack.c.h.b16 %v195
    %v2529 = vunpack.c.l.b16 %v196
    %v2530 = vunpack.c.h.b16 %v196
    %v2531 = vunpack.c.l.b16 %v197
    %v2532 = vunpack.c.h.b16 %v197
    %v2533 = vunpack.c.l.b16 %v198
    %v2534 = vunpack.c.h.b16 %v198
    %v2535 = vunpack.c.l.b16 %v199
    %v2536 = vunpack.c.h.b16 %v199
    %v2537 = vunpack.c.l.b16 %v200
    %v2538 = vunpack.c.h.b16 %v200
    %v2539 = vunpack.c.l.b16 %v201
    %v2540 = vunpack.c.h.b16 %v201
    %v2541 = vunpack.c.l.b16 %v202
    %v2542 = vunpack.c.h.b16 %v202
    %v2543 = vunpack.c.l.b16 %v203
    %v2544 = vunpack.c.h.b16 %v203
    %v2545 = vunpack.c.l.b16 %v204
    %v2546 = vunpack.c.h.b16 %v204
    %v2547 = vunpack.c.l.b16 %v205
    %v2548 = vunpack.c.h.b16 %v205
    %v2549 = vunpack.c.l.b16 %v206
    %v2550 = vunpack.c.h.b16 %v206
    %v2551 = vunpack.c.l.b16 %v207
    %v2552 = vunpack.c.h.b16 %v207
    %v2553 = vunpack.c.l.b16 %v208
    %v2554 = vunpack.c.h.b16 %v208
    %v2555 = vunpack.c.l.b16 %v209
    %v2556 = vunpack.c.h.b16 %v209
    %v2557 = vunpack.c.l.b16 %v210
    %v2558 = vunpack.c.h.b16 %v210
    %v2559 = vunpack.c.l.b16 %v211
    %v2560 = vunpack.c.h.b16 %v211
    %v2561 = vunpack.c.l.b16 %v212
    %v2562 = vunpack.c.h.b16 %v212
    %v2563 = vunpack.c.l.b16 %v213
    %v2564 = vunpack.c.h.b16 %v213
    %v2565 = vunpack.c.l.b16 %v214
    %v2566 = vunpack.c.h.b16 %v214
    %v2567 = vunpack.c.l.b16 %v215
    %v2568 = vunpack.c.h.b16 %v215
    %v2569 = vunpack.c.l.b16 %v216
    %v2570 = vunpack.c.h.b16 %v216
    %v2571 = vunpack.c.l.b16 %v217
    %v2572 = vunpack.c.h.b16 %v217
    %v2573 = vunpack.c.l.b16 %v218
    %v2574 = vunpack.c.h.b16 %v218
    %v2575 = vunpack.c.l.b16 %v219
    %v2576 = vunpack.c.h.b16 %v219
    %v2577 = vunpack.c.l.b16 %v220
    %v2578 = vunpack.c.h.b16 %v220
    %v2579 = vunpack.c.l.b16 %v221
    %v2580 = vunpack.c.h.b16 %v221
    %v2581 = vunpack.c.l.b16 %v222
    %v2582 = vunpack.c.h.b16 %v222
    %v2583 = vunpack.c.l.b16 %v223
    %v2584 = vunpack.c.h.b16 %v223
    %v2585 = vunpack.c.l.b16 %v224
    %v2586 = vunpack.c.h.b16 %v224
    %v2587 = vunpack.c.l.b16 %v225
    %v2588 = vunpack.c.h.b16 %v225
    %v2589 = vunpack.c.l.b16 %v226
    %v2590 = vunpack.c.h.b16 %v226
    %v2591 = vunpack.c.l.b16 %v227
    %v2592 = vunpack.c.h.b16 %v227
    %v2593 = vunpack.c.l.b16 %v228
    %v2594 = vunpack.c.h.b16 %v228
    %v2595 = vunpack.c.l.b16 %v229
    %v2596 = vunpack.c.h.b16 %v229
    %v2597 = vunpack.c.l.b16 %v230
    %v2598 = vunpack.c.h.b16 %v230
    %v2599 = vunpack.c.l.b16 %v231
    %v2600 = vunpack.c.h.b16 %v231
    %v2601 = vunpack.c.l.b16 %v232
    %v2602 = vunpack.c.h.b16 %v232
    %v2603 = vunpack.c.l.b16 %v233
    %v2604 = vunpack.c.h.b16 %v233
    %v2605 = vunpack.c.l.b16 %v234
    %v2606 = vunpack.c.h.b16 %v234
    %v2607 = vunpack.c.l.b16 %v235
    %v2608 = vunpack.c.h.b16 %v235
    %v2609 = vunpack.c.l.b16 %v236
    %v2610 = vunpack.c.h.b16 %v236
    %v2611 = vunpack.c.l.b16 %v237
    %v2612 = vunpack.c.h.b16 %v237
    %v2613 = vunpack.c.l.b16 %v238
    %v2614 = vunpack.c.h.b16 %v238
    %v2615 = vunpack.c.l.b16 %v239
    %v2616 = vunpack.c.h.b16 %v239
    %v2617 = vunpack.c.l.b16 %v240
    %v2618 = vunpack.c.h.b16 %v240
    %v2619 = vunpack.c.l.b16 %v241
    %v2620 = vunpack.c.h.b16 %v241
    %v2621 = vunpack.c.l.b16 %v242
    %v2622 = vunpack.c.h.b16 %v242
    %v2623 = vunpack.c.l.b16 %v243
    %v2624 = vunpack.c.h.b16 %v243
    %v2625 = vunpack.c.l.b16 %v244
    %v2626 = vunpack.c.h.b16 %v244
    %v2627 = vunpack.c.l.b16 %v245
    %v2628 = vunpack.c.h.b16 %v245
    %v2629 = vunpack.c.l.b16 %v246
    %v2630 = vunpack.c.h.b16 %v246
    %v2631 = vunpack.c.l.b16 %v247
    %v2632 = vunpack.c.h.b16 %v247
    %v2633 = vunpack.c.l.b16 %v248
    %v2634 = vunpack.c.h.b16 %v248
    %v2635 = vunpack.c.l.b16 %v249
    %v2636 = vunpack.c.h.b16 %v249
    %v2637 = vunpack.c.l.b16 %v250
    %v2638 = vunpack.c.h.b16 %v250
    %v2639 = vunpack.c.l.b16 %v251
    %v2640 = vunpack.c.h.b16 %v251
    %v2641 = vunpack.c.l.b16 %v252
    %v2642 = vunpack.c.h.b16 %v252
    %v2643 = vunpack.c.l.b16 %v253
    %v2644 = vunpack.c.h.b16 %v253
    %v2645 = vunpack.c.l.b16 %v254
    %v2646 = vunpack.c.h.b16 %v254
    %v2647 = vunpack.c.l.b16 %v255
    %v2648 = vunpack.c.h.b16 %v255
    %v2649 = vunpack.c.l.b16 %v256
    %v2650 = vunpack.c.h.b16 %v256
    %v2651 = vunpack.c.l.b16 %v257
    %v2652 = vunpack.c.h.b16 %v257
    %v2653 = vunpack.c.l.b16 %v258
    %v2654 = vunpack.c.h.b16 %v258
    %v2655 = vunpack.c.l.b16 %v259
    %v2656 = vunpack.c.h.b16 %v259
    %v2657 = vunpack.c.l.b16 %v260
    %v2658 = vunpack.c.h.b16 %v260
    %v2659 = vunpack.c.l.b16 %v261
    %v2660 = vunpack.c.h.b16 %v261
    %v2661 = vunpack.c.l.b16 %v262
    %v2662 = vunpack.c.h.b16 %v262
    %v2663 = vunpack.c.l.b16 %v263
    %v2664 = vunpack.c.h.b16 %v263
    %v2665 = vunpack.c.l.b16 %v264
    %v2666 = vunpack.c.h.b16 %v264
    %v2667 = vunpack.c.l.b16 %v265
    %v2668 = vunpack.c.h.b16 %v265
    %v2669 = vunpack.c.l.b16 %v266
    %v2670 = vunpack.c.h.b16 %v266
    %v2671 = vunpack.c.l.b16 %v267
    %v2672 = vunpack.c.h.b16 %v267
    %v2673 = vunpack.c.l.b16 %v268
    %v2674 = vunpack.c.h.b16 %v268
    %v2675 = vunpack.c.l.b16 %v269
    %v2676 = vunpack.c.h.b16 %v269
    %v2677 = vunpack.c.l.b16 %v270
    %v2678 = vunpack.c.h.b16 %v270
    %v2679 = vunpack.c.l.b16 %v271
    %v2680 = vunpack.c.h.b16 %v271
    %v2681 = vunpack.c.l.b16 %v272
    %v2682 = vunpack.c.h.b16 %v272
    %v2683 = vunpack.c.l.b16 %v273
    %v2684 = vunpack.c.h.b16 %v273
    %v2685 = vunpack.c.l.b16 %v274
    %v2686 = vunpack.c.h.b16 %v274
    %v2687 = vunpack.c.l.b16 %v275
    %v2688 = vunpack.c.h.b16 %v275
    %v2689 = vunpack.c.l.b16 %v276
    %v2690 = vunpack.c.h.b16 %v276
    %v2691 = vunpack.c.l.b16 %v277
    %v2692 = vunpack.c.h.b16 %v277
    %v2693 = vunpack.c.l.b16 %v278
    %v2694 = vunpack.c.h.b16 %v278
    %v2695 = vunpack.c.l.b16 %v279
    %v2696 = vunpack.c.h.b16 %v279
    %v2697 = vunpack.c.l.b16 %v280
    %v2698 = vunpack.c.h.b16 %v280
    %v2699 = vunpack.c.l.b16 %v281
    %v2700 = vunpack.c.h.b16 %v281
    %v2701 = vunpack.c.l.b16 %v282
    %v2702 = vunpack.c.h.b16 %v282
    %v2703 = vunpack.c.l.b16 %v283
    %v2704 = vunpack.c.h.b16 %v283
    %v2705 = vunpack.c.l.b16 %v284
    %v2706 = vunpack.c.h.b16 %v284
    %v2707 = vunpack.c.l.b16 %v285
    %v2708 = vunpack.c.h.b16 %v285
    %v2709 = vunpack.c.l.b16 %v286
    %v2710 = vunpack.c.h.b16 %v286
    %v2711 = vunpack.c.l.b16 %v287
    %v2712 = vunpack.c.h.b16 %v287
    %v2713 = vunpack.c.l.b16 %v288
    %v2714 = vunpack.c.h.b16 %v288
    %v2715 = vunpack.c.l.b16 %v289
    %v2716 = vunpack.c.h.b16 %v289
    %v2717 = vunpack.c.l.b16 %v290
    %v2718 = vunpack.c.h.b16 %v290
    %v2719 = vunpack.c.l.b16 %v291
    %v2720 = vunpack.c.h.b16 %v291
    %v2721 = vunpack.c.l.b16 %v292
    %v2722 = vunpack.c.h.b16 %v292
    %v2723 = vunpack.c.l.b16 %v293
    %v2724 = vunpack.c.h.b16 %v293
    %v2725 = vunpack.c.l.b16 %v294
    %v2726 = vunpack.c.h.b16 %v294
    %v2727 = vunpack.c.l.b16 %v295
    %v2728 = vunpack.c.h.b16 %v295
    %v2729 = vunpack.c.l.b16 %v296
    %v2730 = vunpack.c.h.b16 %v296
    %v2731 = vunpack.c.l.b16 %v297
    %v2732 = vunpack.c.h.b16 %v297
    %v2733 = vunpack.c.l.b16 %v298
    %v2734 = vunpack.c.h.b16 %v298
    %v2735 = vunpack.c.l.b16 %v299
    %v2736 = vunpack.c.h.b16 %v299
    %v2737 = vunpack.c.l.b16 %v300
    %v2738 = vunpack.c.h.b16 %v300
    %v2739 = vunpack.c.l.b16 %v301
    %v2740 = vunpack.c.h.b16 %v301
    %v2741 = vunpack.c.l.b16 %v302
    %v2742 = vunpack.c.h.b16 %v302
    %v2743 = vunpack.c.l.b16 %v303
    %v2744 = vunpack.c.h.b16 %v303
    %v2745 = vunpack.c.l.b16 %v304
    %v2746 = vunpack.c.h.b16 %v304
    %v2747 = vunpack.c.l.b16 %v305
    %v2748 = vunpack.c.h.b16 %v305
    %v2749 = vunpack.c.l.b16 %v306
    %v2750 = vunpack.c.h.b16 %v306
    %v2751 = vunpack.c.l.b16 %v307
    %v2752 = vunpack.c.h.b16 %v307
    %v2753 = vunpack.c.l.b16 %v308
    %v2754 = vunpack.c.h.b16 %v308
    %v2755 = vunpack.c.l.b16 %v309
    %v2756 = vunpack.c.h.b16 %v309
    %v2757 = vunpack.c.l.b16 %v310
    %v2758 = vunpack.c.h.b16 %v310
    %v2759 = vunpack.c.l.b16 %v311
    %v2760 = vunpack.c.h.b16 %v311
    %v2761 = vunpack.c.l.b16 %v312
    %v2762 = vunpack.c.h.b16 %v312
    %v2763 = vunpack.c.l.b16 %v313
    %v2764 = vunpack.c.h.b16 %v313
    %v2765 = vunpack.c.l.b16 %v314
    %v2766 = vunpack.c.h.b16 %v314
    %v2767 = vunpack.c.l.b16 %v315
    %v2768 = vunpack.c.h.b16 %v315
    %v2769 = vunpack.c.l.b16 %v316
    %v2770 = vunpack.c.h.b16 %v316
    %v2771 = vunpack.c.l.b16 %v317
    %v2772 = vunpack.c.h.b16 %v317
    %v2773 = vunpack.c.l.b16 %v318
    %v2774 = vunpack.c.h.b16 %v318
    %v2775 = vunpack.c.l.b16 %v319
    %v2776 = vunpack.c.h.b16 %v319
    %v2777 = vunpack.c.l.b16 %v320
    %v2778 = vunpack.c.h.b16 %v320
    %v2779 = vunpack.c.l.b16 %v321
    %v2780 = vunpack.c.h.b16 %v321
    %v2781 = vunpack.c.l.b16 %v322
    %v2782 = vunpack.c.h.b16 %v322
    %v2783 = vunpack.c.l.b16 %v323
    %v2784 = vunpack.c.h.b16 %v323
    %v2785 = vunpack.c.l.b16 %v324
    %v2786 = vunpack.c.h.b16 %v324
    %v2787 = vunpack.c.l.b16 %v325
    %v2788 = vunpack.c.h.b16 %v325
    %v2789 = vunpack.c.l.b16 %v326
    %v2790 = vunpack.c.h.b16 %v326
    %v2791 = vunpack.c.l.b16 %v327
    %v2792 = vunpack.c.h.b16 %v327
    %v2793 = vunpack.c.l.b16 %v328
    %v2794 = vunpack.c.h.b16 %v328
    %v2795 = vunpack.c.l.b16 %v329
    %v2796 = vunpack.c.h.b16 %v329
    %v2797 = vunpack.c.l.b16 %v330
    %v2798 = vunpack.c.h.b16 %v330
    %v2799 = vunpack.c.l.b16 %v331
    %v2800 = vunpack.c.h.b16 %v331
    %v2801 = vunpack.c.l.b16 %v332
    %v2802 = vunpack.c.h.b16 %v332
    %v2803 = vunpack.c.l.b16 %v333
    %v2804 = vunpack.c.h.b16 %v333
    %v2805 = vunpack.c.l.b16 %v334
    %v2806 = vunpack.c.h.b16 %v334
    %v2807 = vunpack.c.l.b16 %v335
    %v2808 = vunpack.c.h.b16 %v335
    %v2809 = vunpack.c.l.b16 %v336
    %v2810 = vunpack.c.h.b16 %v336
    %v2811 = vunpack.c.l.b16 %v337
    %v2812 = vunpack.c.h.b16 %v337
    %v2813 = vunpack.c.l.b16 %v338
    %v2814 = vunpack.c.h.b16 %v338
    %v2815 = vunpack.c.l.b16 %v339
    %v2816 = vunpack.c.h.b16 %v339
    %v2817 = vunpack.c.l.b16 %v340
    %v2818 = vunpack.c.h.b16 %v340
    %v2819 = vunpack.c.l.b16 %v341
    %v2820 = vunpack.c.h.b16 %v341
    %v2821 = vunpack.c.l.b16 %v342
    %v2822 = vunpack.c.h.b16 %v342
    %v2823 = vunpack.c.l.b16 %v343
    %v2824 = vunpack.c.h.b16 %v343
    %v2825 = vunpack.c.l.b16 %v344
    %v2826 = vunpack.c.h.b16 %v344
    %v2827 = vunpack.c.l.b16 %v345
    %v2828 = vunpack.c.h.b16 %v345
    %v2829 = vunpack.c.l.b16 %v346
    %v2830 = vunpack.c.h.b16 %v346
    %v2831 = vunpack.c.l.b16 %v347
    %v2832 = vunpack.c.h.b16 %v347
    %v2833 = vunpack.c.l.b16 %v348
    %v2834 = vunpack.c.h.b16 %v348
    %v2835 = vunpack.c.l.b16 %v349
    %v2836 = vunpack.c.h.b16 %v349
    %v2837 = vunpack.c.l.b16 %v350
    %v2838 = vunpack.c.h.b16 %v350
    %v2839 = vunpack.c.l.b16 %v351
    %v2840 = vunpack.c.h.b16 %v351
    %v2841 = vunpack.c.l.b16 %v352
    %v2842 = vunpack.c.h.b16 %v352
    %v2843 = vunpack.c.l.b16 %v353
    %v2844 = vunpack.c.h.b16 %v353
    %v2845 = vunpack.c.l.b16 %v354
    %v2846 = vunpack.c.h.b16 %v354
    %v2847 = vunpack.c.l.b16 %v355
    %v2848 = vunpack.c.h.b16 %v355
    %v2849 = vunpack.c.l.b16 %v356
    %v2850 = vunpack.c.h.b16 %v356
    %v2851 = vunpack.c.l.b16 %v357
    %v2852 = vunpack.c.h.b16 %v357
    %v2853 = vunpack.c.l.b16 %v358
    %v2854 = vunpack.c.h.b16 %v358
    %v2855 = vunpack.c.l.b16 %v359
    %v2856 = vunpack.c.h.b16 %v359
    %v2857 = vunpack.c.l.b16 %v360
    %v2858 = vunpack.c.h.b16 %v360
    %v2859 = vunpack.c.l.b16 %v361
    %v2860 = vunpack.c.h.b16 %v361
    %v2861 = vunpack.c.l.b16 %v362
    %v2862 = vunpack.c.h.b16 %v362
    %v2863 = vunpack.c.l.b16 %v363
    %v2864 = vunpack.c.h.b16 %v363
    %v2865 = vunpack.c.l.b16 %v364
    %v2866 = vunpack.c.h.b16 %v364
    %v2867 = vunpack.c.l.b16 %v365
    %v2868 = vunpack.c.h.b16 %v365
    %v2869 = vunpack.c.l.b16 %v366
    %v2870 = vunpack.c.h.b16 %v366
    %v2871 = vunpack.c.l.b16 %v367
    %v2872 = vunpack.c.h.b16 %v367
    %v2873 = vunpack.c.l.b16 %v368
    %v2874 = vunpack.c.h.b16 %v368
    %v2875 = vunpack.c.l.b16 %v369
    %v2876 = vunpack.c.h.b16 %v369
    %v2877 = vunpack.c.l.b16 %v370
    %v2878 = vunpack.c.h.b16 %v370
    %v2879 = vunpack.c.l.b16 %v371
    %v2880 = vunpack.c.h.b16 %v371
    %v2881 = vunpack.c.l.b16 %v372
    %v2882 = vunpack.c.h.b16 %v372
    %v2883 = vunpack.c.l.b16 %v373
    %v2884 = vunpack.c.h.b16 %v373
    %v2885 = vunpack.c.l.b16 %v374
    %v2886 = vunpack.c.h.b16 %v374
    %v2887 = vunpack.c.l.b16 %v375
    %v2888 = vunpack.c.h.b16 %v375
    %v2889 = vunpack.c.l.b16 %v376
    %v2890 = vunpack.c.h.b16 %v376
    %v2891 = vunpack.c.l.b16 %v377
    %v2892 = vunpack.c.h.b16 %v377
    %v2893 = vunpack.c.l.b16 %v378
    %v2894 = vunpack.c.h.b16 %v378
    %v2895 = vunpack.c.l.b16 %v379
    %v2896 = vunpack.c.h.b16 %v379
    %v2897 = vunpack.c.l.b16 %v380
    %v2898 = vunpack.c.h.b16 %v380
    %v2899 = vunpack.c.l.b16 %v381
    %v2900 = vunpack.c.h.b16 %v381
    %v2901 = vunpack.c.l.b16 %v382
    %v2902 = vunpack.c.h.b16 %v382
    %v2903 = vunpack.c.l.b16 %v383
    %v2904 = vunpack.c.h.b16 %v383
    %v2905 = vunpack.c.l.b16 %v384
    %v2906 = vunpack.c.h.b16 %v384
    %v2907 = vunpack.c.l.b16 %v385
    %v2908 = vunpack.c.h.b16 %v385
    %v2909 = vunpack.c.l.b16 %v386
    %v2910 = vunpack.c.h.b16 %v386
    %v2911 = vunpack.c.l.b16 %v387
    %v2912 = vunpack.c.h.b16 %v387
    %v2913 = vunpack.c.l.b16 %v388
    %v2914 = vunpack.c.h.b16 %v388
    %v2915 = vunpack.c.l.b16 %v389
    %v2916 = vunpack.c.h.b16 %v389
    %v2917 = vunpack.c.l.b16 %v390
    %v2918 = vunpack.c.h.b16 %v390
    %v2919 = vunpack.c.l.b16 %v391
    %v2920 = vunpack.c.h.b16 %v391
    %v2921 = vunpack.c.l.b16 %v392
    %v2922 = vunpack.c.h.b16 %v392
    %v2923 = vunpack.c.l.b16 %v393
    %v2924 = vunpack.c.h.b16 %v393
    %v2925 = vunpack.c.l.b16 %v394
    %v2926 = vunpack.c.h.b16 %v394
    %v2927 = vunpack.c.l.b16 %v395
    %v2928 = vunpack.c.h.b16 %v395
    %v2929 = vunpack.c.l.b16 %v396
    %v2930 = vunpack.c.h.b16 %v396
    %v2931 = vunpack.c.l.b16 %v397
    %v2932 = vunpack.c.h.b16 %v397
    %v2933 = vunpack.c.l.b16 %v398
    %v2934 = vunpack.c.h.b16 %v398
    %v2935 = vunpack.c.l.b16 %v399
    %v2936 = vunpack.c.h.b16 %v399
    %v2937 = vunpack.c.l.b16 %v400
    %v2938 = vunpack.c.h.b16 %v400
    %v2939 = vunpack.c.l.b16 %v401
    %v2940 = vunpack.c.h.b16 %v401
    %v2941 = vunpack.c.l.b16 %v402
    %v2942 = vunpack.c.h.b16 %v402
    %v2943 = vunpack.c.l.b16 %v403
    %v2944 = vunpack.c.h.b16 %v403
    %v2945 = vunpack.c.l.b16 %v404
    %v2946 = vunpack.c.h.b16 %v404
    %v2947 = vunpack.c.l.b16 %v405
    %v2948 = vunpack.c.h.b16 %v405
    %v2949 = vunpack.c.l.b16 %v406
    %v2950 = vunpack.c.h.b16 %v406
    %v2951 = vunpack.c.l.b16 %v407
    %v2952 = vunpack.c.h.b16 %v407
    %v2953 = vunpack.c.l.b16 %v408
    %v2954 = vunpack.c.h.b16 %v408
    %v2955 = vunpack.c.l.b16 %v409
    %v2956 = vunpack.c.h.b16 %v409
    %v2957 = vunpack.c.l.b16 %v410
    %v2958 = vunpack.c.h.b16 %v410
    %v2959 = vunpack.c.l.b16 %v411
    %v2960 = vunpack.c.h.b16 %v411
    %v2961 = vunpack.c.l.b16 %v412
    %v2962 = vunpack.c.h.b16 %v412
    %v2963 = vunpack.c.l.b16 %v413
    %v2964 = vunpack.c.h.b16 %v413
    %v2965 = vunpack.c.l.b16 %v414
    %v2966 = vunpack.c.h.b16 %v414
    %v2967 = vunpack.c.l.b16 %v415
    %v2968 = vunpack.c.h.b16 %v415
    %v2969 = vunpack.c.l.b16 %v416
    %v2970 = vunpack.c.h.b16 %v416
    %v2971 = vunpack.c.l.b16 %v417
    %v2972 = vunpack.c.h.b16 %v417
    %v2973 = vunpack.c.l.b16 %v418
    %v2974 = vunpack.c.h.b16 %v418
    %v2975 = vunpack.c.l.b16 %v419
    %v2976 = vunpack.c.h.b16 %v419
    %v2977 = vunpack.c.l.b16 %v420
    %v2978 = vunpack.c.h.b16 %v420
    %v2979 = vunpack.c.l.b16 %v421
    %v2980 = vunpack.c.h.b16 %v421
    %v2981 = vunpack.c.l.b16 %v422
    %v2982 = vunpack.c.h.b16 %v422
    %v2983 = vunpack.c.l.b16 %v423
    %v2984 = vunpack.c.h.b16 %v423
    %v2985 = vunpack.c.l.b16 %v424
    %v2986 = vunpack.c.h.b16 %v424
    %v2987 = vunpack.c.l.b16 %v425
    %v2988 = vunpack.c.h.b16 %v425
    %v2989 = vunpack.c.l.b16 %v426
    %v2990 = vunpack.c.h.b16 %v426
    %v2991 = vunpack.c.l.b16 %v427
    %v2992 = vunpack.c.h.b16 %v427
    %v2993 = vunpack.c.l.b16 %v428
    %v2994 = vunpack.c.h.b16 %v428
    %v2995 = vunpack.c.l.b16 %v429
    %v2996 = vunpack.c.h.b16 %v429
    %v2997 = vunpack.c.l.b16 %v430
    %v2998 = vunpack.c.h.b16 %v430
    %v2999 = vunpack.c.l.b16 %v431
    %v3000 = vunpack.c.h.b16 %v431
    %v3001 = vunpack.c.l.b16 %v432
    %v3002 = vunpack.c.h.b16 %v432
    %v3003 = vunpack.c.l.b16 %v433
    %v3004 = vunpack.c.h.b16 %v433
    %v3005 = vunpack.c.l.b16 %v434
    %v3006 = vunpack.c.h.b16 %v434
    %v3007 = vunpack.c.l.b16 %v435
    %v3008 = vunpack.c.h.b16 %v435
    %v3009 = vunpack.c.l.b16 %v436
    %v3010 = vunpack.c.h.b16 %v436
    %v3011 = vunpack.c.l.b16 %v437
    %v3012 = vunpack.c.h.b16 %v437
    %v3013 = vunpack.c.l.b16 %v438
    %v3014 = vunpack.c.h.b16 %v438
    %v3015 = vunpack.c.l.b16 %v439
    %v3016 = vunpack.c.h.b16 %v439
    %v3017 = vunpack.c.l.b16 %v440
    %v3018 = vunpack.c.h.b16 %v440
    %v3019 = vunpack.c.l.b16 %v441
    %v3020 = vunpack.c.h.b16 %v441
    %v3021 = vunpack.c.l.b16 %v442
    %v3022 = vunpack.c.h.b16 %v442
    %v3023 = vunpack.c.l.b16 %v443
    %v3024 = vunpack.c.h.b16 %v443
    %v3025 = vunpack.c.l.b16 %v444
    %v3026 = vunpack.c.h.b16 %v444
    %v3027 = vunpack.c.l.b16 %v445
    %v3028 = vunpack.c.h.b16 %v445
    %v3029 = vunpack.c.l.b16 %v446
    %v3030 = vunpack.c.h.b16 %v446
    %v3031 = vunpack.c.l.b16 %v447
    %v3032 = vunpack.c.h.b16 %v447
    %v3033 = vunpack.c.l.b16 %v448
    %v3034 = vunpack.c.h.b16 %v448
    %v3035 = vunpack.c.l.b16 %v449
    %v3036 = vunpack.c.h.b16 %v449
    %v3037 = vunpack.c.l.b16 %v450
    %v3038 = vunpack.c.h.b16 %v450
    %v3039 = vunpack.c.l.b16 %v451
    %v3040 = vunpack.c.h.b16 %v451
    %v3041 = vunpack.c.l.b16 %v452
    %v3042 = vunpack.c.h.b16 %v452
    %v3043 = vunpack.c.l.b16 %v453
    %v3044 = vunpack.c.h.b16 %v453
    %v3045 = vunpack.c.l.b16 %v454
    %v3046 = vunpack.c.h.b16 %v454
    %v3047 = vunpack.c.l.b16 %v455
    %v3048 = vunpack.c.h.b16 %v455
    %v3049 = vunpack.c.l.b16 %v456
    %v3050 = vunpack.c.h.b16 %v456
    %v3051 = vunpack.c.l.b16 %v457
    %v3052 = vunpack.c.h.b16 %v457
    %v3053 = vunpack.c.l.b16 %v458
    %v3054 = vunpack.c.h.b16 %v458
    %v3055 = vunpack.c.l.b16 %v459
    %v3056 = vunpack.c.h.b16 %v459
    %v3057 = vunpack.c.l.b16 %v460
    %v3058 = vunpack.c.h.b16 %v460
    %v3059 = vunpack.c.l.b16 %v461
    %v3060 = vunpack.c.h.b16 %v461
    %v3061 = vunpack.c.l.b16 %v462
    %v3062 = vunpack.c.h.b16 %v462
    %v3063 = vunpack.c.l.b16 %v463
    %v3064 = vunpack.c.h.b16 %v463
    %v3065 = vunpack.c.l.b16 %v464
    %v3066 = vunpack.c.h.b16 %v464
    %v3067 = vunpack.c.l.b16 %v465
    %v3068 = vunpack.c.h.b16 %v465
    %v3069 = vunpack.c.l.b16 %v466
    %v3070 = vunpack.c.h.b16 %v466
    %v3071 = vunpack.c.l.b16 %v467
    %v3072 = vunpack.c.h.b16 %v467
    %v3073 = vunpack.c.l.b16 %v468
    %v3074 = vunpack.c.h.b16 %v468
    %v3075 = vunpack.c.l.b16 %v469
    %v3076 = vunpack.c.h.b16 %v469
    %v3077 = vunpack.c.l.b16 %v470
    %v3078 = vunpack.c.h.b16 %v470
    %v3079 = vunpack.c.l.b16 %v471
    %v3080 = vunpack.c.h.b16 %v471
    %v3081 = vunpack.c.l.b16 %v472
    %v3082 = vunpack.c.h.b16 %v472
    %v3083 = vunpack.c.l.b16 %v473
    %v3084 = vunpack.c.h.b16 %v473
    %v3085 = vunpack.c.l.b16 %v474
    %v3086 = vunpack.c.h.b16 %v474
    %v3087 = vunpack.c.l.b16 %v475
    %v3088 = vunpack.c.h.b16 %v475
    %v3089 = vunpack.c.l.b16 %v476
    %v3090 = vunpack.c.h.b16 %v476
    %v3091 = vunpack.c.l.b16 %v477
    %v3092 = vunpack.c.h.b16 %v477
    %v3093 = vunpack.c.l.b16 %v478
    %v3094 = vunpack.c.h.b16 %v478
    %v3095 = vunpack.c.l.b16 %v479
    %v3096 = vunpack.c.h.b16 %v479
    %v3097 = vunpack.c.l.b16 %v480
    %v3098 = vunpack.c.h.b16 %v480
    %v3099 = vunpack.c.l.b16 %v481
    %v3100 = vunpack.c.h.b16 %v481
    %v3101 = vunpack.c.l.b16 %v482
    %v3102 = vunpack.c.h.b16 %v482
    %v3103 = vunpack.c.l.b16 %v483
    %v3104 = vunpack.c.h.b16 %v483
    %v3105 = vunpack.c.l.b16 %v484
    %v3106 = vunpack.c.h.b16 %v484
    %v3107 = vunpack.c.l.b16 %v485
    %v3108 = vunpack.c.h.b16 %v485
    %v3109 = vunpack.c.l.b16 %v486
    %v3110 = vunpack.c.h.b16 %v486
    %v3111 = vunpack.c.l.b16 %v487
    %v3112 = vunpack.c.h.b16 %v487
    %v3113 = vunpack.c.l.b16 %v488
    %v3114 = vunpack.c.h.b16 %v488
    %v3115 = vunpack.c.l.b16 %v489
    %v3116 = vunpack.c.h.b16 %v489
    %v3117 = vunpack.c.l.b16 %v490
    %v3118 = vunpack.c.h.b16 %v490
    %v3119 = vunpack.c.l.b16 %v491
    %v3120 = vunpack.c.h.b16 %v491
    %v3121 = vunpack.c.l.b16 %v492
    %v3122 = vunpack.c.h.b16 %v492
    %v3123 = vunpack.c.l.b16 %v493
    %v3124 = vunpack.c.h.b16 %v493
    %v3125 = vunpack.c.l.b16 %v494
    %v3126 = vunpack.c.h.b16 %v494
    %v3127 = vunpack.c.l.b16 %v495
    %v3128 = vunpack.c.h.b16 %v495
    %v3129 = vunpack.c.l.b16 %v496
    %v3130 = vunpack.c.h.b16 %v496
    %v3131 = vunpack.c.l.b16 %v497
    %v3132 = vunpack.c.h.b16 %v497
    %v3133 = vunpack.c.l.b16 %v498
    %v3134 = vunpack.c.h.b16 %v498
    %v3135 = vunpack.c.l.b16 %v499
    %v3136 = vunpack.c.h.b16 %v499
    %v3137 = vunpack.c.l.b16 %v500
    %v3138 = vunpack.c.h.b16 %v500
    %v3139 = vunpack.c.l.b16 %v501
    %v3140 = vunpack.c.h.b16 %v501
    %v3141 = vunpack.c.l.b16 %v502
    %v3142 = vunpack.c.h.b16 %v502
    %v3143 = vunpack.c.l.b16 %v503
    %v3144 = vunpack.c.h.b16 %v503
    %v3145 = vunpack.c.l.b16 %v504
    %v3146 = vunpack.c.h.b16 %v504
    %v3147 = vunpack.c.l.b16 %v505
    %v3148 = vunpack.c.h.b16 %v505
    %v3149 = vunpack.c.l.b16 %v506
    %v3150 = vunpack.c.h.b16 %v506
    %v3151 = vunpack.c.l.b16 %v507
    %v3152 = vunpack.c.h.b16 %v507
    %v3153 = vunpack.c.l.b16 %v508
    %v3154 = vunpack.c.h.b16 %v508
    %v3155 = vunpack.c.l.b16 %v509
    %v3156 = vunpack.c.h.b16 %v509
    %v3157 = vunpack.c.l.b16 %v510
    %v3158 = vunpack.c.h.b16 %v510
    %v3159 = vunpack.c.l.b16 %v511
    %v3160 = vunpack.c.h.b16 %v511
    %v3161 = vunpack.c.l.b16 %v512
    %v3162 = vunpack.c.h.b16 %v512
    %v3163 = vunpack.c.l.b16 %v513
    %v3164 = vunpack.c.h.b16 %v513
    %v3165 = vunpack.c.l.b16 %v514
    %v3166 = vunpack.c.h.b16 %v514
    %v3167 = vunpack.c.l.b16 %v515
    %v3168 = vunpack.c.h.b16 %v515
    %v3169 = vunpack.c.l.b16 %v516
    %v3170 = vunpack.c.h.b16 %v516
    %v3171 = vunpack.c.l.b16 %v517
    %v3172 = vunpack.c.h.b16 %v517
    %v3173 = vunpack.c.l.b16 %v518
    %v3174 = vunpack.c.h.b16 %v518
    %v3175 = vunpack.c.l.b16 %v519
    %v3176 = vunpack.c.h.b16 %v519
    %v3177 = vunpack.c.l.b16 %v520
    %v3178 = vunpack.c.h.b16 %v520
    %v3179 = vunpack.c.l.b16 %v521
    %v3180 = vunpack.c.h.b16 %v521
    %v3181 = vunpack.c.l.b16 %v522
    %v3182 = vunpack.c.h.b16 %v522
    %v3183 = vunpack.c.l.b16 %v523
    %v3184 = vunpack.c.h.b16 %v523
    %v3185 = vunpack.c.l.b16 %v524
    %v3186 = vunpack.c.h.b16 %v524
    %v3187 = vunpack.c.l.b16 %v525
    %v3188 = vunpack.c.h.b16 %v525
    %v3189 = vunpack.c.l.b16 %v526
    %v3190 = vunpack.c.h.b16 %v526
    %v3191 = vunpack.c.l.b16 %v527
    %v3192 = vunpack.c.h.b16 %v527
    %v3193 = vunpack.c.l.b16 %v528
    %v3194 = vunpack.c.h.b16 %v528
    %v3195 = vunpack.c.l.b16 %v529
    %v3196 = vunpack.c.h.b16 %v529
    %v3197 = vunpack.c.l.b16 %v530
    %v3198 = vunpack.c.h.b16 %v530
    %v3199 = vunpack.c.l.b16 %v531
    %v3200 = vunpack.c.h.b16 %v531
    %v3201 = vunpack.c.l.b16 %v532
    %v3202 = vunpack.c.h.b16 %v532
    %v3203 = vunpack.c.l.b16 %v533
    %v3204 = vunpack.c.h.b16 %v533
    %v3205 = vunpack.c.l.b16 %v534
    %v3206 = vunpack.c.h.b16 %v534
    %v3207 = vunpack.c.l.b16 %v535
    %v3208 = vunpack.c.h.b16 %v535
    %v3209 = vunpack.c.l.b16 %v536
    %v3210 = vunpack.c.h.b16 %v536
    %v3211 = vunpack.c.l.b16 %v537
    %v3212 = vunpack.c.h.b16 %v537
    %v3213 = vunpack.c.l.b16 %v538
    %v3214 = vunpack.c.h.b16 %v538
    %v3215 = vunpack.c.l.b16 %v539
    %v3216 = vunpack.c.h.b16 %v539
    %v3217 = vunpack.c.l.b16 %v540
    %v3218 = vunpack.c.h.b16 %v540
    %v3219 = vunpack.c.l.b16 %v541
    %v3220 = vunpack.c.h.b16 %v541
    %v3221 = vunpack.c.l.b16 %v542
    %v3222 = vunpack.c.h.b16 %v542
    %v3223 = vunpack.c.l.b16 %v543
    %v3224 = vunpack.c.h.b16 %v543
    %v3225 = vunpack.c.l.b16 %v544
    %v3226 = vunpack.c.h.b16 %v544
    %v3227 = vunpack.c.l.b16 %v545
    %v3228 = vunpack.c.h.b16 %v545
    %v3229 = vunpack.c.l.b16 %v546
    %v3230 = vunpack.c.h.b16 %v546
    %v3231 = vunpack.c.l.b16 %v547
    %v3232 = vunpack.c.h.b16 %v547
    %v3233 = vunpack.c.l.b16 %v548
    %v3234 = vunpack.c.h.b16 %v548
    %v3235 = vunpack.c.l.b16 %v549
    %v3236 = vunpack.c.h.b16 %v549
    %v3237 = vunpack.c.l.b16 %v550
    %v3238 = vunpack.c.h.b16 %v550
    %v3239 = vunpack.c.l.b16 %v551
    %v3240 = vunpack.c.h.b16 %v551
    %v3241 = vunpack.c.l.b16 %v552
    %v3242 = vunpack.c.h.b16 %v552
    %v3243 = vunpack.c.l.b16 %v553
    %v3244 = vunpack.c.h.b16 %v553
    %v3245 = vunpack.c.l.b16 %v554
    %v3246 = vunpack.c.h.b16 %v554
    %v3247 = vunpack.c.l.b16 %v555
    %v3248 = vunpack.c.h.b16 %v555
    %v3249 = vunpack.c.l.b16 %v556
    %v3250 = vunpack.c.h.b16 %v556
    %v3251 = vunpack.c.l.b16 %v557
    %v3252 = vunpack.c.h.b16 %v557
    %v3253 = vunpack.c.l.b16 %v558
    %v3254 = vunpack.c.h.b16 %v558
    %v3255 = vunpack.c.l.b16 %v559
    %v3256 = vunpack.c.h.b16 %v559
    %v3257 = vunpack.c.l.b16 %v560
    %v3258 = vunpack.c.h.b16 %v560
    %v3259 = vunpack.c.l.b16 %v561
    %v3260 = vunpack.c.h.b16 %v561
    %v3261 = vunpack.c.l.b16 %v562
    %v3262 = vunpack.c.h.b16 %v562
    %v3263 = vunpack.c.l.b16 %v563
    %v3264 = vunpack.c.h.b16 %v563
    %v3265 = vunpack.c.l.b16 %v564
    %v3266 = vunpack.c.h.b16 %v564
    %v3267 = vunpack.c.l.b16 %v565
    %v3268 = vunpack.c.h.b16 %v565
    %v3269 = vunpack.c.l.b16 %v566
    %v3270 = vunpack.c.h.b16 %v566
    %v3271 = vunpack.c.l.b16 %v567
    %v3272 = vunpack.c.h.b16 %v567
    %v3273 = vunpack.c.l.b16 %v568
    %v3274 = vunpack.c.h.b16 %v568
    %v3275 = vunpack.c.l.b16 %v569
    %v3276 = vunpack.c.h.b16 %v569
    %v3277 = vunpack.c.l.b16 %v570
    %v3278 = vunpack.c.h.b16 %v570
    %v3279 = vunpack.c.l.b16 %v571
    %v3280 = vunpack.c.h.b16 %v571
    %v3281 = vunpack.c.l.b16 %v572
    %v3282 = vunpack.c.h.b16 %v572
    %v3283 = vunpack.c.l.b16 %v573
    %v3284 = vunpack.c.h.b16 %v573
    %v3285 = vunpack.c.l.b16 %v574
    %v3286 = vunpack.c.h.b16 %v574
    %v3287 = vunpack.c.l.b16 %v575
    %v3288 = vunpack.c.h.b16 %v575
    %v3289 = vunpack.c.l.b16 %v576
    %v3290 = vunpack.c.h.b16 %v576
    %v3291 = vunpack.c.l.b16 %v577
    %v3292 = vunpack.c.h.b16 %v577
    %v3293 = vunpack.c.l.b16 %v578
    %v3294 = vunpack.c.h.b16 %v578
    %v3295 = vunpack.c.l.b16 %v579
    %v3296 = vunpack.c.h.b16 %v579
    %v3297 = vunpack.c.l.b16 %v580
    %v3298 = vunpack.c.h.b16 %v580
    %v3299 = vunpack.c.l.b16 %v581
    %v3300 = vunpack.c.h.b16 %v581
    %v3301 = vunpack.c.l.b16 %v582
    %v3302 = vunpack.c.h.b16 %v582
    %v3303 = vunpack.c.l.b16 %v583
    %v3304 = vunpack.c.h.b16 %v583
    %v3305 = vunpack.c.l.b16 %v584
    %v3306 = vunpack.c.h.b16 %v584
    %v3307 = vunpack.c.l.b16 %v585
    %v3308 = vunpack.c.h.b16 %v585
    %v3309 = vunpack.c.l.b16 %v586
    %v3310 = vunpack.c.h.b16 %v586
    %v3311 = vunpack.c.l.b16 %v587
    %v3312 = vunpack.c.h.b16 %v587
    %v3313 = vunpack.c.l.b16 %v588
    %v3314 = vunpack.c.h.b16 %v588
    %v3315 = vunpack.c.l.b16 %v589
    %v3316 = vunpack.c.h.b16 %v589
    %v3317 = vunpack.c.l.b16 %v590
    %v3318 = vunpack.c.h.b16 %v590
    %v3319 = vunpack.c.l.b16 %v591
    %v3320 = vunpack.c.h.b16 %v591
    %v3321 = vunpack.c.l.b16 %v592
    %v3322 = vunpack.c.h.b16 %v592
    %v3323 = vunpack.c.l.b16 %v593
    %v3324 = vunpack.c.h.b16 %v593
    %v3325 = vunpack.c.l.b16 %v594
    %v3326 = vunpack.c.h.b16 %v594
    %v3327 = vunpack.c.l.b16 %v595
    %v3328 = vunpack.c.h.b16 %v595
    %v3329 = vunpack.c.l.b16 %v596
    %v3330 = vunpack.c.h.b16 %v596
    %v3331 = vunpack.c.l.b16 %v597
    %v3332 = vunpack.c.h.b16 %v597
    %v3333 = vunpack.c.l.b16 %v598
    %v3334 = vunpack.c.h.b16 %v598
    %v3335 = vunpack.c.l.b16 %v599
    %v3336 = vunpack.c.h.b16 %v599
    %v3337 = vunpack.c.l.b16 %v600
    %v3338 = vunpack.c.h.b16 %v600
    %v3339 = vunpack.c.l.b16 %v601
    %v3340 = vunpack.c.h.b16 %v601
    %v3341 = vunpack.c.l.b16 %v602
    %v3342 = vunpack.c.h.b16 %v602
    %v3343 = vunpack.c.l.b16 %v603
    %v3344 = vunpack.c.h.b16 %v603
    %v3345 = vunpack.c.l.b16 %v604
    %v3346 = vunpack.c.h.b16 %v604
    %v3347 = vunpack.c.l.b16 %v605
    %v3348 = vunpack.c.h.b16 %v605
    %v3349 = vunpack.c.l.b16 %v606
    %v3350 = vunpack.c.h.b16 %v606
    %v3351 = vunpack.c.l.b16 %v607
    %v3352 = vunpack.c.h.b16 %v607
    %v3353 = vunpack.c.l.b16 %v608
    %v3354 = vunpack.c.h.b16 %v608
    %v3355 = vunpack.c.l.b16 %v609
    %v3356 = vunpack.c.h.b16 %v609
    %v3357 = vunpack.c.l.b16 %v610
    %v3358 = vunpack.c.h.b16 %v610
    %v3359 = vunpack.c.l.b16 %v611
    %v3360 = vunpack.c.h.b16 %v611
    %v3361 = vunpack.c.l.b16 %v612
    %v3362 = vunpack.c.h.b16 %v612
    %v3363 = vunpack.c.l.b16 %v613
    %v3364 = vunpack.c.h.b16 %v613
    %v3365 = vunpack.c.l.b16 %v614
    %v3366 = vunpack.c.h.b16 %v614
    %v3367 = vunpack.c.l.b16 %v615
    %v3368 = vunpack.c.h.b16 %v615
    %v3369 = vunpack.c.l.b16 %v616
    %v3370 = vunpack.c.h.b16 %v616
    %v3371 = vunpack.c.l.b16 %v617
    %v3372 = vunpack.c.h.b16 %v617
    %v3373 = vunpack.c.l.b16 %v618
    %v3374 = vunpack.c.h.b16 %v618
    %v3375 = vunpack.c.l.b16 %v619
    %v3376 = vunpack.c.h.b16 %v619
    %v3377 = vunpack.c.l.b16 %v620
    %v3378 = vunpack.c.h.b16 %v620
    %v3379 = vunpack.c.l.b16 %v621
    %v3380 = vunpack.c.h.b16 %v621
    %v3381 = vunpack.c.l.b16 %v622
    %v3382 = vunpack.c.h.b16 %v622
    %v3383 = vunpack.c.l.b16 %v623
    %v3384 = vunpack.c.h.b16 %v623
    %v3385 = vunpack.c.l.b16 %v624
    %v3386 = vunpack.c.h.b16 %v624
    %v3387 = vunpack.c.l.b16 %v625
    %v3388 = vunpack.c.h.b16 %v625
    %v3389 = vunpack.c.l.b16 %v626
    %v3390 = vunpack.c.h.b16 %v626
    %v3391 = vunpack.c.l.b16 %v627
    %v3392 = vunpack.c.h.b16 %v627
    %v3393 = vunpack.c.l.b16 %v628
    %v3394 = vunpack.c.h.b16 %v628
    %v3395 = vunpack.c.l.b16 %v629
    %v3396 = vunpack.c.h.b16 %v629
    %v3397 = vunpack.c.l.b16 %v630
    %v3398 = vunpack.c.h.b16 %v630
    %v3399 = vunpack.c.l.b16 %v631
    %v3400 = vunpack.c.h.b16 %v631
    %v3401 = vunpack.c.l.b16 %v632
    %v3402 = vunpack.c.h.b16 %v632
    %v3403 = vunpack.c.l.b16 %v633
    %v3404 = vunpack.c.h.b16 %v633
    %v3405 = vunpack.c.l.b16 %v634
    %v3406 = vunpack.c.h.b16 %v634
    %v3407 = vunpack.c.l.b16 %v635
    %v3408 = vunpack.c.h.b16 %v635
    %v3409 = vunpack.c.l.b16 %v636
    %v3410 = vunpack.c.h.b16 %v636
    %v3411 = vunpack.c.l.b16 %v637
    %v3412 = vunpack.c.h.b16 %v637
    %v3413 = vunpack.c.l.b16 %v638
    %v3414 = vunpack.c.h.b16 %v638
    %v3415 = vunpack.c.l.b16 %v639
    %v3416 = vunpack.c.h.b16 %v639
    %v3417 = vunpack.c.l.b16 %v640
    %v3418 = vunpack.c.h.b16 %v640
    %v3419 = vunpack.c.l.b16 %v641
    %v3420 = vunpack.c.h.b16 %v641
    %v3421 = vunpack.c.l.b16 %v642
    %v3422 = vunpack.c.h.b16 %v642
    %v3423 = vunpack.c.l.b16 %v643
    %v3424 = vunpack.c.h.b16 %v643
    %v3425 = vunpack.c.l.b16 %v644
    %v3426 = vunpack.c.h.b16 %v644
    %v3427 = vunpack.c.l.b16 %v645
    %v3428 = vunpack.c.h.b16 %v645
    %v3429 = vunpack.c.l.b16 %v646
    %v3430 = vunpack.c.h.b16 %v646
    %v3431 = vunpack.c.l.b16 %v647
    %v3432 = vunpack.c.h.b16 %v647
    %v3433 = vunpack.c.l.b16 %v648
    %v3434 = vunpack.c.h.b16 %v648
    %v3435 = vunpack.c.l.b16 %v649
    %v3436 = vunpack.c.h.b16 %v649
    %v3437 = vunpack.c.l.b16 %v650
    %v3438 = vunpack.c.h.b16 %v650
    %v3439 = vunpack.c.l.b16 %v651
    %v3440 = vunpack.c.h.b16 %v651
    %v3441 = vunpack.c.l.b16 %v652
    %v3442 = vunpack.c.h.b16 %v652
    %v3443 = vunpack.c.l.b16 %v653
    %v3444 = vunpack.c.h.b16 %v653
    %v3445 = vunpack.c.l.b16 %v654
    %v3446 = vunpack.c.h.b16 %v654
    %v3447 = vunpack.c.l.b16 %v655
    %v3448 = vunpack.c.h.b16 %v655
    %v3449 = vunpack.c.l.b16 %v656
    %v3450 = vunpack.c.h.b16 %v656
    %v3451 = vunpack.c.l.b16 %v657
    %v3452 = vunpack.c.h.b16 %v657
    %v3453 = vunpack.c.l.b16 %v658
    %v3454 = vunpack.c.h.b16 %v658
    %v3455 = vunpack.c.l.b16 %v659
    %v3456 = vunpack.c.h.b16 %v659
    %v3457 = vunpack.c.l.b16 %v660
    %v3458 = vunpack.c.h.b16 %v660
    %v3459 = vunpack.c.l.b16 %v661
    %v3460 = vunpack.c.h.b16 %v661
    %v3461 = vunpack.c.l.b16 %v662
    %v3462 = vunpack.c.h.b16 %v662
    %v3463 = vunpack.c.l.b16 %v663
    %v3464 = vunpack.c.h.b16 %v663
    %v3465 = vunpack.c.l.b16 %v664
    %v3466 = vunpack.c.h.b16 %v664
    %v3467 = vunpack.c.l.b16 %v665
    %v3468 = vunpack.c.h.b16 %v665
    %v3469 = vunpack.c.l.b16 %v666
    %v3470 = vunpack.c.h.b16 %v666
    %v3471 = vunpack.c.l.b16 %v667
    %v3472 = vunpack.c.h.b16 %v667
    %v3473 = vunpack.c.l.b16 %v668
    %v3474 = vunpack.c.h.b16 %v668
    %v3475 = vunpack.c.l.b16 %v669
    %v3476 = vunpack.c.h.b16 %v669
    %v3477 = vunpack.c.l.b16 %v670
    %v3478 = vunpack.c.h.b16 %v670
    %v3479 = vunpack.c.l.b16 %v671
    %v3480 = vunpack.c.h.b16 %v671
    %v3481 = vunpack.c.l.b16 %v672
    %v3482 = vunpack.c.h.b16 %v672
    %v3483 = vunpack.c.l.b16 %v673
    %v3484 = vunpack.c.h.b16 %v673
    %v3485 = vunpack.c.l.b16 %v674
    %v3486 = vunpack.c.h.b16 %v674
    %v3487 = vunpack.c.l.b16 %v675
    %v3488 = vunpack.c.h.b16 %v675
    %v3489 = vunpack.c.l.b16 %v676
    %v3490 = vunpack.c.h.b16 %v676
    %v3491 = vunpack.c.l.b16 %v677
    %v3492 = vunpack.c.h.b16 %v677
    %v3493 = vunpack.c.l.b16 %v678
    %v3494 = vunpack.c.h.b16 %v678
    %v3495 = vunpack.c.l.b16 %v679
    %v3496 = vunpack.c.h.b16 %v679
    %v3497 = vunpack.c.l.b16 %v680
    %v3498 = vunpack.c.h.b16 %v680
    %v3499 = vunpack.c.l.b16 %v681
    %v3500 = vunpack.c.h.b16 %v681
    %v3501 = vunpack.c.l.b16 %v682
    %v3502 = vunpack.c.h.b16 %v682
    %v3503 = vunpack.c.l.b16 %v683
    %v3504 = vunpack.c.h.b16 %v683
    %v3505 = vunpack.c.l.b16 %v684
    %v3506 = vunpack.c.h.b16 %v684
    %v3507 = vunpack.c.l.b16 %v685
    %v3508 = vunpack.c.h.b16 %v685
    %v3509 = vunpack.c.l.b16 %v686
    %v3510 = vunpack.c.h.b16 %v686
    %v3511 = vunpack.c.l.b16 %v687
    %v3512 = vunpack.c.h.b16 %v687
    %v3513 = vunpack.c.l.b16 %v688
    %v3514 = vunpack.c.h.b16 %v688
    %v3515 = vunpack.c.l.b16 %v689
    %v3516 = vunpack.c.h.b16 %v689
    %v3517 = vunpack.c.l.b16 %v690
    %v3518 = vunpack.c.h.b16 %v690
    %v3519 = vunpack.c.l.b16 %v691
    %v3520 = vunpack.c.h.b16 %v691
    %v3521 = vunpack.c.l.b16 %v692
    %v3522 = vunpack.c.h.b16 %v692
    %v3523 = vunpack.c.l.b16 %v693
    %v3524 = vunpack.c.h.b16 %v693
    %v3525 = vunpack.c.l.b16 %v694
    %v3526 = vunpack.c.h.b16 %v694
    %v3527 = vunpack.c.l.b16 %v695
    %v3528 = vunpack.c.h.b16 %v695
    %v3529 = vunpack.c.l.b16 %v696
    %v3530 = vunpack.c.h.b16 %v696
    %v3531 = vunpack.c.l.b16 %v697
    %v3532 = vunpack.c.h.b16 %v697
    %v3533 = vunpack.c.l.b16 %v698
    %v3534 = vunpack.c.h.b16 %v698
    %v3535 = vunpack.c.l.b16 %v699
    %v3536 = vunpack.c.h.b16 %v699
    %v3537 = vunpack.c.l.b16 %v700
    %v3538 = vunpack.c.h.b16 %v700
    %v3539 = vunpack.c.l.b16 %v701
    %v3540 = vunpack.c.h.b16 %v701
    %v3541 = vunpack.c.l.b16 %v702
    %v3542 = vunpack.c.h.b16 %v702
    %v3543 = vunpack.c.l.b16 %v703
    %v3544 = vunpack.c.h.b16 %v703
    %v3545 = vunpack.c.l.b16 %v704
    %v3546 = vunpack.c.h.b16 %v704
    %v3547 = vunpack.c.l.b16 %v705
    %v3548 = vunpack.c.h.b16 %v705
    %v3549 = vunpack.c.l.b16 %v706
    %v3550 = vunpack.c.h.b16 %v706
    %v3551 = vunpack.c.l.b16 %v707
    %v3552 = vunpack.c.h.b16 %v707
    %v3553 = vunpack.c.l.b16 %v708
    %v3554 = vunpack.c.h.b16 %v708
    %v3555 = vunpack.c.l.b16 %v709
    %v3556 = vunpack.c.h.b16 %v709
    %v3557 = vunpack.c.l.b16 %v710
    %v3558 = vunpack.c.h.b16 %v710
    %v3559 = vunpack.c.l.b16 %v711
    %v3560 = vunpack.c.h.b16 %v711
    %v3561 = vunpack.c.l.b16 %v712
    %v3562 = vunpack.c.h.b16 %v712
    %v3563 = vunpack.c.l.b16 %v713
    %v3564 = vunpack.c.h.b16 %v713
    %v3565 = vunpack.c.l.b16 %v714
    %v3566 = vunpack.c.h.b16 %v714
    %v3567 = vunpack.c.l.b16 %v715
    %v3568 = vunpack.c.h.b16 %v715
    %v3569 = vunpack.c.l.b16 %v716
    %v3570 = vunpack.c.h.b16 %v716
    %v3571 = vunpack.c.l.b16 %v717
    %v3572 = vunpack.c.h.b16 %v717
    %v3573 = vunpack.c.l.b16 %v718
    %v3574 = vunpack.c.h.b16 %v718
    %v3575 = vunpack.c.l.b16 %v719
    %v3576 = vunpack.c.h.b16 %v719
    %v3577 = vunpack.c.l.b16 %v720
    %v3578 = vunpack.c.h.b16 %v720
    %v3579 = vunpack.c.l.b16 %v721
    %v3580 = vunpack.c.h.b16 %v721
    %v3581 = vunpack.c.l.b16 %v722
    %v3582 = vunpack.c.h.b16 %v722
    %v3583 = vunpack.c.l.b16 %v723
    %v3584 = vunpack.c.h.b16 %v723
    %v3585 = vunpack.c.l.b16 %v724
    %v3586 = vunpack.c.h.b16 %v724
    %v3587 = vunpack.c.l.b16 %v725
    %v3588 = vunpack.c.h.b16 %v725
    %v3589 = vunpack.c.l.b16 %v726
    %v3590 = vunpack.c.h.b16 %v726
    %v3591 = vunpack.c.l.b16 %v727
    %v3592 = vunpack.c.h.b16 %v727
    %v3593 = vunpack.c.l.b16 %v728
    %v3594 = vunpack.c.h.b16 %v728
    %v3595 = vunpack.c.l.b16 %v729
    %v3596 = vunpack.c.h.b16 %v729
    %v3597 = vunpack.c.l.b16 %v730
    %v3598 = vunpack.c.h.b16 %v730
    %v3599 = vunpack.c.l.b16 %v731
    %v3600 = vunpack.c.h.b16 %v731
    %v3601 = vunpack.c.l.b16 %v732
    %v3602 = vunpack.c.h.b16 %v732
    %v3603 = vunpack.c.l.b16 %v733
    %v3604 = vunpack.c.h.b16 %v733
    %v3605 = vunpack.c.l.b16 %v734
    %v3606 = vunpack.c.h.b16 %v734
    %v3607 = vunpack.c.l.b16 %v735
    %v3608 = vunpack.c.h.b16 %v735
    %v3609 = vunpack.c.l.b16 %v736
    %v3610 = vunpack.c.h.b16 %v736
    %v3611 = vunpack.c.l.b16 %v737
    %v3612 = vunpack.c.h.b16 %v737
    %v3613 = vunpack.c.l.b16 %v738
    %v3614 = vunpack.c.h.b16 %v738
    %v3615 = vunpack.c.l.b16 %v739
    %v3616 = vunpack.c.h.b16 %v739
    %v3617 = vunpack.c.l.b16 %v740
    %v3618 = vunpack.c.h.b16 %v740
    %v3619 = vunpack.c.l.b16 %v741
    %v3620 = vunpack.c.h.b16 %v741
    %v3621 = vunpack.c.l.b16 %v742
    %v3622 = vunpack.c.h.b16 %v742
    %v3623 = vunpack.c.l.b16 %v743
    %v3624 = vunpack.c.h.b16 %v743
    %v3625 = vunpack.c.l.b16 %v744
    %v3626 = vunpack.c.h.b16 %v744
    %v3627 = vunpack.c.l.b16 %v745
    %v3628 = vunpack.c.h.b16 %v745
    %v3629 = vunpack.c.l.b16 %v746
    %v3630 = vunpack.c.h.b16 %v746
    %v3631 = vunpack.c.l.b16 %v747
    %v3632 = vunpack.c.h.b16 %v747
    %v3633 = vunpack.c.l.b16 %v748
    %v3634 = vunpack.c.h.b16 %v748
    %v3635 = vunpack.c.l.b16 %v749
    %v3636 = vunpack.c.h.b16 %v749
    %v3637 = vunpack.c.l.b16 %v750
    %v3638 = vunpack.c.h.b16 %v750
    %v3639 = vunpack.c.l.b16 %v751
    %v3640 = vunpack.c.h.b16 %v751
    %v3641 = vunpack.c.l.b16 %v752
    %v3642 = vunpack.c.h.b16 %v752
    %v3643 = vunpack.c.l.b16 %v753
    %v3644 = vunpack.c.h.b16 %v753
    %v3645 = vunpack.c.l.b16 %v754
    %v3646 = vunpack.c.h.b16 %v754
    %v3647 = vunpack.c.l.b16 %v755
    %v3648 = vunpack.c.h.b16 %v755
    %v3649 = vunpack.c.l.b16 %v756
    %v3650 = vunpack.c.h.b16 %v756
    %v3651 = vunpack.c.l.b16 %v757
    %v3652 = vunpack.c.h.b16 %v757
    %v3653 = vunpack.c.l.b16 %v758
    %v3654 = vunpack.c.h.b16 %v758
    %v3655 = vunpack.c.l.b16 %v759
    %v3656 = vunpack.c.h.b16 %v759
    %v3657 = vunpack.c.l.b16 %v760
    %v3658 = vunpack.c.h.b16 %v760
    %v3659 = vunpack.c.l.b16 %v761
    %v3660 = vunpack.c.h.b16 %v761
    %v3661 = vunpack.c.l.b16 %v762
    %v3662 = vunpack.c.h.b16 %v762
    %v3663 = vunpack.c.l.b16 %v763
    %v3664 = vunpack.c.h.b16 %v763
    %v3665 = vunpack.c.l.b16 %v764
    %v3666 = vunpack.c.h.b16 %v764
    %v3667 = vunpack.c.l.b16 %v765
    %v3668 = vunpack.c.h.b16 %v765
    %v3669 = vunpack.c.l.b16 %v766
    %v3670 = vunpack.c.h.b16 %v766
    %v3671 = vunpack.c.l.b16 %v767
    %v3672 = vunpack.c.h.b16 %v767
    %v3673 = vunpack.c.l.b16 %v768
    %v3674 = vunpack.c.h.b16 %v768
    %v3675 = vunpack.c.l.b16 %v769
    %v3676 = vunpack.c.h.b16 %v769
    %v3677 = vunpack.c.l.b16 %v770
    %v3678 = vunpack.c.h.b16 %v770
    %v3679 = vunpack.c.l.b16 %v771
    %v3680 = vunpack.c.h.b16 %v771
    %v3681 = vunpack.c.l.b16 %v772
    %v3682 = vunpack.c.h.b16 %v772
    %v3683 = vunpack.c.l.b16 %v773
    %v3684 = vunpack.c.h.b16 %v773
    %v3685 = vunpack.c.l.b16 %v774
    %v3686 = vunpack.c.h.b16 %v774
    %v3687 = vunpack.c.l.b16 %v775
    %v3688 = vunpack.c.h.b16 %v775
    %v3689 = vunpack.c.l.b16 %v776
    %v3690 = vunpack.c.h.b16 %v776
    %v3691 = vunpack.c.l.b16 %v777
    %v3692 = vunpack.c.h.b16 %v777
    %v3693 = vunpack.c.l.b16 %v778
    %v3694 = vunpack.c.h.b16 %v778
    %v3695 = vunpack.c.l.b16 %v779
    %v3696 = vunpack.c.h.b16 %v779
    %v3697 = vunpack.c.l.b16 %v780
    %v3698 = vunpack.c.h.b16 %v780
    %v3699 = vunpack.c.l.b16 %v781
    %v3700 = vunpack.c.h.b16 %v781
    %v3701 = vunpack.c.l.b16 %v782
    %v3702 = vunpack.c.h.b16 %v782
    %v3703 = vunpack.c.l.b16 %v783
    %v3704 = vunpack.c.h.b16 %v783
    %v3705 = vunpack.c.l.b16 %v784
    %v3706 = vunpack.c.h.b16 %v784
    %v3707 = vunpack.c.l.b16 %v785
    %v3708 = vunpack.c.h.b16 %v785
    %v3709 = vunpack.c.l.b16 %v786
    %v3710 = vunpack.c.h.b16 %v786
    %v3711 = vunpack.c.l.b16 %v787
    %v3712 = vunpack.c.h.b16 %v787
    %v3713 = vunpack.c.l.b16 %v788
    %v3714 = vunpack.c.h.b16 %v788
    %v3715 = vunpack.c.l.b16 %v789
    %v3716 = vunpack.c.h.b16 %v789
    %v3717 = vunpack.c.l.b16 %v790
    %v3718 = vunpack.c.h.b16 %v790
    %v3719 = vunpack.c.l.b16 %v791
    %v3720 = vunpack.c.h.b16 %v791
    %v3721 = vunpack.c.l.b16 %v792
    %v3722 = vunpack.c.h.b16 %v792
    %v3723 = vunpack.c.l.b16 %v793
    %v3724 = vunpack.c.h.b16 %v793
    %v3725 = vunpack.c.l.b16 %v794
    %v3726 = vunpack.c.h.b16 %v794
    %v3727 = vunpack.c.l.b16 %v795
    %v3728 = vunpack.c.h.b16 %v795
    %v3729 = vunpack.c.l.b16 %v796
    %v3730 = vunpack.c.h.b16 %v796
    %v3731 = vunpack.c.l.b16 %v797
    %v3732 = vunpack.c.h.b16 %v797
    %v3733 = vunpack.c.l.b16 %v798
    %v3734 = vunpack.c.h.b16 %v798
    %v3735 = vunpack.c.l.b16 %v799
    %v3736 = vunpack.c.h.b16 %v799
    %v3737 = vunpack.c.l.b16 %v800
    %v3738 = vunpack.c.h.b16 %v800
    %v3739 = vunpack.c.l.b16 %v801
    %v3740 = vunpack.c.h.b16 %v801
    %v3741 = vunpack.c.l.b16 %v802
    %v3742 = vunpack.c.h.b16 %v802
    %v3743 = vunpack.c.l.b16 %v803
    %v3744 = vunpack.c.h.b16 %v803
    %v3745 = vunpack.c.l.b16 %v804
    %v3746 = vunpack.c.h.b16 %v804
    %v3747 = vunpack.c.l.b16 %v805
    %v3748 = vunpack.c.h.b16 %v805
    %v3749 = vunpack.c.l.b16 %v806
    %v3750 = vunpack.c.h.b16 %v806
    %v3751 = vunpack.c.l.b16 %v807
    %v3752 = vunpack.c.h.b16 %v807
    %v3753 = vunpack.c.l.b16 %v808
    %v3754 = vunpack.c.h.b16 %v808
    %v3755 = vunpack.c.l.b16 %v809
    %v3756 = vunpack.c.h.b16 %v809
    %v3757 = vunpack.c.l.b16 %v810
    %v3758 = vunpack.c.h.b16 %v810
    %v3759 = vunpack.c.l.b16 %v811
    %v3760 = vunpack.c.h.b16 %v811
    %v3761 = vunpack.c.l.b16 %v812
    %v3762 = vunpack.c.h.b16 %v812
    %v3763 = vunpack.c.l.b16 %v813
    %v3764 = vunpack.c.h.b16 %v813
    %v3765 = vunpack.c.l.b16 %v814
    %v3766 = vunpack.c.h.b16 %v814
    %v3767 = vunpack.c.l.b16 %v815
    %v3768 = vunpack.c.h.b16 %v815
    %v3769 = vunpack.c.l.b16 %v816
    %v3770 = vunpack.c.h.b16 %v816
    %v3771 = vunpack.c.l.b16 %v817
    %v3772 = vunpack.c.h.b16 %v817
    %v3773 = vunpack.c.l.b16 %v818
    %v3774 = vunpack.c.h.b16 %v818
    %v3775 = vunpack.c.l.b16 %v819
    %v3776 = vunpack.c.h.b16 %v819
    %v3777 = vunpack.c.l.b16 %v820
    %v3778 = vunpack.c.h.b16 %v820
    %v3779 = vunpack.c.l.b16 %v821
    %v3780 = vunpack.c.h.b16 %v821
    %v3781 = vunpack.c.l.b16 %v822
    %v3782 = vunpack.c.h.b16 %v822
    %v3783 = vunpack.c.l.b16 %v823
    %v3784 = vunpack.c.h.b16 %v823
    %v3785 = vunpack.c.l.b16 %v824
    %v3786 = vunpack.c.h.b16 %v824
    %v3787 = vunpack.c.l.b16 %v825
    %v3788 = vunpack.c.h.b16 %v825
    %v3789 = vunpack.c.l.b16 %v826
    %v3790 = vunpack.c.h.b16 %v826
    %v3791 = vunpack.c.l.b16 %v827
    %v3792 = vunpack.c.h.b16 %v827
    %v3793 = vunpack.c.l.b16 %v828
    %v3794 = vunpack.c.h.b16 %v828
    %v3795 = vunpack.c.l.b16 %v829
    %v3796 = vunpack.c.h.b16 %v829
    %v3797 = vunpack.c.l.b16 %v830
    %v3798 = vunpack.c.h.b16 %v830
    %v3799 = vunpack.c.l.b16 %v831
    %v3800 = vunpack.c.h.b16 %v831
    %v3801 = vunpack.c.l.b16 %v832
    %v3802 = vunpack.c.h.b16 %v832
    %v3803 = vunpack.c.l.b16 %v833
    %v3804 = vunpack.c.h.b16 %v833
    %v3805 = vunpack.c.l.b16 %v834
    %v3806 = vunpack.c.h.b16 %v834
    %v3807 = vunpack.c.l.b16 %v835
    %v3808 = vunpack.c.h.b16 %v835
    %v3809 = vunpack.c.l.b16 %v836
    %v3810 = vunpack.c.h.b16 %v836
    %v3811 = vunpack.c.l.b16 %v837
    %v3812 = vunpack.c.h.b16 %v837
    %v3813 = vunpack.c.l.b16 %v838
    %v3814 = vunpack.c.h.b16 %v838
    %v3815 = vunpack.c.l.b16 %v839
    %v3816 = vunpack.c.h.b16 %v839
    %v3817 = vunpack.c.l.b16 %v840
    %v3818 = vunpack.c.h.b16 %v840
    %v3819 = vunpack.c.l.b16 %v841
    %v3820 = vunpack.c.h.b16 %v841
    %v3821 = vunpack.c.l.b16 %v842
    %v3822 = vunpack.c.h.b16 %v842
    %v3823 = vunpack.c.l.b16 %v843
    %v3824 = vunpack.c.h.b16 %v843
    %v3825 = vunpack.c.l.b16 %v844
    %v3826 = vunpack.c.h.b16 %v844
    %v3827 = vunpack.c.l.b16 %v845
    %v3828 = vunpack.c.h.b16 %v845
    %v3829 = vunpack.c.l.b16 %v846
    %v3830 = vunpack.c.h.b16 %v846
    %v3831 = vunpack.c.l.b16 %v847
    %v3832 = vunpack.c.h.b16 %v847
    %v3833 = vunpack.c.l.b16 %v848
    %v3834 = vunpack.c.h.b16 %v848
    %v3835 = vunpack.c.l.b16 %v849
    %v3836 = vunpack.c.h.b16 %v849
    %v3837 = vunpack.c.l.b16 %v850
    %v3838 = vunpack.c.h.b16 %v850
    %v3839 = vunpack.c.l.b16 %v851
    %v3840 = vunpack.c.h.b16 %v851
    %v3841 = vunpack.c.l.b16 %v852
    %v3842 = vunpack.c.h.b16 %v852
    %v3843 = vunpack.c.l.b16 %v853
    %v3844 = vunpack.c.h.b16 %v853
    %v3845 = vunpack.c.l.b16 %v854
    %v3846 = vunpack.c.h.b16 %v854
    %v3847 = vunpack.c.l.b16 %v855
    %v3848 = vunpack.c.h.b16 %v855
    %v3849 = vunpack.c.l.b16 %v856
    %v3850 = vunpack.c.h.b16 %v856
    %v3851 = vunpack.c.l.b16 %v857
    %v3852 = vunpack.c.h.b16 %v857
    %v3853 = vunpack.c.l.b16 %v858
    %v3854 = vunpack.c.h.b16 %v858
    %v3855 = vunpack.c.l.b16 %v859
    %v3856 = vunpack.c.h.b16 %v859
    %v3857 = vunpack.c.l.b16 %v860
    %v3858 = vunpack.c.h.b16 %v860
    %v3859 = vunpack.c.l.b16 %v861
    %v3860 = vunpack.c.h.b16 %v861
    %v3861 = vunpack.c.l.b16 %v862
    %v3862 = vunpack.c.h.b16 %v862
    %v3863 = vunpack.c.l.b16 %v863
    %v3864 = vunpack.c.h.b16 %v863
    %v3865 = vunpack.c.l.b16 %v864
    %v3866 = vunpack.c.h.b16 %v864
    %v3867 = vunpack.c.l.b16 %v865
    %v3868 = vunpack.c.h.b16 %v865
    %v3869 = vunpack.c.l.b16 %v866
    %v3870 = vunpack.c.h.b16 %v866
    %v3871 = vunpack.c.l.b16 %v867
    %v3872 = vunpack.c.h.b16 %v867
    %v3873 = vunpack.c.l.b16 %v868
    %v3874 = vunpack.c.h.b16 %v868
    %v3875 = vunpack.c.l.b16 %v869
    %v3876 = vunpack.c.h.b16 %v869
    %v3877 = vunpack.c.l.b16 %v870
    %v3878 = vunpack.c.h.b16 %v870
    %v3879 = vunpack.c.l.b16 %v871
    %v3880 = vunpack.c.h.b16 %v871
    %v3881 = vunpack.c.l.b16 %v872
    %v3882 = vunpack.c.h.b16 %v872
    %v3883 = vunpack.c.l.b16 %v873
    %v3884 = vunpack.c.h.b16 %v873
    %v3885 = vunpack.c.l.b16 %v874
    %v3886 = vunpack.c.h.b16 %v874
    %v3887 = vunpack.c.l.b16 %v875
    %v3888 = vunpack.c.h.b16 %v875
    %v3889 = vunpack.c.l.b16 %v876
    %v3890 = vunpack.c.h.b16 %v876
    %v3891 = vunpack.c.l.b16 %v877
    %v3892 = vunpack.c.h.b16 %v877
    %v3893 = vunpack.c.l.b16 %v878
    %v3894 = vunpack.c.h.b16 %v878
    %v3895 = vunpack.c.l.b16 %v879
    %v3896 = vunpack.c.h.b16 %v879
    %v3897 = vunpack.c.l.b16 %v880
    %v3898 = vunpack.c.h.b16 %v880
    %v3899 = vunpack.c.l.b16 %v881
    %v3900 = vunpack.c.h.b16 %v881
    %v3901 = vunpack.c.l.b16 %v882
    %v3902 = vunpack.c.h.b16 %v882
    %v3903 = vunpack.c.l.b16 %v883
    %v3904 = vunpack.c.h.b16 %v883
    %v3905 = vunpack.c.l.b16 %v884
    %v3906 = vunpack.c.h.b16 %v884
    %v3907 = vunpack.c.l.b16 %v885
    %v3908 = vunpack.c.h.b16 %v885
    %v3909 = vunpack.c.l.b16 %v886
    %v3910 = vunpack.c.h.b16 %v886
    %v3911 = vunpack.c.l.b16 %v887
    %v3912 = vunpack.c.h.b16 %v887
    %v3913 = vunpack.c.l.b16 %v888
    %v3914 = vunpack.c.h.b16 %v888
    %v3915 = vunpack.c.l.b16 %v889
    %v3916 = vunpack.c.h.b16 %v889
    %v3917 = vunpack.c.l.b16 %v890
    %v3918 = vunpack.c.h.b16 %v890
    %v3919 = vunpack.c.l.b16 %v891
    %v3920 = vunpack.c.h.b16 %v891
    %v3921 = vunpack.c.l.b16 %v892
    %v3922 = vunpack.c.h.b16 %v892
    %v3923 = vunpack.c.l.b16 %v893
    %v3924 = vunpack.c.h.b16 %v893
    %v3925 = vunpack.c.l.b16 %v894
    %v3926 = vunpack.c.h.b16 %v894
    %v3927 = vunpack.c.l.b16 %v895
    %v3928 = vunpack.c.h.b16 %v895
    %v3929 = vunpack.c.l.b16 %v896
    %v3930 = vunpack.c.h.b16 %v896
    %v3931 = vunpack.c.l.b16 %v897
    %v3932 = vunpack.c.h.b16 %v897
    %v3933 = vunpack.c.l.b16 %v898
    %v3934 = vunpack.c.h.b16 %v898
    %v3935 = vunpack.c.l.b16 %v899
    %v3936 = vunpack.c.h.b16 %v899
    %v3937 = vunpack.c.l.b16 %v900
    %v3938 = vunpack.c.h.b16 %v900
    %v3939 = vunpack.c.l.b16 %v901
    %v3940 = vunpack.c.h.b16 %v901
    %v3941 = vunpack.c.l.b16 %v902
    %v3942 = vunpack.c.h.b16 %v902
    %v3943 = vunpack.c.l.b16 %v903
    %v3944 = vunpack.c.h.b16 %v903
    %v3945 = vunpack.c.l.b16 %v904
    %v3946 = vunpack.c.h.b16 %v904
    %v3947 = vunpack.c.l.b16 %v905
    %v3948 = vunpack.c.h.b16 %v905
    %v3949 = vunpack.c.l.b16 %v906
    %v3950 = vunpack.c.h.b16 %v906
    %v3951 = vunpack.c.l.b16 %v907
    %v3952 = vunpack.c.h.b16 %v907
    %v3953 = vunpack.c.l.b16 %v908
    %v3954 = vunpack.c.h.b16 %v908
    %v3955 = vunpack.c.l.b16 %v909
    %v3956 = vunpack.c.h.b16 %v909
    %v3957 = vunpack.c.l.b16 %v910
    %v3958 = vunpack.c.h.b16 %v910
    %v3959 = vunpack.c.l.b16 %v911
    %v3960 = vunpack.c.h.b16 %v911
    %v3961 = vunpack.c.l.b16 %v912
    %v3962 = vunpack.c.h.b16 %v912
    %v3963 = vunpack.c.l.b16 %v913
    %v3964 = vunpack.c.h.b16 %v913
    %v3965 = vunpack.c.l.b16 %v914
    %v3966 = vunpack.c.h.b16 %v914
    %v3967 = vunpack.c.l.b16 %v915
    %v3968 = vunpack.c.h.b16 %v915
    %v3969 = vunpack.c.l.b16 %v916
    %v3970 = vunpack.c.h.b16 %v916
    %v3971 = vunpack.c.l.b16 %v917
    %v3972 = vunpack.c.h.b16 %v917
    %v3973 = vunpack.c.l.b16 %v918
    %v3974 = vunpack.c.h.b16 %v918
    %v3975 = vunpack.c.l.b16 %v919
    %v3976 = vunpack.c.h.b16 %v919
    %v3977 = vunpack.c.l.b16 %v920
    %v3978 = vunpack.c.h.b16 %v920
    %v3979 = vunpack.c.l.b16 %v921
    %v3980 = vunpack.c.h.b16 %v921
    %v3981 = vunpack.c.l.b16 %v922
    %v3982 = vunpack.c.h.b16 %v922
    %v3983 = vunpack.c.l.b16 %v923
    %v3984 = vunpack.c.h.b16 %v923
    %v3985 = vunpack.c.l.b16 %v924
    %v3986 = vunpack.c.h.b16 %v924
    %v3987 = vunpack.c.l.b16 %v925
    %v3988 = vunpack.c.h.b16 %v925
    %v3989 = vunpack.c.l.b16 %v926
    %v3990 = vunpack.c.h.b16 %v926
    %v3991 = vunpack.c.l.b16 %v927
    %v3992 = vunpack.c.h.b16 %v927
    %v3993 = vunpack.c.l.b16 %v928
    %v3994 = vunpack.c.h.b16 %v928
    %v3995 = vunpack.c.l.b16 %v929
    %v3996 = vunpack.c.h.b16 %v929
    %v3997 = vunpack.c.l.b16 %v930
    %v3998 = vunpack.c.h.b16 %v930
    %v3999 = vunpack.c.l.b16 %v931
    %v4000 = vunpack.c.h.b16 %v931
    %v4001 = vunpack.c.l.b16 %v932
    %v4002 = vunpack.c.h.b16 %v932
    %v4003 = vunpack.c.l.b16 %v933
    %v4004 = vunpack.c.h.b16 %v933
    %v4005 = vunpack.c.l.b16 %v934
    %v4006 = vunpack.c.h.b16 %v934
    %v4007 = vunpack.c.l.b16 %v935
    %v4008 = vunpack.c.h.b16 %v935
    %v4009 = vunpack.c.l.b16 %v936
    %v4010 = vunpack.c.h.b16 %v936
    %v4011 = vunpack.c.l.b16 %v937
    %v4012 = vunpack.c.h.b16 %v937
    %v4013 = vunpack.c.l.b16 %v938
    %v4014 = vunpack.c.h.b16 %v938
    %v4015 = vunpack.c.l.b16 %v939
    %v4016 = vunpack.c.h.b16 %v939
    %v4017 = vunpack.c.l.b16 %v940
    %v4018 = vunpack.c.h.b16 %v940
    %v4019 = vunpack.c.l.b16 %v941
    %v4020 = vunpack.c.h.b16 %v941
    %v4021 = vunpack.c.l.b16 %v942
    %v4022 = vunpack.c.h.b16 %v942
    %v4023 = vunpack.c.l.b16 %v943
    %v4024 = vunpack.c.h.b16 %v943
    %v4025 = vunpack.c.l.b16 %v944
    %v4026 = vunpack.c.h.b16 %v944
    %v4027 = vunpack.c.l.b16 %v945
    %v4028 = vunpack.c.h.b16 %v945
    %v4029 = vunpack.c.l.b16 %v946
    %v4030 = vunpack.c.h.b16 %v946
    %v4031 = vunpack.c.l.b16 %v947
    %v4032 = vunpack.c.h.b16 %v947
    %v4033 = vunpack.c.l.b16 %v948
    %v4034 = vunpack.c.h.b16 %v948
    %v4035 = vunpack.c.l.b16 %v949
    %v4036 = vunpack.c.h.b16 %v949
    %v4037 = vunpack.c.l.b16 %v950
    %v4038 = vunpack.c.h.b16 %v950
    %v4039 = vunpack.c.l.b16 %v951
    %v4040 = vunpack.c.h.b16 %v951
    %v4041 = vunpack.c.l.b16 %v952
    %v4042 = vunpack.c.h.b16 %v952
    %v4043 = vunpack.c.l.b16 %v953
    %v4044 = vunpack.c.h.b16 %v953
    %v4045 = vunpack.c.l.b16 %v954
    %v4046 = vunpack.c.h.b16 %v954
    %v4047 = vunpack.c.l.b16 %v955
    %v4048 = vunpack.c.h.b16 %v955
    %v4049 = vunpack.c.l.b16 %v956
    %v4050 = vunpack.c.h.b16 %v956
    %v4051 = vunpack.c.l.b16 %v957
    %v4052 = vunpack.c.h.b16 %v957
    %v4053 = vunpack.c.l.b16 %v958
    %v4054 = vunpack.c.h.b16 %v958
    %v4055 = vunpack.c.l.b16 %v959
    %v4056 = vunpack.c.h.b16 %v959
    %v4057 = vunpack.c.l.b16 %v960
    %v4058 = vunpack.c.h.b16 %v960
    %v4059 = vunpack.c.l.b16 %v961
    %v4060 = vunpack.c.h.b16 %v961
    %v4061 = vunpack.c.l.b16 %v962
    %v4062 = vunpack.c.h.b16 %v962
    %v4063 = vunpack.c.l.b16 %v963
    %v4064 = vunpack.c.h.b16 %v963
    %v4065 = vunpack.c.l.b16 %v964
    %v4066 = vunpack.c.h.b16 %v964
    %v4067 = vunpack.c.l.b16 %v965
    %v4068 = vunpack.c.h.b16 %v965
    %v4069 = vunpack.c.l.b16 %v966
    %v4070 = vunpack.c.h.b16 %v966
    %v4071 = vunpack.c.l.b16 %v967
    %v4072 = vunpack.c.h.b16 %v967
    %v4073 = vunpack.c.l.b16 %v968
    %v4074 = vunpack.c.h.b16 %v968
    %v4075 = vunpack.c.l.b16 %v969
    %v4076 = vunpack.c.h.b16 %v969
    %v4077 = vunpack.c.l.b16 %v970
    %v4078 = vunpack.c.h.b16 %v970
    %v4079 = vunpack.c.l.b16 %v971
    %v4080 = vunpack.c.h.b16 %v971
    %v4081 = vunpack.c.l.b16 %v972
    %v4082 = vunpack.c.h.b16 %v972
    %v4083 = vunpack.c.l.b16 %v973
    %v4084 = vunpack.c.h.b16 %v973
    %v4085 = vunpack.c.l.b16 %v974
    %v4086 = vunpack.c.h.b16 %v974
    %v4087 = vunpack.c.l.b16 %v975
    %v4088 = vunpack.c.h.b16 %v975
    %v4089 = vunpack.c.l.b16 %v976
    %v4090 = vunpack.c.h.b16 %v976
    %v4091 = vunpack.c.l.b16 %v977
    %v4092 = vunpack.c.h.b16 %v977
    %v4093 = vunpack.c.l.b16 %v978
    %v4094 = vunpack.c.h.b16 %v978
    %v4095 = vunpack.c.l.b16 %v979
    %v4096 = vunpack.c.h.b16 %v979
    %v4097 = vunpack.c.l.b16 %v980
    %v4098 = vunpack.c.h.b16 %v980
    %v4099 = vunpack.c.l.b16 %v981
    %v4100 = vunpack.c.h.b16 %v981
    %v4101 = vunpack.c.l.b16 %v982
    %v4102 = vunpack.c.h.b16 %v982
    %v4103 = vunpack.c.l.b16 %v983
    %v4104 = vunpack.c.h.b16 %v983
    %v4105 = vunpack.c.l.b16 %v984
    %v4106 = vunpack.c.h.b16 %v984
    %v4107 = vunpack.c.l.b16 %v985
    %v4108 = vunpack.c.h.b16 %v985
    %v4109 = vunpack.c.l.b16 %v986
    %v4110 = vunpack.c.h.b16 %v986
    %v4111 = vunpack.c.l.b16 %v987
    %v4112 = vunpack.c.h.b16 %v987
    %v4113 = vunpack.c.l.b16 %v988
    %v4114 = vunpack.c.h.b16 %v988
    %v4115 = vunpack.c.l.b16 %v989
    %v4116 = vunpack.c.h.b16 %v989
    %v4117 = vunpack.c.l.b16 %v990
    %v4118 = vunpack.c.h.b16 %v990
    %v4119 = vunpack.c.l.b16 %v991
    %v4120 = vunpack.c.h.b16 %v991
    %v4121 = vunpack.c.l.b16 %v992
    %v4122 = vunpack.c.h.b16 %v992
    %v4123 = vunpack.c.l.b16 %v993
    %v4124 = vunpack.c.h.b16 %v993
    %v4125 = vunpack.c.l.b16 %v994
    %v4126 = vunpack.c.h.b16 %v994
    %v4127 = vunpack.c.l.b16 %v995
    %v4128 = vunpack.c.h.b16 %v995
    %v4129 = vunpack.c.l.b16 %v996
    %v4130 = vunpack.c.h.b16 %v996
    %v4131 = vunpack.c.l.b16 %v997
    %v4132 = vunpack.c.h.b16 %v997
    %v4133 = vunpack.c.l.b16 %v998
    %v4134 = vunpack.c.h.b16 %v998
    %v4135 = vunpack.c.l.b16 %v999
    %v4136 = vunpack.c.h.b16 %v999
    %v4137 = vunpack.c.l.b16 %v1000
    %v4138 = vunpack.c.h.b16 %v1000
    %v4139 = vunpack.c.l.b16 %v1001
    %v4140 = vunpack.c.h.b16 %v1001
    %v4141 = vunpack.c.l.b16 %v1002
    %v4142 = vunpack.c.h.b16 %v1002
    %v4143 = vunpack.c.l.b16 %v1003
    %v4144 = vunpack.c.h.b16 %v1003
    %v4145 = vunpack.c.l.b16 %v1004
    %v4146 = vunpack.c.h.b16 %v1004
    %v4147 = vunpack.c.l.b16 %v1005
    %v4148 = vunpack.c.h.b16 %v1005
    %v4149 = vunpack.c.l.b16 %v1006
    %v4150 = vunpack.c.h.b16 %v1006
    %v4151 = vunpack.c.l.b16 %v1007
    %v4152 = vunpack.c.h.b16 %v1007
    %v4153 = vunpack.c.l.b16 %v1008
    %v4154 = vunpack.c.h.b16 %v1008
    %v4155 = vunpack.c.l.b16 %v1009
    %v4156 = vunpack.c.h.b16 %v1009
    %v4157 = vunpack.c.l.b16 %v1010
    %v4158 = vunpack.c.h.b16 %v1010
    %v4159 = vunpack.c.l.b16 %v1011
    %v4160 = vunpack.c.h.b16 %v1011
    %v4161 = vunpack.c.l.b16 %v1012
    %v4162 = vunpack.c.h.b16 %v1012
    %v4163 = vunpack.c.l.b16 %v1013
    %v4164 = vunpack.c.h.b16 %v1013
    %v4165 = vunpack.c.l.b16 %v1014
    %v4166 = vunpack.c.h.b16 %v1014
    %v4167 = vunpack.c.l.b16 %v1015
    %v4168 = vunpack.c.h.b16 %v1015
    %v4169 = vunpack.c.l.b16 %v1016
    %v4170 = vunpack.c.h.b16 %v1016
    %v4171 = vunpack.c.l.b16 %v1017
    %v4172 = vunpack.c.h.b16 %v1017
    %v4173 = vunpack.c.l.b16 %v1018
    %v4174 = vunpack.c.h.b16 %v1018
    %v4175 = vunpack.c.l.b16 %v1019
    %v4176 = vunpack.c.h.b16 %v1019
    %v4177 = vunpack.c.l.b16 %v1020
    %v4178 = vunpack.c.h.b16 %v1020
    %v4179 = vunpack.c.l.b16 %v1021
    %v4180 = vunpack.c.h.b16 %v1021
    %v4181 = vunpack.c.l.b16 %v1022
    %v4182 = vunpack.c.h.b16 %v1022
    %v4183 = vunpack.c.l.b16 %v1023
    %v4184 = vunpack.c.h.b16 %v1023
    %v4185 = vunpack.c.l.b16 %v1024
    %v4186 = vunpack.c.h.b16 %v1024
    %v4187 = vunpack.c.l.b16 %v1025
    %v4188 = vunpack.c.h.b16 %v1025
    %v4189 = vunpack.c.l.b16 %v1026
    %v4190 = vunpack.c.h.b16 %v1026
    %v4191 = vunpack.c.l.b16 %v1027
    %v4192 = vunpack.c.h.b16 %v1027
    %v4193 = vunpack.c.l.b16 %v1028
    %v4194 = vunpack.c.h.b16 %v1028
    %v4195 = vunpack.c.l.b16 %v1029
    %v4196 = vunpack.c.h.b16 %v1029
    %v4197 = vunpack.c.l.b16 %v1030
    %v4198 = vunpack.c.h.b16 %v1030
    %v4199 = vunpack.c.l.b16 %v1031
    %v4200 = vunpack.c.h.b16 %v1031
    %v4201 = vunpack.c.l.b16 %v1032
    %v4202 = vunpack.c.h.b16 %v1032
    %v4203 = vunpack.c.l.b16 %v1033
    %v4204 = vunpack.c.h.b16 %v1033
    %v4205 = vunpack.c.l.b16 %v1034
    %v4206 = vunpack.c.h.b16 %v1034
    %v4207 = vunpack.c.l.b16 %v1035
    %v4208 = vunpack.c.h.b16 %v1035
    %v4209 = vunpack.c.l.b16 %v1036
    %v4210 = vunpack.c.h.b16 %v1036
    %v4211 = vunpack.c.l.b16 %v1037
    %v4212 = vunpack.c.h.b16 %v1037
    %v4213 = vunpack.c.l.b16 %v1038
    %v4214 = vunpack.c.h.b16 %v1038
    %v4215 = vunpack.c.l.b16 %v1039
    %v4216 = vunpack.c.h.b16 %v1039
    %v4217 = vunpack.c.l.b16 %v1040
    %v4218 = vunpack.c.h.b16 %v1040
    %v4219 = vunpack.c.l.b16 %v1041
    %v4220 = vunpack.c.h.b16 %v1041
    %v4221 = vunpack.c.l.b16 %v1042
    %v4222 = vunpack.c.h.b16 %v1042
    %v4223 = vunpack.c.l.b16 %v1043
    %v4224 = vunpack.c.h.b16 %v1043
    %v4225 = vunpack.c.l.b16 %v1044
    %v4226 = vunpack.c.h.b16 %v1044
    %v4227 = vunpack.c.l.b16 %v1045
    %v4228 = vunpack.c.h.b16 %v1045
    %v4229 = vunpack.c.l.b16 %v1046
    %v4230 = vunpack.c.h.b16 %v1046
    %v4231 = vunpack.c.l.b16 %v1047
    %v4232 = vunpack.c.h.b16 %v1047
    %v4233 = vunpack.c.l.b16 %v1048
    %v4234 = vunpack.c.h.b16 %v1048
    %v4235 = vunpack.c.l.b16 %v1049
    %v4236 = vunpack.c.h.b16 %v1049
    %v4237 = vunpack.c.l.b16 %v1050
    %v4238 = vunpack.c.h.b16 %v1050
    %v4239 = vunpack.c.l.b16 %v1051
    %v4240 = vunpack.c.h.b16 %v1051
    %v4241 = vunpack.c.l.b16 %v1052
    %v4242 = vunpack.c.h.b16 %v1052
    %v4243 = vunpack.c.l.b16 %v1053
    %v4244 = vunpack.c.h.b16 %v1053
    %v4245 = vunpack.c.l.b16 %v1054
    %v4246 = vunpack.c.h.b16 %v1054
    %v4247 = vunpack.c.l.b16 %v1055
    %v4248 = vunpack.c.h.b16 %v1055
    %v4249 = vunpack.c.l.b16 %v1056
    %v4250 = vunpack.c.h.b16 %v1056
    %v4251 = vunpack.c.l.b16 %v1057
    %v4252 = vunpack.c.h.b16 %v1057
    %v4253 = vunpack.c.l.b16 %v1058
    %v4254 = vunpack.c.h.b16 %v1058
    %v4255 = vunpack.c.l.b16 %v1059
    %v4256 = vunpack.c.h.b16 %v1059
    %v4257 = vunpack.c.l.b16 %v1060
    %v4258 = vunpack.c.h.b16 %v1060
    %v4259 = vunpack.c.l.b16 %v1061
    %v4260 = vunpack.c.h.b16 %v1061
    %v4261 = vunpack.c.l.b16 %v1062
    %v4262 = vunpack.c.h.b16 %v1062
    %v4263 = vunpack.c.l.b16 %v1063
    %v4264 = vunpack.c.h.b16 %v1063
    %v4265 = vunpack.c.l.b16 %v1064
    %v4266 = vunpack.c.h.b16 %v1064
    %v4267 = vunpack.c.l.b16 %v1065
    %v4268 = vunpack.c.h.b16 %v1065
    %v4269 = vunpack.c.l.b16 %v1066
    %v4270 = vunpack.c.h.b16 %v1066
    %v4271 = vunpack.c.l.b16 %v1067
    %v4272 = vunpack.c.h.b16 %v1067
    %v4273 = vunpack.c.l.b16 %v1068
    %v4274 = vunpack.c.h.b16 %v1068
    %v4275 = vunpack.c.l.b16 %v1069
    %v4276 = vunpack.c.h.b16 %v1069
    %v4277 = vunpack.c.l.b16 %v1070
    %v4278 = vunpack.c.h.b16 %v1070
    %v4279 = vunpack.c.l.b16 %v1071
    %v4280 = vunpack.c.h.b16 %v1071
    %v4281 = vunpack.c.l.b16 %v1072
    %v4282 = vunpack.c.h.b16 %v1072
    %v4283 = vunpack.c.l.b16 %v1073
    %v4284 = vunpack.c.h.b16 %v1073
    %v4285 = vunpack.c.l.b16 %v1074
    %v4286 = vunpack.c.h.b16 %v1074
    %v4287 = vunpack.c.l.b16 %v1075
    %v4288 = vunpack.c.h.b16 %v1075
    %v4289 = vunpack.c.l.b16 %v1076
    %v4290 = vunpack.c.h.b16 %v1076
    %v4291 = vpack.c.b16 %v2259, %v2243
    %v4292 = vpack.c.b16 %v2260, %v2244
    %v4293 = vpack.c.b16 %v2261, %v2245
    %v4294 = vpack.c.b16 %v2262, %v2246
    %v4295 = vpack.c.b16 %v2263, %v2247
    %v4296 = vpack.c.b16 %v2264, %v2248
    %v4297 = vpack.c.b16 %v2265, %v2249
    %v4298 = vpack.c.b16 %v2266, %v2250
    %v4299 = vpack.c.b16 %v2267, %v2251
    %v4300 = vpack.c.b16 %v2268, %v2252
    %v4301 = vpack.c.b16 %v2269, %v2253
    %v4302 = vpack.c.b16 %v2270, %v2254
    %v4303 = vpack.c.b16 %v2271, %v2255
    %v4304 = vpack.c.b16 %v2272, %v2256
    %v4305 = vpack.c.b16 %v2273, %v2257
    %v4306 = vpack.c.b16 %v2274, %v2258
    %v4307 = vpack.c.b16 %v2291, %v2275
    %v4308 = vpack.c.b16 %v2292, %v2276
    %v4309 = vpack.c.b16 %v2293, %v2277
    %v4310 = vpack.c.b16 %v2294, %v2278
    %v4311 = vpack.c.b16 %v2295, %v2279
    %v4312 = vpack.c.b16 %v2296, %v2280
    %v4313 = vpack.c.b16 %v2297, %v2281
    %v4314 = vpack.c.b16 %v2298, %v2282
    %v4315 = vpack.c.b16 %v2299, %v2283
    %v4316 = vpack.c.b16 %v2300, %v2284
    %v4317 = vpack.c.b16 %v2301, %v2285
    %v4318 = vpack.c.b16 %v2302, %v2286
    %v4319 = vpack.c.b16 %v2303, %v2287
    %v4320 = vpack.c.b16 %v2304, %v2288
    %v4321 = vpack.c.b16 %v2305, %v2289
    %v4322 = vpack.c.b16 %v2306, %v2290
    %v4323 = vpack.c.b16 %v2323, %v2307
    %v4324 = vpack.c.b16 %v2324, %v2308
    %v4325 = vpack.c.b16 %v2325, %v2309
    %v4326 = vpack.c.b16 %v2326, %v2310
    %v4327 = vpack.c.b16 %v2327, %v2311
    %v4328 = vpack.c.b16 %v2328, %v2312
    %v4329 = vpack.c.b16 %v2329, %v2313
    %v4330 = vpack.c.b16 %v2330, %v2314
    %v4331 = vpack.c.b16 %v2331, %v2315
    %v4332 = vpack.c.b16 %v2332, %v2316
    %v4333 = vpack.c.b16 %v2333, %v2317
    %v4334 = vpack.c.b16 %v2334, %v2318
    %v4335 = vpack.c.b16 %v2335, %v2319
    %v4336 = vpack.c.b16 %v2336, %v2320
    %v4337 = vpack.c.b16 %v2337, %v2321
    %v4338 = vpack.c.b16 %v2338, %v2322
    %v4339 = vpack.c.b16 %v2355, %v2339
    %v4340 = vpack.c.b16 %v2356, %v2340
    %v4341 = vpack.c.b16 %v2357, %v2341
    %v4342 = vpack.c.b16 %v2358, %v2342
    %v4343 = vpack.c.b16 %v2359, %v2343
    %v4344 = vpack.c.b16 %v2360, %v2344
    %v4345 = vpack.c.b16 %v2361, %v2345
    %v4346 = vpack.c.b16 %v2362, %v2346
    %v4347 = vpack.c.b16 %v2363, %v2347
    %v4348 = vpack.c.b16 %v2364, %v2348
    %v4349 = vpack.c.b16 %v2365, %v2349
    %v4350 = vpack.c.b16 %v2366, %v2350
    %v4351 = vpack.c.b16 %v2367, %v2351
    %v4352 = vpack.c.b16 %v2368, %v2352
    %v4353 = vpack.c.b16 %v2369, %v2353
    %v4354 = vpack.c.b16 %v2370, %v2354
    %v4355 = vpack.c.b16 %v2387, %v2371
    %v4356 = vpack.c.b16 %v2388, %v2372
    %v4357 = vpack.c.b16 %v2389, %v2373
    %v4358 = vpack.c.b16 %v2390, %v2374
    %v4359 = vpack.c.b16 %v2391, %v2375
    %v4360 = vpack.c.b16 %v2392, %v2376
    %v4361 = vpack.c.b16 %v2393, %v2377
    %v4362 = vpack.c.b16 %v2394, %v2378
    %v4363 = vpack.c.b16 %v2395, %v2379
    %v4364 = vpack.c.b16 %v2396, %v2380
    %v4365 = vpack.c.b16 %v2397, %v2381
    %v4366 = vpack.c.b16 %v2398, %v2382
    %v4367 = vpack.c.b16 %v2399, %v2383
    %v4368 = vpack.c.b16 %v2400, %v2384
    %v4369 = vpack.c.b16 %v2401, %v2385
    %v4370 = vpack.c.b16 %v2402, %v2386
    %v4371 = vpack.c.b16 %v2419, %v2403
    %v4372 = vpack.c.b16 %v2420, %v2404
    %v4373 = vpack.c.b16 %v2421, %v2405
    %v4374 = vpack.c.b16 %v2422, %v2406
    %v4375 = vpack.c.b16 %v2423, %v2407
    %v4376 = vpack.c.b16 %v2424, %v2408
    %v4377 = vpack.c.b16 %v2425, %v2409
    %v4378 = vpack.c.b16 %v2426, %v2410
    %v4379 = vpack.c.b16 %v2427, %v2411
    %v4380 = vpack.c.b16 %v2428, %v2412
    %v4381 = vpack.c.b16 %v2429, %v2413
    %v4382 = vpack.c.b16 %v2430, %v2414
    %v4383 = vpack.c.b16 %v2431, %v2415
    %v4384 = vpack.c.b16 %v2432, %v2416
    %v4385 = vpack.c.b16 %v2433, %v2417
    %v4386 = vpack.c.b16 %v2434, %v2418
    %v4387 = vpack.c.b16 %v2451, %v2435
    %v4388 = vpack.c.b16 %v2452, %v2436
    %v4389 = vpack.c.b16 %v2453, %v2437
    %v4390 = vpack.c.b16 %v2454, %v2438
    %v4391 = vpack.c.b16 %v2455, %v2439
    %v4392 = vpack.c.b16 %v2456, %v2440
    %v4393 = vpack.c.b16 %v2457, %v2441
    %v4394 = vpack.c.b16 %v2458, %v2442
    %v4395 = vpack.c.b16 %v2459, %v2443
    %v4396 = vpack.c.b16 %v2460, %v2444
    %v4397 = vpack.c.b16 %v2461, %v2445
    %v4398 = vpack.c.b16 %v2462, %v2446
    %v4399 = vpack.c.b16 %v2463, %v2447
    %v4400 = vpack.c.b16 %v2464, %v2448
    %v4401 = vpack.c.b16 %v2465, %v2449
    %v4402 = vpack.c.b16 %v2466, %v2450
    %v4403 = vpack.c.b16 %v2483, %v2467
    %v4404 = vpack.c.b16 %v2484, %v2468
    %v4405 = vpack.c.b16 %v2485, %v2469
    %v4406 = vpack.c.b16 %v2486, %v2470
    %v4407 = vpack.c.b16 %v2487, %v2471
    %v4408 = vpack.c.b16 %v2488, %v2472
    %v4409 = vpack.c.b16 %v2489, %v2473
    %v4410 = vpack.c.b16 %v2490, %v2474
    %v4411 = vpack.c.b16 %v2491, %v2475
    %v4412 = vpack.c.b16 %v2492, %v2476
    %v4413 = vpack.c.b16 %v2493, %v2477
    %v4414 = vpack.c.b16 %v2494, %v2478
    %v4415 = vpack.c.b16 %v2495, %v2479
    %v4416 = vpack.c.b16 %v2496, %v2480
    %v4417 = vpack.c.b16 %v2497, %v2481
    %v4418 = vpack.c.b16 %v2498, %v2482
    %v4419 = vpack.c.b16 %v2515, %v2499
    %v4420 = vpack.c.b16 %v2516, %v2500
    %v4421 = vpack.c.b16 %v2517, %v2501
    %v4422 = vpack.c.b16 %v2518, %v2502
    %v4423 = vpack.c.b16 %v2519, %v2503
    %v4424 = vpack.c.b16 %v2520, %v2504
    %v4425 = vpack.c.b16 %v2521, %v2505
    %v4426 = vpack.c.b16 %v2522, %v2506
    %v4427 = vpack.c.b16 %v2523, %v2507
    %v4428 = vpack.c.b16 %v2524, %v2508
    %v4429 = vpack.c.b16 %v2525, %v2509
    %v4430 = vpack.c.b16 %v2526, %v2510
    %v4431 = vpack.c.b16 %v2527, %v2511
    %v4432 = vpack.c.b16 %v2528, %v2512
    %v4433 = vpack.c.b16 %v2529, %v2513
    %v4434 = vpack.c.b16 %v2530, %v2514
    %v4435 = vpack.c.b16 %v2547, %v2531
    %v4436 = vpack.c.b16 %v2548, %v2532
    %v4437 = vpack.c.b16 %v2549, %v2533
    %v4438 = vpack.c.b16 %v2550, %v2534
    %v4439 = vpack.c.b16 %v2551, %v2535
    %v4440 = vpack.c.b16 %v2552, %v2536
    %v4441 = vpack.c.b16 %v2553, %v2537
    %v4442 = vpack.c.b16 %v2554, %v2538
    %v4443 = vpack.c.b16 %v2555, %v2539
    %v4444 = vpack.c.b16 %v2556, %v2540
    %v4445 = vpack.c.b16 %v2557, %v2541
    %v4446 = vpack.c.b16 %v2558, %v2542
    %v4447 = vpack.c.b16 %v2559, %v2543
    %v4448 = vpack.c.b16 %v2560, %v2544
    %v4449 = vpack.c.b16 %v2561, %v2545
    %v4450 = vpack.c.b16 %v2562, %v2546
    %v4451 = vpack.c.b16 %v2579, %v2563
    %v4452 = vpack.c.b16 %v2580, %v2564
    %v4453 = vpack.c.b16 %v2581, %v2565
    %v4454 = vpack.c.b16 %v2582, %v2566
    %v4455 = vpack.c.b16 %v2583, %v2567
    %v4456 = vpack.c.b16 %v2584, %v2568
    %v4457 = vpack.c.b16 %v2585, %v2569
    %v4458 = vpack.c.b16 %v2586, %v2570
    %v4459 = vpack.c.b16 %v2587, %v2571
    %v4460 = vpack.c.b16 %v2588, %v2572
    %v4461 = vpack.c.b16 %v2589, %v2573
    %v4462 = vpack.c.b16 %v2590, %v2574
    %v4463 = vpack.c.b16 %v2591, %v2575
    %v4464 = vpack.c.b16 %v2592, %v2576
    %v4465 = vpack.c.b16 %v2593, %v2577
    %v4466 = vpack.c.b16 %v2594, %v2578
    %v4467 = vpack.c.b16 %v2611, %v2595
    %v4468 = vpack.c.b16 %v2612, %v2596
    %v4469 = vpack.c.b16 %v2613, %v2597
    %v4470 = vpack.c.b16 %v2614, %v2598
    %v4471 = vpack.c.b16 %v2615, %v2599
    %v4472 = vpack.c.b16 %v2616, %v2600
    %v4473 = vpack.c.b16 %v2617, %v2601
    %v4474 = vpack.c.b16 %v2618, %v2602
    %v4475 = vpack.c.b16 %v2619, %v2603
    %v4476 = vpack.c.b16 %v2620, %v2604
    %v4477 = vpack.c.b16 %v2621, %v2605
    %v4478 = vpack.c.b16 %v2622, %v2606
    %v4479 = vpack.c.b16 %v2623, %v2607
    %v4480 = vpack.c.b16 %v2624, %v2608
    %v4481 = vpack.c.b16 %v2625, %v2609
    %v4482 = vpack.c.b16 %v2626, %v2610
    %v4483 = vpack.c.b16 %v2643, %v2627
    %v4484 = vpack.c.b16 %v2644, %v2628
    %v4485 = vpack.c.b16 %v2645, %v2629
    %v4486 = vpack.c.b16 %v2646, %v2630
    %v4487 = vpack.c.b16 %v2647, %v2631
    %v4488 = vpack.c.b16 %v2648, %v2632
    %v4489 = vpack.c.b16 %v2649, %v2633
    %v4490 = vpack.c.b16 %v2650, %v2634
    %v4491 = vpack.c.b16 %v2651, %v2635
    %v4492 = vpack.c.b16 %v2652, %v2636
    %v4493 = vpack.c.b16 %v2653, %v2637
    %v4494 = vpack.c.b16 %v2654, %v2638
    %v4495 = vpack.c.b16 %v2655, %v2639
    %v4496 = vpack.c.b16 %v2656, %v2640
    %v4497 = vpack.c.b16 %v2657, %v2641
    %v4498 = vpack.c.b16 %v2658, %v2642
    %v4499 = vpack.c.b16 %v2675, %v2659
    %v4500 = vpack.c.b16 %v2676, %v2660
    %v4501 = vpack.c.b16 %v2677, %v2661
    %v4502 = vpack.c.b16 %v2678, %v2662
    %v4503 = vpack.c.b16 %v2679, %v2663
    %v4504 = vpack.c.b16 %v2680, %v2664
    %v4505 = vpack.c.b16 %v2681, %v2665
    %v4506 = vpack.c.b16 %v2682, %v2666
    %v4507 = vpack.c.b16 %v2683, %v2667
    %v4508 = vpack.c.b16 %v2684, %v2668
    %v4509 = vpack.c.b16 %v2685, %v2669
    %v4510 = vpack.c.b16 %v2686, %v2670
    %v4511 = vpack.c.b16 %v2687, %v2671
    %v4512 = vpack.c.b16 %v2688, %v2672
    %v4513 = vpack.c.b16 %v2689, %v2673
    %v4514 = vpack.c.b16 %v2690, %v2674
    %v4515 = vpack.c.b16 %v2707, %v2691
    %v4516 = vpack.c.b16 %v2708, %v2692
    %v4517 = vpack.c.b16 %v2709, %v2693
    %v4518 = vpack.c.b16 %v2710, %v2694
    %v4519 = vpack.c.b16 %v2711, %v2695
    %v4520 = vpack.c.b16 %v2712, %v2696
    %v4521 = vpack.c.b16 %v2713, %v2697
    %v4522 = vpack.c.b16 %v2714, %v2698
    %v4523 = vpack.c.b16 %v2715, %v2699
    %v4524 = vpack.c.b16 %v2716, %v2700
    %v4525 = vpack.c.b16 %v2717, %v2701
    %v4526 = vpack.c.b16 %v2718, %v2702
    %v4527 = vpack.c.b16 %v2719, %v2703
    %v4528 = vpack.c.b16 %v2720, %v2704
    %v4529 = vpack.c.b16 %v2721, %v2705
    %v4530 = vpack.c.b16 %v2722, %v2706
    %v4531 = vpack.c.b16 %v2739, %v2723
    %v4532 = vpack.c.b16 %v2740, %v2724
    %v4533 = vpack.c.b16 %v2741, %v2725
    %v4534 = vpack.c.b16 %v2742, %v2726
    %v4535 = vpack.c.b16 %v2743, %v2727
    %v4536 = vpack.c.b16 %v2744, %v2728
    %v4537 = vpack.c.b16 %v2745, %v2729
    %v4538 = vpack.c.b16 %v2746, %v2730
    %v4539 = vpack.c.b16 %v2747, %v2731
    %v4540 = vpack.c.b16 %v2748, %v2732
    %v4541 = vpack.c.b16 %v2749, %v2733
    %v4542 = vpack.c.b16 %v2750, %v2734
    %v4543 = vpack.c.b16 %v2751, %v2735
    %v4544 = vpack.c.b16 %v2752, %v2736
    %v4545 = vpack.c.b16 %v2753, %v2737
    %v4546 = vpack.c.b16 %v2754, %v2738
    %v4547 = vpack.c.b16 %v2771, %v2755
    %v4548 = vpack.c.b16 %v2772, %v2756
    %v4549 = vpack.c.b16 %v2773, %v2757
    %v4550 = vpack.c.b16 %v2774, %v2758
    %v4551 = vpack.c.b16 %v2775, %v2759
    %v4552 = vpack.c.b16 %v2776, %v2760
    %v4553 = vpack.c.b16 %v2777, %v2761
    %v4554 = vpack.c.b16 %v2778, %v2762
    %v4555 = vpack.c.b16 %v2779, %v2763
    %v4556 = vpack.c.b16 %v2780, %v2764
    %v4557 = vpack.c.b16 %v2781, %v2765
    %v4558 = vpack.c.b16 %v2782, %v2766
    %v4559 = vpack.c.b16 %v2783, %v2767
    %v4560 = vpack.c.b16 %v2784, %v2768
    %v4561 = vpack.c.b16 %v2785, %v2769
    %v4562 = vpack.c.b16 %v2786, %v2770
    %v4563 = vpack.c.b16 %v2803, %v2787
    %v4564 = vpack.c.b16 %v2804, %v2788
    %v4565 = vpack.c.b16 %v2805, %v2789
    %v4566 = vpack.c.b16 %v2806, %v2790
    %v4567 = vpack.c.b16 %v2807, %v2791
    %v4568 = vpack.c.b16 %v2808, %v2792
    %v4569 = vpack.c.b16 %v2809, %v2793
    %v4570 = vpack.c.b16 %v2810, %v2794
    %v4571 = vpack.c.b16 %v2811, %v2795
    %v4572 = vpack.c.b16 %v2812, %v2796
    %v4573 = vpack.c.b16 %v2813, %v2797
    %v4574 = vpack.c.b16 %v2814, %v2798
    %v4575 = vpack.c.b16 %v2815, %v2799
    %v4576 = vpack.c.b16 %v2816, %v2800
    %v4577 = vpack.c.b16 %v2817, %v2801
    %v4578 = vpack.c.b16 %v2818, %v2802
    %v4579 = vpack.c.b16 %v2835, %v2819
    %v4580 = vpack.c.b16 %v2836, %v2820
    %v4581 = vpack.c.b16 %v2837, %v2821
    %v4582 = vpack.c.b16 %v2838, %v2822
    %v4583 = vpack.c.b16 %v2839, %v2823
    %v4584 = vpack.c.b16 %v2840, %v2824
    %v4585 = vpack.c.b16 %v2841, %v2825
    %v4586 = vpack.c.b16 %v2842, %v2826
    %v4587 = vpack.c.b16 %v2843, %v2827
    %v4588 = vpack.c.b16 %v2844, %v2828
    %v4589 = vpack.c.b16 %v2845, %v2829
    %v4590 = vpack.c.b16 %v2846, %v2830
    %v4591 = vpack.c.b16 %v2847, %v2831
    %v4592 = vpack.c.b16 %v2848, %v2832
    %v4593 = vpack.c.b16 %v2849, %v2833
    %v4594 = vpack.c.b16 %v2850, %v2834
    %v4595 = vpack.c.b16 %v2867, %v2851
    %v4596 = vpack.c.b16 %v2868, %v2852
    %v4597 = vpack.c.b16 %v2869, %v2853
    %v4598 = vpack.c.b16 %v2870, %v2854
    %v4599 = vpack.c.b16 %v2871, %v2855
    %v4600 = vpack.c.b16 %v2872, %v2856
    %v4601 = vpack.c.b16 %v2873, %v2857
    %v4602 = vpack.c.b16 %v2874, %v2858
    %v4603 = vpack.c.b16 %v2875, %v2859
    %v4604 = vpack.c.b16 %v2876, %v2860
    %v4605 = vpack.c.b16 %v2877, %v2861
    %v4606 = vpack.c.b16 %v2878, %v2862
    %v4607 = vpack.c.b16 %v2879, %v2863
    %v4608 = vpack.c.b16 %v2880, %v2864
    %v4609 = vpack.c.b16 %v2881, %v2865
    %v4610 = vpack.c.b16 %v2882, %v2866
    %v4611 = vpack.c.b16 %v2899, %v2883
    %v4612 = vpack.c.b16 %v2900, %v2884
    %v4613 = vpack.c.b16 %v2901, %v2885
    %v4614 = vpack.c.b16 %v2902, %v2886
    %v4615 = vpack.c.b16 %v2903, %v2887
    %v4616 = vpack.c.b16 %v2904, %v2888
    %v4617 = vpack.c.b16 %v2905, %v2889
    %v4618 = vpack.c.b16 %v2906, %v2890
    %v4619 = vpack.c.b16 %v2907, %v2891
    %v4620 = vpack.c.b16 %v2908, %v2892
    %v4621 = vpack.c.b16 %v2909, %v2893
    %v4622 = vpack.c.b16 %v2910, %v2894
    %v4623 = vpack.c.b16 %v2911, %v2895
    %v4624 = vpack.c.b16 %v2912, %v2896
    %v4625 = vpack.c.b16 %v2913, %v2897
    %v4626 = vpack.c.b16 %v2914, %v2898
    %v4627 = vpack.c.b16 %v2931, %v2915
    %v4628 = vpack.c.b16 %v2932, %v2916
    %v4629 = vpack.c.b16 %v2933, %v2917
    %v4630 = vpack.c.b16 %v2934, %v2918
    %v4631 = vpack.c.b16 %v2935, %v2919
    %v4632 = vpack.c.b16 %v2936, %v2920
    %v4633 = vpack.c.b16 %v2937, %v2921
    %v4634 = vpack.c.b16 %v2938, %v2922
    %v4635 = vpack.c.b16 %v2939, %v2923
    %v4636 = vpack.c.b16 %v2940, %v2924
    %v4637 = vpack.c.b16 %v2941, %v2925
    %v4638 = vpack.c.b16 %v2942, %v2926
    %v4639 = vpack.c.b16 %v2943, %v2927
    %v4640 = vpack.c.b16 %v2944, %v2928
    %v4641 = vpack.c.b16 %v2945, %v2929
    %v4642 = vpack.c.b16 %v2946, %v2930
    %v4643 = vpack.c.b16 %v2963, %v2947
    %v4644 = vpack.c.b16 %v2964, %v2948
    %v4645 = vpack.c.b16 %v2965, %v2949
    %v4646 = vpack.c.b16 %v2966, %v2950
    %v4647 = vpack.c.b16 %v2967, %v2951
    %v4648 = vpack.c.b16 %v2968, %v2952
    %v4649 = vpack.c.b16 %v2969, %v2953
    %v4650 = vpack.c.b16 %v2970, %v2954
    %v4651 = vpack.c.b16 %v2971, %v2955
    %v4652 = vpack.c.b16 %v2972, %v2956
    %v4653 = vpack.c.b16 %v2973, %v2957
    %v4654 = vpack.c.b16 %v2974, %v2958
    %v4655 = vpack.c.b16 %v2975, %v2959
    %v4656 = vpack.c.b16 %v2976, %v2960
    %v4657 = vpack.c.b16 %v2977, %v2961
    %v4658 = vpack.c.b16 %v2978, %v2962
    %v4659 = vpack.c.b16 %v2995, %v2979
    %v4660 = vpack.c.b16 %v2996, %v2980
    %v4661 = vpack.c.b16 %v2997, %v2981
    %v4662 = vpack.c.b16 %v2998, %v2982
    %v4663 = vpack.c.b16 %v2999, %v2983
    %v4664 = vpack.c.b16 %v3000, %v2984
    %v4665 = vpack.c.b16 %v3001, %v2985
    %v4666 = vpack.c.b16 %v3002, %v2986
    %v4667 = vpack.c.b16 %v3003, %v2987
    %v4668 = vpack.c.b16 %v3004, %v2988
    %v4669 = vpack.c.b16 %v3005, %v2989
    %v4670 = vpack.c.b16 %v3006, %v2990
    %v4671 = vpack.c.b16 %v3007, %v2991
    %v4672 = vpack.c.b16 %v3008, %v2992
    %v4673 = vpack.c.b16 %v3009, %v2993
    %v4674 = vpack.c.b16 %v3010, %v2994
    %v4675 = vpack.c.b16 %v3027, %v3011
    %v4676 = vpack.c.b16 %v3028, %v3012
    %v4677 = vpack.c.b16 %v3029, %v3013
    %v4678 = vpack.c.b16 %v3030, %v3014
    %v4679 = vpack.c.b16 %v3031, %v3015
    %v4680 = vpack.c.b16 %v3032, %v3016
    %v4681 = vpack.c.b16 %v3033, %v3017
    %v4682 = vpack.c.b16 %v3034, %v3018
    %v4683 = vpack.c.b16 %v3035, %v3019
    %v4684 = vpack.c.b16 %v3036, %v3020
    %v4685 = vpack.c.b16 %v3037, %v3021
    %v4686 = vpack.c.b16 %v3038, %v3022
    %v4687 = vpack.c.b16 %v3039, %v3023
    %v4688 = vpack.c.b16 %v3040, %v3024
    %v4689 = vpack.c.b16 %v3041, %v3025
    %v4690 = vpack.c.b16 %v3042, %v3026
    %v4691 = vpack.c.b16 %v3059, %v3043
    %v4692 = vpack.c.b16 %v3060, %v3044
    %v4693 = vpack.c.b16 %v3061, %v3045
    %v4694 = vpack.c.b16 %v3062, %v3046
    %v4695 = vpack.c.b16 %v3063, %v3047
    %v4696 = vpack.c.b16 %v3064, %v3048
    %v4697 = vpack.c.b16 %v3065, %v3049
    %v4698 = vpack.c.b16 %v3066, %v3050
    %v4699 = vpack.c.b16 %v3067, %v3051
    %v4700 = vpack.c.b16 %v3068, %v3052
    %v4701 = vpack.c.b16 %v3069, %v3053
    %v4702 = vpack.c.b16 %v3070, %v3054
    %v4703 = vpack.c.b16 %v3071, %v3055
    %v4704 = vpack.c.b16 %v3072, %v3056
    %v4705 = vpack.c.b16 %v3073, %v3057
    %v4706 = vpack.c.b16 %v3074, %v3058
    %v4707 = vpack.c.b16 %v3091, %v3075
    %v4708 = vpack.c.b16 %v3092, %v3076
    %v4709 = vpack.c.b16 %v3093, %v3077
    %v4710 = vpack.c.b16 %v3094, %v3078
    %v4711 = vpack.c.b16 %v3095, %v3079
    %v4712 = vpack.c.b16 %v3096, %v3080
    %v4713 = vpack.c.b16 %v3097, %v3081
    %v4714 = vpack.c.b16 %v3098, %v3082
    %v4715 = vpack.c.b16 %v3099, %v3083
    %v4716 = vpack.c.b16 %v3100, %v3084
    %v4717 = vpack.c.b16 %v3101, %v3085
    %v4718 = vpack.c.b16 %v3102, %v3086
    %v4719 = vpack.c.b16 %v3103, %v3087
    %v4720 = vpack.c.b16 %v3104, %v3088
    %v4721 = vpack.c.b16 %v3105, %v3089
    %v4722 = vpack.c.b16 %v3106, %v3090
    %v4723 = vpack.c.b16 %v3123, %v3107
    %v4724 = vpack.c.b16 %v3124, %v3108
    %v4725 = vpack.c.b16 %v3125, %v3109
    %v4726 = vpack.c.b16 %v3126, %v3110
    %v4727 = vpack.c.b16 %v3127, %v3111
    %v4728 = vpack.c.b16 %v3128, %v3112
    %v4729 = vpack.c.b16 %v3129, %v3113
    %v4730 = vpack.c.b16 %v3130, %v3114
    %v4731 = vpack.c.b16 %v3131, %v3115
    %v4732 = vpack.c.b16 %v3132, %v3116
    %v4733 = vpack.c.b16 %v3133, %v3117
    %v4734 = vpack.c.b16 %v3134, %v3118
    %v4735 = vpack.c.b16 %v3135, %v3119
    %v4736 = vpack.c.b16 %v3136, %v3120
    %v4737 = vpack.c.b16 %v3137, %v3121
    %v4738 = vpack.c.b16 %v3138, %v3122
    %v4739 = vpack.c.b16 %v3155, %v3139
    %v4740 = vpack.c.b16 %v3156, %v3140
    %v4741 = vpack.c.b16 %v3157, %v3141
    %v4742 = vpack.c.b16 %v3158, %v3142
    %v4743 = vpack.c.b16 %v3159, %v3143
    %v4744 = vpack.c.b16 %v3160, %v3144
    %v4745 = vpack.c.b16 %v3161, %v3145
    %v4746 = vpack.c.b16 %v3162, %v3146
    %v4747 = vpack.c.b16 %v3163, %v3147
    %v4748 = vpack.c.b16 %v3164, %v3148
    %v4749 = vpack.c.b16 %v3165, %v3149
    %v4750 = vpack.c.b16 %v3166, %v3150
    %v4751 = vpack.c.b16 %v3167, %v3151
    %v4752 = vpack.c.b16 %v3168, %v3152
    %v4753 = vpack.c.b16 %v3169, %v3153
    %v4754 = vpack.c.b16 %v3170, %v3154
    %v4755 = vpack.c.b16 %v3187, %v3171
    %v4756 = vpack.c.b16 %v3188, %v3172
    %v4757 = vpack.c.b16 %v3189, %v3173
    %v4758 = vpack.c.b16 %v3190, %v3174
    %v4759 = vpack.c.b16 %v3191, %v3175
    %v4760 = vpack.c.b16 %v3192, %v3176
    %v4761 = vpack.c.b16 %v3193, %v3177
    %v4762 = vpack.c.b16 %v3194, %v3178
    %v4763 = vpack.c.b16 %v3195, %v3179
    %v4764 = vpack.c.b16 %v3196, %v3180
    %v4765 = vpack.c.b16 %v3197, %v3181
    %v4766 = vpack.c.b16 %v3198, %v3182
    %v4767 = vpack.c.b16 %v3199, %v3183
    %v4768 = vpack.c.b16 %v3200, %v3184
    %v4769 = vpack.c.b16 %v3201, %v3185
    %v4770 = vpack.c.b16 %v3202, %v3186
    %v4771 = vpack.c.b16 %v3219, %v3203
    %v4772 = vpack.c.b16 %v3220, %v3204
    %v4773 = vpack.c.b16 %v3221, %v3205
    %v4774 = vpack.c.b16 %v3222, %v3206
    %v4775 = vpack.c.b16 %v3223, %v3207
    %v4776 = vpack.c.b16 %v3224, %v3208
    %v4777 = vpack.c.b16 %v3225, %v3209
    %v4778 = vpack.c.b16 %v3226, %v3210
    %v4779 = vpack.c.b16 %v3227, %v3211
    %v4780 = vpack.c.b16 %v3228, %v3212
    %v4781 = vpack.c.b16 %v3229, %v3213
    %v4782 = vpack.c.b16 %v3230, %v3214
    %v4783 = vpack.c.b16 %v3231, %v3215
    %v4784 = vpack.c.b16 %v3232, %v3216
    %v4785 = vpack.c.b16 %v3233, %v3217
    %v4786 = vpack.c.b16 %v3234, %v3218
    %v4787 = vpack.c.b16 %v3251, %v3235
    %v4788 = vpack.c.b16 %v3252, %v3236
    %v4789 = vpack.c.b16 %v3253, %v3237
    %v4790 = vpack.c.b16 %v3254, %v3238
    %v4791 = vpack.c.b16 %v3255, %v3239
    %v4792 = vpack.c.b16 %v3256, %v3240
    %v4793 = vpack.c.b16 %v3257, %v3241
    %v4794 = vpack.c.b16 %v3258, %v3242
    %v4795 = vpack.c.b16 %v3259, %v3243
    %v4796 = vpack.c.b16 %v3260, %v3244
    %v4797 = vpack.c.b16 %v3261, %v3245
    %v4798 = vpack.c.b16 %v3262, %v3246
    %v4799 = vpack.c.b16 %v3263, %v3247
    %v4800 = vpack.c.b16 %v3264, %v3248
    %v4801 = vpack.c.b16 %v3265, %v3249
    %v4802 = vpack.c.b16 %v3266, %v3250
    %v4803 = vpack.c.b16 %v3283, %v3267
    %v4804 = vpack.c.b16 %v3284, %v3268
    %v4805 = vpack.c.b16 %v3285, %v3269
    %v4806 = vpack.c.b16 %v3286, %v3270
    %v4807 = vpack.c.b16 %v3287, %v3271
    %v4808 = vpack.c.b16 %v3288, %v3272
    %v4809 = vpack.c.b16 %v3289, %v3273
    %v4810 = vpack.c.b16 %v3290, %v3274
    %v4811 = vpack.c.b16 %v3291, %v3275
    %v4812 = vpack.c.b16 %v3292, %v3276
    %v4813 = vpack.c.b16 %v3293, %v3277
    %v4814 = vpack.c.b16 %v3294, %v3278
    %v4815 = vpack.c.b16 %v3295, %v3279
    %v4816 = vpack.c.b16 %v3296, %v3280
    %v4817 = vpack.c.b16 %v3297, %v3281
    %v4818 = vpack.c.b16 %v3298, %v3282
    %v4819 = vpack.c.b16 %v3315, %v3299
    %v4820 = vpack.c.b16 %v3316, %v3300
    %v4821 = vpack.c.b16 %v3317, %v3301
    %v4822 = vpack.c.b16 %v3318, %v3302
    %v4823 = vpack.c.b16 %v3319, %v3303
    %v4824 = vpack.c.b16 %v3320, %v3304
    %v4825 = vpack.c.b16 %v3321, %v3305
    %v4826 = vpack.c.b16 %v3322, %v3306
    %v4827 = vpack.c.b16 %v3323, %v3307
    %v4828 = vpack.c.b16 %v3324, %v3308
    %v4829 = vpack.c.b16 %v3325, %v3309
    %v4830 = vpack.c.b16 %v3326, %v3310
    %v4831 = vpack.c.b16 %v3327, %v3311
    %v4832 = vpack.c.b16 %v3328, %v3312
    %v4833 = vpack.c.b16 %v3329, %v3313
    %v4834 = vpack.c.b16 %v3330, %v3314
    %v4835 = vpack.c.b16 %v3347, %v3331
    %v4836 = vpack.c.b16 %v3348, %v3332
    %v4837 = vpack.c.b16 %v3349, %v3333
    %v4838 = vpack.c.b16 %v3350, %v3334
    %v4839 = vpack.c.b16 %v3351, %v3335
    %v4840 = vpack.c.b16 %v3352, %v3336
    %v4841 = vpack.c.b16 %v3353, %v3337
    %v4842 = vpack.c.b16 %v3354, %v3338
    %v4843 = vpack.c.b16 %v3355, %v3339
    %v4844 = vpack.c.b16 %v3356, %v3340
    %v4845 = vpack.c.b16 %v3357, %v3341
    %v4846 = vpack.c.b16 %v3358, %v3342
    %v4847 = vpack.c.b16 %v3359, %v3343
    %v4848 = vpack.c.b16 %v3360, %v3344
    %v4849 = vpack.c.b16 %v3361, %v3345
    %v4850 = vpack.c.b16 %v3362, %v3346
    %v4851 = vpack.c.b16 %v3379, %v3363
    %v4852 = vpack.c.b16 %v3380, %v3364
    %v4853 = vpack.c.b16 %v3381, %v3365
    %v4854 = vpack.c.b16 %v3382, %v3366
    %v4855 = vpack.c.b16 %v3383, %v3367
    %v4856 = vpack.c.b16 %v3384, %v3368
    %v4857 = vpack.c.b16 %v3385, %v3369
    %v4858 = vpack.c.b16 %v3386, %v3370
    %v4859 = vpack.c.b16 %v3387, %v3371
    %v4860 = vpack.c.b16 %v3388, %v3372
    %v4861 = vpack.c.b16 %v3389, %v3373
    %v4862 = vpack.c.b16 %v3390, %v3374
    %v4863 = vpack.c.b16 %v3391, %v3375
    %v4864 = vpack.c.b16 %v3392, %v3376
    %v4865 = vpack.c.b16 %v3393, %v3377
    %v4866 = vpack.c.b16 %v3394, %v3378
    %v4867 = vpack.c.b16 %v3411, %v3395
    %v4868 = vpack.c.b16 %v3412, %v3396
    %v4869 = vpack.c.b16 %v3413, %v3397
    %v4870 = vpack.c.b16 %v3414, %v3398
    %v4871 = vpack.c.b16 %v3415, %v3399
    %v4872 = vpack.c.b16 %v3416, %v3400
    %v4873 = vpack.c.b16 %v3417, %v3401
    %v4874 = vpack.c.b16 %v3418, %v3402
    %v4875 = vpack.c.b16 %v3419, %v3403
    %v4876 = vpack.c.b16 %v3420, %v3404
    %v4877 = vpack.c.b16 %v3421, %v3405
    %v4878 = vpack.c.b16 %v3422, %v3406
    %v4879 = vpack.c.b16 %v3423, %v3407
    %v4880 = vpack.c.b16 %v3424, %v3408
    %v4881 = vpack.c.b16 %v3425, %v3409
    %v4882 = vpack.c.b16 %v3426, %v3410
    %v4883 = vpack.c.b16 %v3443, %v3427
    %v4884 = vpack.c.b16 %v3444, %v3428
    %v4885 = vpack.c.b16 %v3445, %v3429
    %v4886 = vpack.c.b16 %v3446, %v3430
    %v4887 = vpack.c.b16 %v3447, %v3431
    %v4888 = vpack.c.b16 %v3448, %v3432
    %v4889 = vpack.c.b16 %v3449, %v3433
    %v4890 = vpack.c.b16 %v3450, %v3434
    %v4891 = vpack.c.b16 %v3451, %v3435
    %v4892 = vpack.c.b16 %v3452, %v3436
    %v4893 = vpack.c.b16 %v3453, %v3437
    %v4894 = vpack.c.b16 %v3454, %v3438
    %v4895 = vpack.c.b16 %v3455, %v3439
    %v4896 = vpack.c.b16 %v3456, %v3440
    %v4897 = vpack.c.b16 %v3457, %v3441
    %v4898 = vpack.c.b16 %v3458, %v3442
    %v4899 = vpack.c.b16 %v3475, %v3459
    %v4900 = vpack.c.b16 %v3476, %v3460
    %v4901 = vpack.c.b16 %v3477, %v3461
    %v4902 = vpack.c.b16 %v3478, %v3462
    %v4903 = vpack.c.b16 %v3479, %v3463
    %v4904 = vpack.c.b16 %v3480, %v3464
    %v4905 = vpack.c.b16 %v3481, %v3465
    %v4906 = vpack.c.b16 %v3482, %v3466
    %v4907 = vpack.c.b16 %v3483, %v3467
    %v4908 = vpack.c.b16 %v3484, %v3468
    %v4909 = vpack.c.b16 %v3485, %v3469
    %v4910 = vpack.c.b16 %v3486, %v3470
    %v4911 = vpack.c.b16 %v3487, %v3471
    %v4912 = vpack.c.b16 %v3488, %v3472
    %v4913 = vpack.c.b16 %v3489, %v3473
    %v4914 = vpack.c.b16 %v3490, %v3474
    %v4915 = vpack.c.b16 %v3507, %v3491
    %v4916 = vpack.c.b16 %v3508, %v3492
    %v4917 = vpack.c.b16 %v3509, %v3493
    %v4918 = vpack.c.b16 %v3510, %v3494
    %v4919 = vpack.c.b16 %v3511, %v3495
    %v4920 = vpack.c.b16 %v3512, %v3496
    %v4921 = vpack.c.b16 %v3513, %v3497
    %v4922 = vpack.c.b16 %v3514, %v3498
    %v4923 = vpack.c.b16 %v3515, %v3499
    %v4924 = vpack.c.b16 %v3516, %v3500
    %v4925 = vpack.c.b16 %v3517, %v3501
    %v4926 = vpack.c.b16 %v3518, %v3502
    %v4927 = vpack.c.b16 %v3519, %v3503
    %v4928 = vpack.c.b16 %v3520, %v3504
    %v4929 = vpack.c.b16 %v3521, %v3505
    %v4930 = vpack.c.b16 %v3522, %v3506
    %v4931 = vpack.c.b16 %v3539, %v3523
    %v4932 = vpack.c.b16 %v3540, %v3524
    %v4933 = vpack.c.b16 %v3541, %v3525
    %v4934 = vpack.c.b16 %v3542, %v3526
    %v4935 = vpack.c.b16 %v3543, %v3527
    %v4936 = vpack.c.b16 %v3544, %v3528
    %v4937 = vpack.c.b16 %v3545, %v3529
    %v4938 = vpack.c.b16 %v3546, %v3530
    %v4939 = vpack.c.b16 %v3547, %v3531
    %v4940 = vpack.c.b16 %v3548, %v3532
    %v4941 = vpack.c.b16 %v3549, %v3533
    %v4942 = vpack.c.b16 %v3550, %v3534
    %v4943 = vpack.c.b16 %v3551, %v3535
    %v4944 = vpack.c.b16 %v3552, %v3536
    %v4945 = vpack.c.b16 %v3553, %v3537
    %v4946 = vpack.c.b16 %v3554, %v3538
    %v4947 = vpack.c.b16 %v3571, %v3555
    %v4948 = vpack.c.b16 %v3572, %v3556
    %v4949 = vpack.c.b16 %v3573, %v3557
    %v4950 = vpack.c.b16 %v3574, %v3558
    %v4951 = vpack.c.b16 %v3575, %v3559
    %v4952 = vpack.c.b16 %v3576, %v3560
    %v4953 = vpack.c.b16 %v3577, %v3561
    %v4954 = vpack.c.b16 %v3578, %v3562
    %v4955 = vpack.c.b16 %v3579, %v3563
    %v4956 = vpack.c.b16 %v3580, %v3564
    %v4957 = vpack.c.b16 %v3581, %v3565
    %v4958 = vpack.c.b16 %v3582, %v3566
    %v4959 = vpack.c.b16 %v3583, %v3567
    %v4960 = vpack.c.b16 %v3584, %v3568
    %v4961 = vpack.c.b16 %v3585, %v3569
    %v4962 = vpack.c.b16 %v3586, %v3570
    %v4963 = vpack.c.b16 %v3603, %v3587
    %v4964 = vpack.c.b16 %v3604, %v3588
    %v4965 = vpack.c.b16 %v3605, %v3589
    %v4966 = vpack.c.b16 %v3606, %v3590
    %v4967 = vpack.c.b16 %v3607, %v3591
    %v4968 = vpack.c.b16 %v3608, %v3592
    %v4969 = vpack.c.b16 %v3609, %v3593
    %v4970 = vpack.c.b16 %v3610, %v3594
    %v4971 = vpack.c.b16 %v3611, %v3595
    %v4972 = vpack.c.b16 %v3612, %v3596
    %v4973 = vpack.c.b16 %v3613, %v3597
    %v4974 = vpack.c.b16 %v3614, %v3598
    %v4975 = vpack.c.b16 %v3615, %v3599
    %v4976 = vpack.c.b16 %v3616, %v3600
    %v4977 = vpack.c.b16 %v3617, %v3601
    %v4978 = vpack.c.b16 %v3618, %v3602
    %v4979 = vpack.c.b16 %v3635, %v3619
    %v4980 = vpack.c.b16 %v3636, %v3620
    %v4981 = vpack.c.b16 %v3637, %v3621
    %v4982 = vpack.c.b16 %v3638, %v3622
    %v4983 = vpack.c.b16 %v3639, %v3623
    %v4984 = vpack.c.b16 %v3640, %v3624
    %v4985 = vpack.c.b16 %v3641, %v3625
    %v4986 = vpack.c.b16 %v3642, %v3626
    %v4987 = vpack.c.b16 %v3643, %v3627
    %v4988 = vpack.c.b16 %v3644, %v3628
    %v4989 = vpack.c.b16 %v3645, %v3629
    %v4990 = vpack.c.b16 %v3646, %v3630
    %v4991 = vpack.c.b16 %v3647, %v3631
    %v4992 = vpack.c.b16 %v3648, %v3632
    %v4993 = vpack.c.b16 %v3649, %v3633
    %v4994 = vpack.c.b16 %v3650, %v3634
    %v4995 = vpack.c.b16 %v3667, %v3651
    %v4996 = vpack.c.b16 %v3668, %v3652
    %v4997 = vpack.c.b16 %v3669, %v3653
    %v4998 = vpack.c.b16 %v3670, %v3654
    %v4999 = vpack.c.b16 %v3671, %v3655
    %v5000 = vpack.c.b16 %v3672, %v3656
    %v5001 = vpack.c.b16 %v3673, %v3657
    %v5002 = vpack.c.b16 %v3674, %v3658
    %v5003 = vpack.c.b16 %v3675, %v3659
    %v5004 = vpack.c.b16 %v3676, %v3660
    %v5005 = vpack.c.b16 %v3677, %v3661
    %v5006 = vpack.c.b16 %v3678, %v3662
    %v5007 = vpack.c.b16 %v3679, %v3663
    %v5008 = vpack.c.b16 %v3680, %v3664
    %v5009 = vpack.c.b16 %v3681, %v3665
    %v5010 = vpack.c.b16 %v3682, %v3666
    %v5011 = vpack.c.b16 %v3699, %v3683
    %v5012 = vpack.c.b16 %v3700, %v3684
    %v5013 = vpack.c.b16 %v3701, %v3685
    %v5014 = vpack.c.b16 %v3702, %v3686
    %v5015 = vpack.c.b16 %v3703, %v3687
    %v5016 = vpack.c.b16 %v3704, %v3688
    %v5017 = vpack.c.b16 %v3705, %v3689
    %v5018 = vpack.c.b16 %v3706, %v3690
    %v5019 = vpack.c.b16 %v3707, %v3691
    %v5020 = vpack.c.b16 %v3708, %v3692
    %v5021 = vpack.c.b16 %v3709, %v3693
    %v5022 = vpack.c.b16 %v3710, %v3694
    %v5023 = vpack.c.b16 %v3711, %v3695
    %v5024 = vpack.c.b16 %v3712, %v3696
    %v5025 = vpack.c.b16 %v3713, %v3697
    %v5026 = vpack.c.b16 %v3714, %v3698
    %v5027 = vpack.c.b16 %v3731, %v3715
    %v5028 = vpack.c.b16 %v3732, %v3716
    %v5029 = vpack.c.b16 %v3733, %v3717
    %v5030 = vpack.c.b16 %v3734, %v3718
    %v5031 = vpack.c.b16 %v3735, %v3719
    %v5032 = vpack.c.b16 %v3736, %v3720
    %v5033 = vpack.c.b16 %v3737, %v3721
    %v5034 = vpack.c.b16 %v3738, %v3722
    %v5035 = vpack.c.b16 %v3739, %v3723
    %v5036 = vpack.c.b16 %v3740, %v3724
    %v5037 = vpack.c.b16 %v3741, %v3725
    %v5038 = vpack.c.b16 %v3742, %v3726
    %v5039 = vpack.c.b16 %v3743, %v3727
    %v5040 = vpack.c.b16 %v3744, %v3728
    %v5041 = vpack.c.b16 %v3745, %v3729
    %v5042 = vpack.c.b16 %v3746, %v3730
    %v5043 = vpack.c.b16 %v3763, %v3747
    %v5044 = vpack.c.b16 %v3764, %v3748
    %v5045 = vpack.c.b16 %v3765, %v3749
    %v5046 = vpack.c.b16 %v3766, %v3750
    %v5047 = vpack.c.b16 %v3767, %v3751
    %v5048 = vpack.c.b16 %v3768, %v3752
    %v5049 = vpack.c.b16 %v3769, %v3753
    %v5050 = vpack.c.b16 %v3770, %v3754
    %v5051 = vpack.c.b16 %v3771, %v3755
    %v5052 = vpack.c.b16 %v3772, %v3756
    %v5053 = vpack.c.b16 %v3773, %v3757
    %v5054 = vpack.c.b16 %v3774, %v3758
    %v5055 = vpack.c.b16 %v3775, %v3759
    %v5056 = vpack.c.b16 %v3776, %v3760
    %v5057 = vpack.c.b16 %v3777, %v3761
    %v5058 = vpack.c.b16 %v3778, %v3762
    %v5059 = vpack.c.b16 %v3795, %v3779
    %v5060 = vpack.c.b16 %v3796, %v3780
    %v5061 = vpack.c.b16 %v3797, %v3781
    %v5062 = vpack.c.b16 %v3798, %v3782
    %v5063 = vpack.c.b16 %v3799, %v3783
    %v5064 = vpack.c.b16 %v3800, %v3784
    %v5065 = vpack.c.b16 %v3801, %v3785
    %v5066 = vpack.c.b16 %v3802, %v3786
    %v5067 = vpack.c.b16 %v3803, %v3787
    %v5068 = vpack.c.b16 %v3804, %v3788
    %v5069 = vpack.c.b16 %v3805, %v3789
    %v5070 = vpack.c.b16 %v3806, %v3790
    %v5071 = vpack.c.b16 %v3807, %v3791
    %v5072 = vpack.c.b16 %v3808, %v3792
    %v5073 = vpack.c.b16 %v3809, %v3793
    %v5074 = vpack.c.b16 %v3810, %v3794
    %v5075 = vpack.c.b16 %v3827, %v3811
    %v5076 = vpack.c.b16 %v3828, %v3812
    %v5077 = vpack.c.b16 %v3829, %v3813
    %v5078 = vpack.c.b16 %v3830, %v3814
    %v5079 = vpack.c.b16 %v3831, %v3815
    %v5080 = vpack.c.b16 %v3832, %v3816
    %v5081 = vpack.c.b16 %v3833, %v3817
    %v5082 = vpack.c.b16 %v3834, %v3818
    %v5083 = vpack.c.b16 %v3835, %v3819
    %v5084 = vpack.c.b16 %v3836, %v3820
    %v5085 = vpack.c.b16 %v3837, %v3821
    %v5086 = vpack.c.b16 %v3838, %v3822
    %v5087 = vpack.c.b16 %v3839, %v3823
    %v5088 = vpack.c.b16 %v3840, %v3824
    %v5089 = vpack.c.b16 %v3841, %v3825
    %v5090 = vpack.c.b16 %v3842, %v3826
    %v5091 = vpack.c.b16 %v3859, %v3843
    %v5092 = vpack.c.b16 %v3860, %v3844
    %v5093 = vpack.c.b16 %v3861, %v3845
    %v5094 = vpack.c.b16 %v3862, %v3846
    %v5095 = vpack.c.b16 %v3863, %v3847
    %v5096 = vpack.c.b16 %v3864, %v3848
    %v5097 = vpack.c.b16 %v3865, %v3849
    %v5098 = vpack.c.b16 %v3866, %v3850
    %v5099 = vpack.c.b16 %v3867, %v3851
    %v5100 = vpack.c.b16 %v3868, %v3852
    %v5101 = vpack.c.b16 %v3869, %v3853
    %v5102 = vpack.c.b16 %v3870, %v3854
    %v5103 = vpack.c.b16 %v3871, %v3855
    %v5104 = vpack.c.b16 %v3872, %v3856
    %v5105 = vpack.c.b16 %v3873, %v3857
    %v5106 = vpack.c.b16 %v3874, %v3858
    %v5107 = vpack.c.b16 %v3891, %v3875
    %v5108 = vpack.c.b16 %v3892, %v3876
    %v5109 = vpack.c.b16 %v3893, %v3877
    %v5110 = vpack.c.b16 %v3894, %v3878
    %v5111 = vpack.c.b16 %v3895, %v3879
    %v5112 = vpack.c.b16 %v3896, %v3880
    %v5113 = vpack.c.b16 %v3897, %v3881
    %v5114 = vpack.c.b16 %v3898, %v3882
    %v5115 = vpack.c.b16 %v3899, %v3883
    %v5116 = vpack.c.b16 %v3900, %v3884
    %v5117 = vpack.c.b16 %v3901, %v3885
    %v5118 = vpack.c.b16 %v3902, %v3886
    %v5119 = vpack.c.b16 %v3903, %v3887
    %v5120 = vpack.c.b16 %v3904, %v3888
    %v5121 = vpack.c.b16 %v3905, %v3889
    %v5122 = vpack.c.b16 %v3906, %v3890
    %v5123 = vpack.c.b16 %v3923, %v3907
    %v5124 = vpack.c.b16 %v3924, %v3908
    %v5125 = vpack.c.b16 %v3925, %v3909
    %v5126 = vpack.c.b16 %v3926, %v3910
    %v5127 = vpack.c.b16 %v3927, %v3911
    %v5128 = vpack.c.b16 %v3928, %v3912
    %v5129 = vpack.c.b16 %v3929, %v3913
    %v5130 = vpack.c.b16 %v3930, %v3914
    %v5131 = vpack.c.b16 %v3931, %v3915
    %v5132 = vpack.c.b16 %v3932, %v3916
    %v5133 = vpack.c.b16 %v3933, %v3917
    %v5134 = vpack.c.b16 %v3934, %v3918
    %v5135 = vpack.c.b16 %v3935, %v3919
    %v5136 = vpack.c.b16 %v3936, %v3920
    %v5137 = vpack.c.b16 %v3937, %v3921
    %v5138 = vpack.c.b16 %v3938, %v3922
    %v5139 = vpack.c.b16 %v3955, %v3939
    %v5140 = vpack.c.b16 %v3956, %v3940
    %v5141 = vpack.c.b16 %v3957, %v3941
    %v5142 = vpack.c.b16 %v3958, %v3942
    %v5143 = vpack.c.b16 %v3959, %v3943
    %v5144 = vpack.c.b16 %v3960, %v3944
    %v5145 = vpack.c.b16 %v3961, %v3945
    %v5146 = vpack.c.b16 %v3962, %v3946
    %v5147 = vpack.c.b16 %v3963, %v3947
    %v5148 = vpack.c.b16 %v3964, %v3948
    %v5149 = vpack.c.b16 %v3965, %v3949
    %v5150 = vpack.c.b16 %v3966, %v3950
    %v5151 = vpack.c.b16 %v3967, %v3951
    %v5152 = vpack.c.b16 %v3968, %v3952
    %v5153 = vpack.c.b16 %v3969, %v3953
    %v5154 = vpack.c.b16 %v3970, %v3954
    %v5155 = vpack.c.b16 %v3987, %v3971
    %v5156 = vpack.c.b16 %v3988, %v3972
    %v5157 = vpack.c.b16 %v3989, %v3973
    %v5158 = vpack.c.b16 %v3990, %v3974
    %v5159 = vpack.c.b16 %v3991, %v3975
    %v5160 = vpack.c.b16 %v3992, %v3976
    %v5161 = vpack.c.b16 %v3993, %v3977
    %v5162 = vpack.c.b16 %v3994, %v3978
    %v5163 = vpack.c.b16 %v3995, %v3979
    %v5164 = vpack.c.b16 %v3996, %v3980
    %v5165 = vpack.c.b16 %v3997, %v3981
    %v5166 = vpack.c.b16 %v3998, %v3982
    %v5167 = vpack.c.b16 %v3999, %v3983
    %v5168 = vpack.c.b16 %v4000, %v3984
    %v5169 = vpack.c.b16 %v4001, %v3985
    %v5170 = vpack.c.b16 %v4002, %v3986
    %v5171 = vpack.c.b16 %v4019, %v4003
    %v5172 = vpack.c.b16 %v4020, %v4004
    %v5173 = vpack.c.b16 %v4021, %v4005
    %v5174 = vpack.c.b16 %v4022, %v4006
    %v5175 = vpack.c.b16 %v4023, %v4007
    %v5176 = vpack.c.b16 %v4024, %v4008
    %v5177 = vpack.c.b16 %v4025, %v4009
    %v5178 = vpack.c.b16 %v4026, %v4010
    %v5179 = vpack.c.b16 %v4027, %v4011
    %v5180 = vpack.c.b16 %v4028, %v4012
    %v5181 = vpack.c.b16 %v4029, %v4013
    %v5182 = vpack.c.b16 %v4030, %v4014
    %v5183 = vpack.c.b16 %v4031, %v4015
    %v5184 = vpack.c.b16 %v4032, %v4016
    %v5185 = vpack.c.b16 %v4033, %v4017
    %v5186 = vpack.c.b16 %v4034, %v4018
    %v5187 = vpack.c.b16 %v4051, %v4035
    %v5188 = vpack.c.b16 %v4052, %v4036
    %v5189 = vpack.c.b16 %v4053, %v4037
    %v5190 = vpack.c.b16 %v4054, %v4038
    %v5191 = vpack.c.b16 %v4055, %v4039
    %v5192 = vpack.c.b16 %v4056, %v4040
    %v5193 = vpack.c.b16 %v4057, %v4041
    %v5194 = vpack.c.b16 %v4058, %v4042
    %v5195 = vpack.c.b16 %v4059, %v4043
    %v5196 = vpack.c.b16 %v4060, %v4044
    %v5197 = vpack.c.b16 %v4061, %v4045
    %v5198 = vpack.c.b16 %v4062, %v4046
    %v5199 = vpack.c.b16 %v4063, %v4047
    %v5200 = vpack.c.b16 %v4064, %v4048
    %v5201 = vpack.c.b16 %v4065, %v4049
    %v5202 = vpack.c.b16 %v4066, %v4050
    %v5203 = vpack.c.b16 %v4083, %v4067
    %v5204 = vpack.c.b16 %v4084, %v4068
    %v5205 = vpack.c.b16 %v4085, %v4069
    %v5206 = vpack.c.b16 %v4086, %v4070
    %v5207 = vpack.c.b16 %v4087, %v4071
    %v5208 = vpack.c.b16 %v4088, %v4072
    %v5209 = vpack.c.b16 %v4089, %v4073
    %v5210 = vpack.c.b16 %v4090, %v4074
    %v5211 = vpack.c.b16 %v4091, %v4075
    %v5212 = vpack.c.b16 %v4092, %v4076
    %v5213 = vpack.c.b16 %v4093, %v4077
    %v5214 = vpack.c.b16 %v4094, %v4078
    %v5215 = vpack.c.b16 %v4095, %v4079
    %v5216 = vpack.c.b16 %v4096, %v4080
    %v5217 = vpack.c.b16 %v4097, %v4081
    %v5218 = vpack.c.b16 %v4098, %v4082
    %v5219 = vpack.c.b16 %v4115, %v4099
    %v5220 = vpack.c.b16 %v4116, %v4100
    %v5221 = vpack.c.b16 %v4117, %v4101
    %v5222 = vpack.c.b16 %v4118, %v4102
    %v5223 = vpack.c.b16 %v4119, %v4103
    %v5224 = vpack.c.b16 %v4120, %v4104
    %v5225 = vpack.c.b16 %v4121, %v4105
    %v5226 = vpack.c.b16 %v4122, %v4106
    %v5227 = vpack.c.b16 %v4123, %v4107
    %v5228 = vpack.c.b16 %v4124, %v4108
    %v5229 = vpack.c.b16 %v4125, %v4109
    %v5230 = vpack.c.b16 %v4126, %v4110
    %v5231 = vpack.c.b16 %v4127, %v4111
    %v5232 = vpack.c.b16 %v4128, %v4112
    %v5233 = vpack.c.b16 %v4129, %v4113
    %v5234 = vpack.c.b16 %v4130, %v4114
    %v5235 = vpack.c.b16 %v4147, %v4131
    %v5236 = vpack.c.b16 %v4148, %v4132
    %v5237 = vpack.c.b16 %v4149, %v4133
    %v5238 = vpack.c.b16 %v4150, %v4134
    %v5239 = vpack.c.b16 %v4151, %v4135
    %v5240 = vpack.c.b16 %v4152, %v4136
    %v5241 = vpack.c.b16 %v4153, %v4137
    %v5242 = vpack.c.b16 %v4154, %v4138
    %v5243 = vpack.c.b16 %v4155, %v4139
    %v5244 = vpack.c.b16 %v4156, %v4140
    %v5245 = vpack.c.b16 %v4157, %v4141
    %v5246 = vpack.c.b16 %v4158, %v4142
    %v5247 = vpack.c.b16 %v4159, %v4143
    %v5248 = vpack.c.b16 %v4160, %v4144
    %v5249 = vpack.c.b16 %v4161, %v4145
    %v5250 = vpack.c.b16 %v4162, %v4146
    %v5251 = vpack.c.b16 %v4179, %v4163
    %v5252 = vpack.c.b16 %v4180, %v4164
    %v5253 = vpack.c.b16 %v4181, %v4165
    %v5254 = vpack.c.b16 %v4182, %v4166
    %v5255 = vpack.c.b16 %v4183, %v4167
    %v5256 = vpack.c.b16 %v4184, %v4168
    %v5257 = vpack.c.b16 %v4185, %v4169
    %v5258 = vpack.c.b16 %v4186, %v4170
    %v5259 = vpack.c.b16 %v4187, %v4171
    %v5260 = vpack.c.b16 %v4188, %v4172
    %v5261 = vpack.c.b16 %v4189, %v4173
    %v5262 = vpack.c.b16 %v4190, %v4174
    %v5263 = vpack.c.b16 %v4191, %v4175
    %v5264 = vpack.c.b16 %v4192, %v4176
    %v5265 = vpack.c.b16 %v4193, %v4177
    %v5266 = vpack.c.b16 %v4194, %v4178
    %v5267 = vpack.c.b16 %v4211, %v4195
    %v5268 = vpack.c.b16 %v4212, %v4196
    %v5269 = vpack.c.b16 %v4213, %v4197
    %v5270 = vpack.c.b16 %v4214, %v4198
    %v5271 = vpack.c.b16 %v4215, %v4199
    %v5272 = vpack.c.b16 %v4216, %v4200
    %v5273 = vpack.c.b16 %v4217, %v4201
    %v5274 = vpack.c.b16 %v4218, %v4202
    %v5275 = vpack.c.b16 %v4219, %v4203
    %v5276 = vpack.c.b16 %v4220, %v4204
    %v5277 = vpack.c.b16 %v4221, %v4205
    %v5278 = vpack.c.b16 %v4222, %v4206
    %v5279 = vpack.c.b16 %v4223, %v4207
    %v5280 = vpack.c.b16 %v4224, %v4208
    %v5281 = vpack.c.b16 %v4225, %v4209
    %v5282 = vpack.c.b16 %v4226, %v4210
    %v5283 = vpack.c.b16 %v4243, %v4227
    %v5284 = vpack.c.b16 %v4244, %v4228
    %v5285 = vpack.c.b16 %v4245, %v4229
    %v5286 = vpack.c.b16 %v4246, %v4230
    %v5287 = vpack.c.b16 %v4247, %v4231
    %v5288 = vpack.c.b16 %v4248, %v4232
    %v5289 = vpack.c.b16 %v4249, %v4233
    %v5290 = vpack.c.b16 %v4250, %v4234
    %v5291 = vpack.c.b16 %v4251, %v4235
    %v5292 = vpack.c.b16 %v4252, %v4236
    %v5293 = vpack.c.b16 %v4253, %v4237
    %v5294 = vpack.c.b16 %v4254, %v4238
    %v5295 = vpack.c.b16 %v4255, %v4239
    %v5296 = vpack.c.b16 %v4256, %v4240
    %v5297 = vpack.c.b16 %v4257, %v4241
    %v5298 = vpack.c.b16 %v4258, %v4242
    %v5299 = vpack.c.b16 %v4275, %v4259
    %v5300 = vpack.c.b16 %v4276, %v4260
    %v5301 = vpack.c.b16 %v4277, %v4261
    %v5302 = vpack.c.b16 %v4278, %v4262
    %v5303 = vpack.c.b16 %v4279, %v4263
    %v5304 = vpack.c.b16 %v4280, %v4264
    %v5305 = vpack.c.b16 %v4281, %v4265
    %v5306 = vpack.c.b16 %v4282, %v4266
    %v5307 = vpack.c.b16 %v4283, %v4267
    %v5308 = vpack.c.b16 %v4284, %v4268
    %v5309 = vpack.c.b16 %v4285, %v4269
    %v5310 = vpack.c.b16 %v4286, %v4270
    %v5311 = vpack.c.b16 %v4287, %v4271
    %v5312 = vpack.c.b16 %v4288, %v4272
    %v5313 = vpack.c.b16 %v4289, %v4273
    %v5314 = vpack.c.b16 %v4290, %v4274
    %6339 = vmatprep.subr.bf16.mxu0 %v4292
    %6340 = vmatpush1.bf16.msra.mxu0 %v4291
    %6341 = vmatprep.subr.bf16.mxu0 %v4308
    %6342 = vmatpush1.bf16.msra.mxu0 %v4307
    %6343 = vmatprep.subr.bf16.mxu0 %v4324
    %6344 = vmatpush1.bf16.msra.mxu0 %v4323
    %6345 = vmatprep.subr.bf16.mxu0 %v4340
    %6346 = vmatpush1.bf16.msra.mxu0 %v4339
    %6347 = vmatprep.subr.bf16.mxu0 %v4356
    %6348 = vmatpush1.bf16.msra.mxu0 %v4355
    %6349 = vmatprep.subr.bf16.mxu0 %v4372
    %6350 = vmatpush1.bf16.msra.mxu0 %v4371
    %6351 = vmatprep.subr.bf16.mxu0 %v4388
    %6352 = vmatpush1.bf16.msra.mxu0 %v4387
    %6353 = vmatprep.subr.bf16.mxu0 %v4404
    %6354 = vmatpush1.bf16.msra.mxu0 %v4403
    %6355 = vmatprep.subr.bf16.mxu0 %v4420
    %6356 = vmatpush1.bf16.msra.mxu0 %v4419
    %6357 = vmatprep.subr.bf16.mxu0 %v4436
    %6358 = vmatpush1.bf16.msra.mxu0 %v4435
    %6359 = vmatprep.subr.bf16.mxu0 %v4452
    %6360 = vmatpush1.bf16.msra.mxu0 %v4451
    %6361 = vmatprep.subr.bf16.mxu0 %v4468
    %6362 = vmatpush1.bf16.msra.mxu0 %v4467
    %6363 = vmatprep.subr.bf16.mxu0 %v4484
    %6364 = vmatpush1.bf16.msra.mxu0 %v4483
    %6365 = vmatprep.subr.bf16.mxu0 %v4500
    %6366 = vmatpush1.bf16.msra.mxu0 %v4499
    %6367 = vmatprep.subr.bf16.mxu0 %v4516
    %6368 = vmatpush1.bf16.msra.mxu0 %v4515
    %6369 = vmatprep.subr.bf16.mxu0 %v4532
    %6370 = vmatpush1.bf16.msra.mxu0 %v4531
    %6371 = vmatprep.mubr.bf16.mxu0 %v1199
    %6372 = vmatmul.mubr.bf16.gmra.mrb[0].mxu0 %v1185
    %v6373 = vpop.f32.mrb[0].mxu0
    %v6374 = vadd.f32 %v1084, %v6373
    %v6375 = vpop.f32.mrb[0].mxu0
    %v6376 = vadd.f32 %v1088, %v6375
    %v6377 = vpop.f32.mrb[0].mxu0
    %v6378 = vpop.f32.mrb[0].mxu0
    %6379 = vdwg.mxu0
    %6380 = vmatprep.subr.bf16.mxu0 %v4548
    %6381 = vmatpush1.bf16.msra.mxu0 %v4547
    %6382 = vmatprep.subr.bf16.mxu0 %v4564
    %6383 = vmatpush1.bf16.msra.mxu0 %v4563
    %6384 = vmatprep.subr.bf16.mxu0 %v4580
    %6385 = vmatpush1.bf16.msra.mxu0 %v4579
    %6386 = vmatprep.subr.bf16.mxu0 %v4596
    %6387 = vmatpush1.bf16.msra.mxu0 %v4595
    %6388 = vmatprep.subr.bf16.mxu0 %v4612
    %6389 = vmatpush1.bf16.msra.mxu0 %v4611
    %6390 = vmatprep.subr.bf16.mxu0 %v4628
    %6391 = vmatpush1.bf16.msra.mxu0 %v4627
    %6392 = vmatprep.subr.bf16.mxu0 %v4644
    %6393 = vmatpush1.bf16.msra.mxu0 %v4643
    %6394 = vmatprep.subr.bf16.mxu0 %v4660
    %6395 = vmatpush1.bf16.msra.mxu0 %v4659
    %6396 = vmatprep.subr.bf16.mxu0 %v4676
    %6397 = vmatpush1.bf16.msra.mxu0 %v4675
    %6398 = vmatprep.subr.bf16.mxu0 %v4692
    %6399 = vmatpush1.bf16.msra.mxu0 %v4691
    %6400 = vmatprep.subr.bf16.mxu0 %v4708
    %6401 = vmatpush1.bf16.msra.mxu0 %v4707
    %6402 = vmatprep.subr.bf16.mxu0 %v4724
    %6403 = vmatpush1.bf16.msra.mxu0 %v4723
    %6404 = vmatprep.subr.bf16.mxu0 %v4740
    %6405 = vmatpush1.bf16.msra.mxu0 %v4739
    %6406 = vmatprep.subr.bf16.mxu0 %v4756
    %6407 = vmatpush1.bf16.msra.mxu0 %v4755
    %6408 = vmatprep.subr.bf16.mxu0 %v4772
    %6409 = vmatpush1.bf16.msra.mxu0 %v4771
    %6410 = vmatprep.subr.bf16.mxu0 %v4788
    %6411 = vmatpush1.bf16.msra.mxu0 %v4787
    %6412 = vmatprep.mubr.bf16.mxu0 %v1209
    %6413 = vmatmul.mubr.bf16.gmra.mrb[0].mxu0 %v1207
    %v6414 = vpop.f32.mrb[0].mxu0
    %v6415 = vadd.f32 %v6374, %v6414
    %v6416 = vpop.f32.mrb[0].mxu0
    %v6417 = vadd.f32 %v6376, %v6416
    %v6418 = vpop.f32.mrb[0].mxu0
    %v6419 = vpop.f32.mrb[0].mxu0
    %6420 = vdwg.mxu0
    %6421 = vmatprep.subr.bf16.mxu0 %v4804
    %6422 = vmatpush1.bf16.msra.mxu0 %v4803
    %6423 = vmatprep.subr.bf16.mxu0 %v4820
    %6424 = vmatpush1.bf16.msra.mxu0 %v4819
    %6425 = vmatprep.subr.bf16.mxu0 %v4836
    %6426 = vmatpush1.bf16.msra.mxu0 %v4835
    %6427 = vmatprep.subr.bf16.mxu0 %v4852
    %6428 = vmatpush1.bf16.msra.mxu0 %v4851
    %6429 = vmatprep.subr.bf16.mxu0 %v4868
    %6430 = vmatpush1.bf16.msra.mxu0 %v4867
    %6431 = vmatprep.subr.bf16.mxu0 %v4884
    %6432 = vmatpush1.bf16.msra.mxu0 %v4883
    %6433 = vmatprep.subr.bf16.mxu0 %v4900
    %6434 = vmatpush1.bf16.msra.mxu0 %v4899
    %6435 = vmatprep.subr.bf16.mxu0 %v4916
    %6436 = vmatpush1.bf16.msra.mxu0 %v4915
    %6437 = vmatprep.subr.bf16.mxu0 %v4932
    %6438 = vmatpush1.bf16.msra.mxu0 %v4931
    %6439 = vmatprep.subr.bf16.mxu0 %v4948
    %6440 = vmatpush1.bf16.msra.mxu0 %v4947
    %6441 = vmatprep.subr.bf16.mxu0 %v4964
    %6442 = vmatpush1.bf16.msra.mxu0 %v4963
    %6443 = vmatprep.subr.bf16.mxu0 %v4980
    %6444 = vmatpush1.bf16.msra.mxu0 %v4979
    %6445 = vmatprep.subr.bf16.mxu0 %v4996
    %6446 = vmatpush1.bf16.msra.mxu0 %v4995
    %6447 = vmatprep.subr.bf16.mxu0 %v5012
    %6448 = vmatpush1.bf16.msra.mxu0 %v5011
    %6449 = vmatprep.subr.bf16.mxu0 %v5028
    %6450 = vmatpush1.bf16.msra.mxu0 %v5027
    %6451 = vmatprep.subr.bf16.mxu0 %v5044
    %6452 = vmatpush1.bf16.msra.mxu0 %v5043
    %6453 = vmatprep.mubr.bf16.mxu0 %v1206
    %6454 = vmatmul.mubr.bf16.gmra.mrb[0].mxu0 %v1192
    %v6455 = vpop.f32.mrb[0].mxu0
    %v6456 = vadd.f32 %v6415, %v6455
    %v6457 = vpop.f32.mrb[0].mxu0
    %v6458 = vadd.f32 %v6417, %v6457
    %v6459 = vpop.f32.mrb[0].mxu0
    %v6460 = vpop.f32.mrb[0].mxu0
    %6461 = vdwg.mxu0
    %6462 = vmatprep.subr.bf16.mxu0 %v5060
    %6463 = vmatpush1.bf16.msra.mxu0 %v5059
    %6464 = vmatprep.subr.bf16.mxu0 %v5076
    %6465 = vmatpush1.bf16.msra.mxu0 %v5075
    %6466 = vmatprep.subr.bf16.mxu0 %v5092
    %6467 = vmatpush1.bf16.msra.mxu0 %v5091
    %6468 = vmatprep.subr.bf16.mxu0 %v5108
    %6469 = vmatpush1.bf16.msra.mxu0 %v5107
    %6470 = vmatprep.subr.bf16.mxu0 %v5124
    %6471 = vmatpush1.bf16.msra.mxu0 %v5123
    %6472 = vmatprep.subr.bf16.mxu0 %v5140
    %6473 = vmatpush1.bf16.msra.mxu0 %v5139
    %6474 = vmatprep.subr.bf16.mxu0 %v5156
    %6475 = vmatpush1.bf16.msra.mxu0 %v5155
    %6476 = vmatprep.subr.bf16.mxu0 %v5172
    %6477 = vmatpush1.bf16.msra.mxu0 %v5171
    %6478 = vmatprep.subr.bf16.mxu0 %v5188
    %6479 = vmatpush1.bf16.msra.mxu0 %v5187
    %6480 = vmatprep.subr.bf16.mxu0 %v5204
    %6481 = vmatpush1.bf16.msra.mxu0 %v5203
    %6482 = vmatprep.subr.bf16.mxu0 %v5220
    %6483 = vmatpush1.bf16.msra.mxu0 %v5219
    %6484 = vmatprep.subr.bf16.mxu0 %v5236
    %6485 = vmatpush1.bf16.msra.mxu0 %v5235
    %6486 = vmatprep.subr.bf16.mxu0 %v5252
    %6487 = vmatpush1.bf16.msra.mxu0 %v5251
    %6488 = vmatprep.subr.bf16.mxu0 %v5268
    %6489 = vmatpush1.bf16.msra.mxu0 %v5267
    %6490 = vmatprep.subr.bf16.mxu0 %v5284
    %6491 = vmatpush1.bf16.msra.mxu0 %v5283
    %6492 = vmatprep.subr.bf16.mxu0 %v5300
    %6493 = vmatpush1.bf16.msra.mxu0 %v5299
    %6494 = vmatprep.mubr.bf16.mxu0 %v1210
    %6495 = vmatmul.mubr.bf16.gmra.mrb[0].mxu0 %v1208
    %v6496 = vpop.f32.mrb[0].mxu0
    %v6497 = vadd.f32 %v6456, %v6496
    %v6498 = vpop.f32.mrb[0].mxu0
    %v6499 = vadd.f32 %v6458, %v6498
    %v6500 = vpop.f32.mrb[0].mxu0
    %v6501 = vpop.f32.mrb[0].mxu0
    %6502 = vdwg.mxu0
    %6503 = vmatprep.subr.bf16.mxu0 %v4294
    %6504 = vmatpush1.bf16.msra.mxu0 %v4293
    %6505 = vmatprep.subr.bf16.mxu0 %v4310
    %6506 = vmatpush1.bf16.msra.mxu0 %v4309
    %6507 = vmatprep.subr.bf16.mxu0 %v4326
    %6508 = vmatpush1.bf16.msra.mxu0 %v4325
    %6509 = vmatprep.subr.bf16.mxu0 %v4342
    %6510 = vmatpush1.bf16.msra.mxu0 %v4341
    %6511 = vmatprep.subr.bf16.mxu0 %v4358
    %6512 = vmatpush1.bf16.msra.mxu0 %v4357
    %6513 = vmatprep.subr.bf16.mxu0 %v4374
    %6514 = vmatpush1.bf16.msra.mxu0 %v4373
    %6515 = vmatprep.subr.bf16.mxu0 %v4390
    %6516 = vmatpush1.bf16.msra.mxu0 %v4389
    %6517 = vmatprep.subr.bf16.mxu0 %v4406
    %6518 = vmatpush1.bf16.msra.mxu0 %v4405
    %6519 = vmatprep.subr.bf16.mxu0 %v4422
    %6520 = vmatpush1.bf16.msra.mxu0 %v4421
    %6521 = vmatprep.subr.bf16.mxu0 %v4438
    %6522 = vmatpush1.bf16.msra.mxu0 %v4437
    %6523 = vmatprep.subr.bf16.mxu0 %v4454
    %6524 = vmatpush1.bf16.msra.mxu0 %v4453
    %6525 = vmatprep.subr.bf16.mxu0 %v4470
    %6526 = vmatpush1.bf16.msra.mxu0 %v4469
    %6527 = vmatprep.subr.bf16.mxu0 %v4486
    %6528 = vmatpush1.bf16.msra.mxu0 %v4485
    %6529 = vmatprep.subr.bf16.mxu0 %v4502
    %6530 = vmatpush1.bf16.msra.mxu0 %v4501
    %6531 = vmatprep.subr.bf16.mxu0 %v4518
    %6532 = vmatpush1.bf16.msra.mxu0 %v4517
    %6533 = vmatprep.subr.bf16.mxu0 %v4534
    %6534 = vmatpush1.bf16.msra.mxu0 %v4533
    %6535 = vmatprep.mubr.bf16.mxu0 %v1199
    %6536 = vmatmul.mubr.bf16.gmra.mrb[0].mxu0 %v1185
    %v6537 = vpop.f32.mrb[0].mxu0
    %v6538 = vadd.f32 %v1092, %v6537
    %v6539 = vpop.f32.mrb[0].mxu0
    %v6540 = vadd.f32 %v1096, %v6539
    %v6541 = vpop.f32.mrb[0].mxu0
    %v6542 = vpop.f32.mrb[0].mxu0
    %6543 = vdwg.mxu0
    %6544 = vmatprep.subr.bf16.mxu0 %v4550
    %6545 = vmatpush1.bf16.msra.mxu0 %v4549
    %6546 = vmatprep.subr.bf16.mxu0 %v4566
    %6547 = vmatpush1.bf16.msra.mxu0 %v4565
    %6548 = vmatprep.subr.bf16.mxu0 %v4582
    %6549 = vmatpush1.bf16.msra.mxu0 %v4581
    %6550 = vmatprep.subr.bf16.mxu0 %v4598
    %6551 = vmatpush1.bf16.msra.mxu0 %v4597
    %6552 = vmatprep.subr.bf16.mxu0 %v4614
    %6553 = vmatpush1.bf16.msra.mxu0 %v4613
    %6554 = vmatprep.subr.bf16.mxu0 %v4630
    %6555 = vmatpush1.bf16.msra.mxu0 %v4629
    %6556 = vmatprep.subr.bf16.mxu0 %v4646
    %6557 = vmatpush1.bf16.msra.mxu0 %v4645
    %6558 = vmatprep.subr.bf16.mxu0 %v4662
    %6559 = vmatpush1.bf16.msra.mxu0 %v4661
    %6560 = vmatprep.subr.bf16.mxu0 %v4678
    %6561 = vmatpush1.bf16.msra.mxu0 %v4677
    %6562 = vmatprep.subr.bf16.mxu0 %v4694
    %6563 = vmatpush1.bf16.msra.mxu0 %v4693
    %6564 = vmatprep.subr.bf16.mxu0 %v4710
    %6565 = vmatpush1.bf16.msra.mxu0 %v4709
    %6566 = vmatprep.subr.bf16.mxu0 %v4726
    %6567 = vmatpush1.bf16.msra.mxu0 %v4725
    %6568 = vmatprep.subr.bf16.mxu0 %v4742
    %6569 = vmatpush1.bf16.msra.mxu0 %v4741
    %6570 = vmatprep.subr.bf16.mxu0 %v4758
    %6571 = vmatpush1.bf16.msra.mxu0 %v4757
    %6572 = vmatprep.subr.bf16.mxu0 %v4774
    %6573 = vmatpush1.bf16.msra.mxu0 %v4773
    %6574 = vmatprep.subr.bf16.mxu0 %v4790
    %6575 = vmatpush1.bf16.msra.mxu0 %v4789
    %6576 = vmatprep.mubr.bf16.mxu0 %v1209
    %6577 = vmatmul.mubr.bf16.gmra.mrb[0].mxu0 %v1207
    %v6578 = vpop.f32.mrb[0].mxu0
    %v6579 = vadd.f32 %v6538, %v6578
    %v6580 = vpop.f32.mrb[0].mxu0
    %v6581 = vadd.f32 %v6540, %v6580
    %v6582 = vpop.f32.mrb[0].mxu0
    %v6583 = vpop.f32.mrb[0].mxu0
    %6584 = vdwg.mxu0
    %6585 = vmatprep.subr.bf16.mxu0 %v4806
    %6586 = vmatpush1.bf16.msra.mxu0 %v4805
    %6587 = vmatprep.subr.bf16.mxu0 %v4822
    %6588 = vmatpush1.bf16.msra.mxu0 %v4821
    %6589 = vmatprep.subr.bf16.mxu0 %v4838
    %6590 = vmatpush1.bf16.msra.mxu0 %v4837
    %6591 = vmatprep.subr.bf16.mxu0 %v4854
    %6592 = vmatpush1.bf16.msra.mxu0 %v4853
    %6593 = vmatprep.subr.bf16.mxu0 %v4870
    %6594 = vmatpush1.bf16.msra.mxu0 %v4869
    %6595 = vmatprep.subr.bf16.mxu0 %v4886
    %6596 = vmatpush1.bf16.msra.mxu0 %v4885
    %6597 = vmatprep.subr.bf16.mxu0 %v4902
    %6598 = vmatpush1.bf16.msra.mxu0 %v4901
    %6599 = vmatprep.subr.bf16.mxu0 %v4918
    %6600 = vmatpush1.bf16.msra.mxu0 %v4917
    %6601 = vmatprep.subr.bf16.mxu0 %v4934
    %6602 = vmatpush1.bf16.msra.mxu0 %v4933
    %6603 = vmatprep.subr.bf16.mxu0 %v4950
    %6604 = vmatpush1.bf16.msra.mxu0 %v4949
    %6605 = vmatprep.subr.bf16.mxu0 %v4966
    %6606 = vmatpush1.bf16.msra.mxu0 %v4965
    %6607 = vmatprep.subr.bf16.mxu0 %v4982
    %6608 = vmatpush1.bf16.msra.mxu0 %v4981
    %6609 = vmatprep.subr.bf16.mxu0 %v4998
    %6610 = vmatpush1.bf16.msra.mxu0 %v4997
    %6611 = vmatprep.subr.bf16.mxu0 %v5014
    %6612 = vmatpush1.bf16.msra.mxu0 %v5013
    %6613 = vmatprep.subr.bf16.mxu0 %v5030
    %6614 = vmatpush1.bf16.msra.mxu0 %v5029
    %6615 = vmatprep.subr.bf16.mxu0 %v5046
    %6616 = vmatpush1.bf16.msra.mxu0 %v5045
    %6617 = vmatprep.mubr.bf16.mxu0 %v1206
    %6618 = vmatmul.mubr.bf16.gmra.mrb[0].mxu0 %v1192
    %v6619 = vpop.f32.mrb[0].mxu0
    %v6620 = vadd.f32 %v6579, %v6619
    %v6621 = vpop.f32.mrb[0].mxu0
    %v6622 = vadd.f32 %v6581, %v6621
    %v6623 = vpop.f32.mrb[0].mxu0
    %v6624 = vpop.f32.mrb[0].mxu0
    %6625 = vdwg.mxu0
    %6626 = vmatprep.subr.bf16.mxu0 %v5062
    %6627 = vmatpush1.bf16.msra.mxu0 %v5061
    %6628 = vmatprep.subr.bf16.mxu0 %v5078
    %6629 = vmatpush1.bf16.msra.mxu0 %v5077
    %6630 = vmatprep.subr.bf16.mxu0 %v5094
    %6631 = vmatpush1.bf16.msra.mxu0 %v5093
    %6632 = vmatprep.subr.bf16.mxu0 %v5110
    %6633 = vmatpush1.bf16.msra.mxu0 %v5109
    %6634 = vmatprep.subr.bf16.mxu0 %v5126
    %6635 = vmatpush1.bf16.msra.mxu0 %v5125
    %6636 = vmatprep.subr.bf16.mxu0 %v5142
    %6637 = vmatpush1.bf16.msra.mxu0 %v5141
    %6638 = vmatprep.subr.bf16.mxu0 %v5158
    %6639 = vmatpush1.bf16.msra.mxu0 %v5157
    %6640 = vmatprep.subr.bf16.mxu0 %v5174
    %6641 = vmatpush1.bf16.msra.mxu0 %v5173
    %6642 = vmatprep.subr.bf16.mxu0 %v5190
    %6643 = vmatpush1.bf16.msra.mxu0 %v5189
    %6644 = vmatprep.subr.bf16.mxu0 %v5206
    %6645 = vmatpush1.bf16.msra.mxu0 %v5205
    %6646 = vmatprep.subr.bf16.mxu0 %v5222
    %6647 = vmatpush1.bf16.msra.mxu0 %v5221
    %6648 = vmatprep.subr.bf16.mxu0 %v5238
    %6649 = vmatpush1.bf16.msra.mxu0 %v5237
    %6650 = vmatprep.subr.bf16.mxu0 %v5254
    %6651 = vmatpush1.bf16.msra.mxu0 %v5253
    %6652 = vmatprep.subr.bf16.mxu0 %v5270
    %6653 = vmatpush1.bf16.msra.mxu0 %v5269
    %6654 = vmatprep.subr.bf16.mxu0 %v5286
    %6655 = vmatpush1.bf16.msra.mxu0 %v5285
    %6656 = vmatprep.subr.bf16.mxu0 %v5302
    %6657 = vmatpush1.bf16.msra.mxu0 %v5301
    %6658 = vmatprep.mubr.bf16.mxu0 %v1210
    %6659 = vmatmul.mubr.bf16.gmra.mrb[0].mxu0 %v1208
    %v6660 = vpop.f32.mrb[0].mxu0
    %v6661 = vadd.f32 %v6620, %v6660
    %v6662 = vpop.f32.mrb[0].mxu0
    %v6663 = vadd.f32 %v6622, %v6662
    %v6664 = vpop.f32.mrb[0].mxu0
    %v6665 = vpop.f32.mrb[0].mxu0
    %6666 = vdwg.mxu0
    %6667 = vmatprep.subr.bf16.mxu0 %v4296
    %6668 = vmatpush1.bf16.msra.mxu0 %v4295
    %6669 = vmatprep.subr.bf16.mxu0 %v4312
    %6670 = vmatpush1.bf16.msra.mxu0 %v4311
    %6671 = vmatprep.subr.bf16.mxu0 %v4328
    %6672 = vmatpush1.bf16.msra.mxu0 %v4327
    %6673 = vmatprep.subr.bf16.mxu0 %v4344
    %6674 = vmatpush1.bf16.msra.mxu0 %v4343
    %6675 = vmatprep.subr.bf16.mxu0 %v4360
    %6676 = vmatpush1.bf16.msra.mxu0 %v4359
    %6677 = vmatprep.subr.bf16.mxu0 %v4376
    %6678 = vmatpush1.bf16.msra.mxu0 %v4375
    %6679 = vmatprep.subr.bf16.mxu0 %v4392
    %6680 = vmatpush1.bf16.msra.mxu0 %v4391
    %6681 = vmatprep.subr.bf16.mxu0 %v4408
    %6682 = vmatpush1.bf16.msra.mxu0 %v4407
    %6683 = vmatprep.subr.bf16.mxu0 %v4424
    %6684 = vmatpush1.bf16.msra.mxu0 %v4423
    %6685 = vmatprep.subr.bf16.mxu0 %v4440
    %6686 = vmatpush1.bf16.msra.mxu0 %v4439
    %6687 = vmatprep.subr.bf16.mxu0 %v4456
    %6688 = vmatpush1.bf16.msra.mxu0 %v4455
    %6689 = vmatprep.subr.bf16.mxu0 %v4472
    %6690 = vmatpush1.bf16.msra.mxu0 %v4471
    %6691 = vmatprep.subr.bf16.mxu0 %v4488
    %6692 = vmatpush1.bf16.msra.mxu0 %v4487
    %6693 = vmatprep.subr.bf16.mxu0 %v4504
    %6694 = vmatpush1.bf16.msra.mxu0 %v4503
    %6695 = vmatprep.subr.bf16.mxu0 %v4520
    %6696 = vmatpush1.bf16.msra.mxu0 %v4519
    %6697 = vmatprep.subr.bf16.mxu0 %v4536
    %6698 = vmatpush1.bf16.msra.mxu0 %v4535
    %6699 = vmatprep.mubr.bf16.mxu0 %v1199
    %6700 = vmatmul.mubr.bf16.gmra.mrb[0].mxu0 %v1185
    %v6701 = vpop.f32.mrb[0].mxu0
    %v6702 = vadd.f32 %v1100, %v6701
    %v6703 = vpop.f32.mrb[0].mxu0
    %v6704 = vadd.f32 %v1104, %v6703
    %v6705 = vpop.f32.mrb[0].mxu0
    %v6706 = vpop.f32.mrb[0].mxu0
    %6707 = vdwg.mxu0
    %6708 = vmatprep.subr.bf16.mxu0 %v4552
    %6709 = vmatpush1.bf16.msra.mxu0 %v4551
    %6710 = vmatprep.subr.bf16.mxu0 %v4568
    %6711 = vmatpush1.bf16.msra.mxu0 %v4567
    %6712 = vmatprep.subr.bf16.mxu0 %v4584
    %6713 = vmatpush1.bf16.msra.mxu0 %v4583
    %6714 = vmatprep.subr.bf16.mxu0 %v4600
    %6715 = vmatpush1.bf16.msra.mxu0 %v4599
    %6716 = vmatprep.subr.bf16.mxu0 %v4616
    %6717 = vmatpush1.bf16.msra.mxu0 %v4615
    %6718 = vmatprep.subr.bf16.mxu0 %v4632
    %6719 = vmatpush1.bf16.msra.mxu0 %v4631
    %6720 = vmatprep.subr.bf16.mxu0 %v4648
    %6721 = vmatpush1.bf16.msra.mxu0 %v4647
    %6722 = vmatprep.subr.bf16.mxu0 %v4664
    %6723 = vmatpush1.bf16.msra.mxu0 %v4663
    %6724 = vmatprep.subr.bf16.mxu0 %v4680
    %6725 = vmatpush1.bf16.msra.mxu0 %v4679
    %6726 = vmatprep.subr.bf16.mxu0 %v4696
    %6727 = vmatpush1.bf16.msra.mxu0 %v4695
    %6728 = vmatprep.subr.bf16.mxu0 %v4712
    %6729 = vmatpush1.bf16.msra.mxu0 %v4711
    %6730 = vmatprep.subr.bf16.mxu0 %v4728
    %6731 = vmatpush1.bf16.msra.mxu0 %v4727
    %6732 = vmatprep.subr.bf16.mxu0 %v4744
    %6733 = vmatpush1.bf16.msra.mxu0 %v4743
    %6734 = vmatprep.subr.bf16.mxu0 %v4760
    %6735 = vmatpush1.bf16.msra.mxu0 %v4759
    %6736 = vmatprep.subr.bf16.mxu0 %v4776
    %6737 = vmatpush1.bf16.msra.mxu0 %v4775
    %6738 = vmatprep.subr.bf16.mxu0 %v4792
    %6739 = vmatpush1.bf16.msra.mxu0 %v4791
    %6740 = vmatprep.mubr.bf16.mxu0 %v1209
    %6741 = vmatmul.mubr.bf16.gmra.mrb[0].mxu0 %v1207
    %v6742 = vpop.f32.mrb[0].mxu0
    %v6743 = vadd.f32 %v6702, %v6742
    %v6744 = vpop.f32.mrb[0].mxu0
    %v6745 = vadd.f32 %v6704, %v6744
    %v6746 = vpop.f32.mrb[0].mxu0
    %v6747 = vpop.f32.mrb[0].mxu0
    %6748 = vdwg.mxu0
    %6749 = vmatprep.subr.bf16.mxu0 %v4808
    %6750 = vmatpush1.bf16.msra.mxu0 %v4807
    %6751 = vmatprep.subr.bf16.mxu0 %v4824
    %6752 = vmatpush1.bf16.msra.mxu0 %v4823
    %6753 = vmatprep.subr.bf16.mxu0 %v4840
    %6754 = vmatpush1.bf16.msra.mxu0 %v4839
    %6755 = vmatprep.subr.bf16.mxu0 %v4856
    %6756 = vmatpush1.bf16.msra.mxu0 %v4855
    %6757 = vmatprep.subr.bf16.mxu0 %v4872
    %6758 = vmatpush1.bf16.msra.mxu0 %v4871
    %6759 = vmatprep.subr.bf16.mxu0 %v4888
    %6760 = vmatpush1.bf16.msra.mxu0 %v4887
    %6761 = vmatprep.subr.bf16.mxu0 %v4904
    %6762 = vmatpush1.bf16.msra.mxu0 %v4903
    %6763 = vmatprep.subr.bf16.mxu0 %v4920
    %6764 = vmatpush1.bf16.msra.mxu0 %v4919
    %6765 = vmatprep.subr.bf16.mxu0 %v4936
    %6766 = vmatpush1.bf16.msra.mxu0 %v4935
    %6767 = vmatprep.subr.bf16.mxu0 %v4952
    %6768 = vmatpush1.bf16.msra.mxu0 %v4951
    %6769 = vmatprep.subr.bf16.mxu0 %v4968
    %6770 = vmatpush1.bf16.msra.mxu0 %v4967
    %6771 = vmatprep.subr.bf16.mxu0 %v4984
    %6772 = vmatpush1.bf16.msra.mxu0 %v4983
    %6773 = vmatprep.subr.bf16.mxu0 %v5000
    %6774 = vmatpush1.bf16.msra.mxu0 %v4999
    %6775 = vmatprep.subr.bf16.mxu0 %v5016
    %6776 = vmatpush1.bf16.msra.mxu0 %v5015
    %6777 = vmatprep.subr.bf16.mxu0 %v5032
    %6778 = vmatpush1.bf16.msra.mxu0 %v5031
    %6779 = vmatprep.subr.bf16.mxu0 %v5048
    %6780 = vmatpush1.bf16.msra.mxu0 %v5047
    %6781 = vmatprep.mubr.bf16.mxu0 %v1206
    %6782 = vmatmul.mubr.bf16.gmra.mrb[0].mxu0 %v1192
    %v6783 = vpop.f32.mrb[0].mxu0
    %v6784 = vadd.f32 %v6743, %v6783
    %v6785 = vpop.f32.mrb[0].mxu0
    %v6786 = vadd.f32 %v6745, %v6785
    %v6787 = vpop.f32.mrb[0].mxu0
    %v6788 = vpop.f32.mrb[0].mxu0
    %6789 = vdwg.mxu0
    %6790 = vmatprep.subr.bf16.mxu0 %v5064
    %6791 = vmatpush1.bf16.msra.mxu0 %v5063
    %6792 = vmatprep.subr.bf16.mxu0 %v5080
    %6793 = vmatpush1.bf16.msra.mxu0 %v5079
    %6794 = vmatprep.subr.bf16.mxu0 %v5096
    %6795 = vmatpush1.bf16.msra.mxu0 %v5095
    %6796 = vmatprep.subr.bf16.mxu0 %v5112
    %6797 = vmatpush1.bf16.msra.mxu0 %v5111
    %6798 = vmatprep.subr.bf16.mxu0 %v5128
    %6799 = vmatpush1.bf16.msra.mxu0 %v5127
    %6800 = vmatprep.subr.bf16.mxu0 %v5144
    %6801 = vmatpush1.bf16.msra.mxu0 %v5143
    %6802 = vmatprep.subr.bf16.mxu0 %v5160
    %6803 = vmatpush1.bf16.msra.mxu0 %v5159
    %6804 = vmatprep.subr.bf16.mxu0 %v5176
    %6805 = vmatpush1.bf16.msra.mxu0 %v5175
    %6806 = vmatprep.subr.bf16.mxu0 %v5192
    %6807 = vmatpush1.bf16.msra.mxu0 %v5191
    %6808 = vmatprep.subr.bf16.mxu0 %v5208
    %6809 = vmatpush1.bf16.msra.mxu0 %v5207
    %6810 = vmatprep.subr.bf16.mxu0 %v5224
    %6811 = vmatpush1.bf16.msra.mxu0 %v5223
    %6812 = vmatprep.subr.bf16.mxu0 %v5240
    %6813 = vmatpush1.bf16.msra.mxu0 %v5239
    %6814 = vmatprep.subr.bf16.mxu0 %v5256
    %6815 = vmatpush1.bf16.msra.mxu0 %v5255
    %6816 = vmatprep.subr.bf16.mxu0 %v5272
    %6817 = vmatpush1.bf16.msra.mxu0 %v5271
    %6818 = vmatprep.subr.bf16.mxu0 %v5288
    %6819 = vmatpush1.bf16.msra.mxu0 %v5287
    %6820 = vmatprep.subr.bf16.mxu0 %v5304
    %6821 = vmatpush1.bf16.msra.mxu0 %v5303
    %6822 = vmatprep.mubr.bf16.mxu0 %v1210
    %6823 = vmatmul.mubr.bf16.gmra.mrb[0].mxu0 %v1208
    %v6824 = vpop.f32.mrb[0].mxu0
    %v6825 = vadd.f32 %v6784, %v6824
    %v6826 = vpop.f32.mrb[0].mxu0
    %v6827 = vadd.f32 %v6786, %v6826
    %v6828 = vpop.f32.mrb[0].mxu0
    %v6829 = vpop.f32.mrb[0].mxu0
    %6830 = vdwg.mxu0
    %6831 = vmatprep.subr.bf16.mxu0 %v4298
    %6832 = vmatpush1.bf16.msra.mxu0 %v4297
    %6833 = vmatprep.subr.bf16.mxu0 %v4314
    %6834 = vmatpush1.bf16.msra.mxu0 %v4313
    %6835 = vmatprep.subr.bf16.mxu0 %v4330
    %6836 = vmatpush1.bf16.msra.mxu0 %v4329
    %6837 = vmatprep.subr.bf16.mxu0 %v4346
    %6838 = vmatpush1.bf16.msra.mxu0 %v4345
    %6839 = vmatprep.subr.bf16.mxu0 %v4362
    %6840 = vmatpush1.bf16.msra.mxu0 %v4361
    %6841 = vmatprep.subr.bf16.mxu0 %v4378
    %6842 = vmatpush1.bf16.msra.mxu0 %v4377
    %6843 = vmatprep.subr.bf16.mxu0 %v4394
    %6844 = vmatpush1.bf16.msra.mxu0 %v4393
    %6845 = vmatprep.subr.bf16.mxu0 %v4410
    %6846 = vmatpush1.bf16.msra.mxu0 %v4409
    %6847 = vmatprep.subr.bf16.mxu0 %v4426
    %6848 = vmatpush1.bf16.msra.mxu0 %v4425
    %6849 = vmatprep.subr.bf16.mxu0 %v4442
    %6850 = vmatpush1.bf16.msra.mxu0 %v4441
    %6851 = vmatprep.subr.bf16.mxu0 %v4458
    %6852 = vmatpush1.bf16.msra.mxu0 %v4457
    %6853 = vmatprep.subr.bf16.mxu0 %v4474
    %6854 = vmatpush1.bf16.msra.mxu0 %v4473
    %6855 = vmatprep.subr.bf16.mxu0 %v4490
    %6856 = vmatpush1.bf16.msra.mxu0 %v4489
    %6857 = vmatprep.subr.bf16.mxu0 %v4506
    %6858 = vmatpush1.bf16.msra.mxu0 %v4505
    %6859 = vmatprep.subr.bf16.mxu0 %v4522
    %6860 = vmatpush1.bf16.msra.mxu0 %v4521
    %6861 = vmatprep.subr.bf16.mxu0 %v4538
    %6862 = vmatpush1.bf16.msra.mxu0 %v4537
    %6863 = vmatprep.mubr.bf16.mxu0 %v1199
    %6864 = vmatmul.mubr.bf16.gmra.mrb[0].mxu0 %v1185
    %v6865 = vpop.f32.mrb[0].mxu0
    %v6866 = vadd.f32 %v1108, %v6865
    %v6867 = vpop.f32.mrb[0].mxu0
    %v6868 = vadd.f32 %v1112, %v6867
    %v6869 = vpop.f32.mrb[0].mxu0
    %v6870 = vpop.f32.mrb[0].mxu0
    %6871 = vdwg.mxu0
    %6872 = vmatprep.subr.bf16.mxu0 %v4554
    %6873 = vmatpush1.bf16.msra.mxu0 %v4553
    %6874 = vmatprep.subr.bf16.mxu0 %v4570
    %6875 = vmatpush1.bf16.msra.mxu0 %v4569
    %6876 = vmatprep.subr.bf16.mxu0 %v4586
    %6877 = vmatpush1.bf16.msra.mxu0 %v4585
    %6878 = vmatprep.subr.bf16.mxu0 %v4602
    %6879 = vmatpush1.bf16.msra.mxu0 %v4601
    %6880 = vmatprep.subr.bf16.mxu0 %v4618
    %6881 = vmatpush1.bf16.msra.mxu0 %v4617
    %6882 = vmatprep.subr.bf16.mxu0 %v4634
    %6883 = vmatpush1.bf16.msra.mxu0 %v4633
    %6884 = vmatprep.subr.bf16.mxu0 %v4650
    %6885 = vmatpush1.bf16.msra.mxu0 %v4649
    %6886 = vmatprep.subr.bf16.mxu0 %v4666
    %6887 = vmatpush1.bf16.msra.mxu0 %v4665
    %6888 = vmatprep.subr.bf16.mxu0 %v4682
    %6889 = vmatpush1.bf16.msra.mxu0 %v4681
    %6890 = vmatprep.subr.bf16.mxu0 %v4698
    %6891 = vmatpush1.bf16.msra.mxu0 %v4697
    %6892 = vmatprep.subr.bf16.mxu0 %v4714
    %6893 = vmatpush1.bf16.msra.mxu0 %v4713
    %6894 = vmatprep.subr.bf16.mxu0 %v4730
    %6895 = vmatpush1.bf16.msra.mxu0 %v4729
    %6896 = vmatprep.subr.bf16.mxu0 %v4746
    %6897 = vmatpush1.bf16.msra.mxu0 %v4745
    %6898 = vmatprep.subr.bf16.mxu0 %v4762
    %6899 = vmatpush1.bf16.msra.mxu0 %v4761
    %6900 = vmatprep.subr.bf16.mxu0 %v4778
    %6901 = vmatpush1.bf16.msra.mxu0 %v4777
    %6902 = vmatprep.subr.bf16.mxu0 %v4794
    %6903 = vmatpush1.bf16.msra.mxu0 %v4793
    %6904 = vmatprep.mubr.bf16.mxu0 %v1209
    %6905 = vmatmul.mubr.bf16.gmra.mrb[0].mxu0 %v1207
    %v6906 = vpop.f32.mrb[0].mxu0
    %v6907 = vadd.f32 %v6866, %v6906
    %v6908 = vpop.f32.mrb[0].mxu0
    %v6909 = vadd.f32 %v6868, %v6908
    %v6910 = vpop.f32.mrb[0].mxu0
    %v6911 = vpop.f32.mrb[0].mxu0
    %6912 = vdwg.mxu0
    %6913 = vmatprep.subr.bf16.mxu0 %v4810
    %6914 = vmatpush1.bf16.msra.mxu0 %v4809
    %6915 = vmatprep.subr.bf16.mxu0 %v4826
    %6916 = vmatpush1.bf16.msra.mxu0 %v4825
    %6917 = vmatprep.subr.bf16.mxu0 %v4842
    %6918 = vmatpush1.bf16.msra.mxu0 %v4841
    %6919 = vmatprep.subr.bf16.mxu0 %v4858
    %6920 = vmatpush1.bf16.msra.mxu0 %v4857
    %6921 = vmatprep.subr.bf16.mxu0 %v4874
    %6922 = vmatpush1.bf16.msra.mxu0 %v4873
    %6923 = vmatprep.subr.bf16.mxu0 %v4890
    %6924 = vmatpush1.bf16.msra.mxu0 %v4889
    %6925 = vmatprep.subr.bf16.mxu0 %v4906
    %6926 = vmatpush1.bf16.msra.mxu0 %v4905
    %6927 = vmatprep.subr.bf16.mxu0 %v4922
    %6928 = vmatpush1.bf16.msra.mxu0 %v4921
    %6929 = vmatprep.subr.bf16.mxu0 %v4938
    %6930 = vmatpush1.bf16.msra.mxu0 %v4937
    %6931 = vmatprep.subr.bf16.mxu0 %v4954
    %6932 = vmatpush1.bf16.msra.mxu0 %v4953
    %6933 = vmatprep.subr.bf16.mxu0 %v4970
    %6934 = vmatpush1.bf16.msra.mxu0 %v4969
    %6935 = vmatprep.subr.bf16.mxu0 %v4986
    %6936 = vmatpush1.bf16.msra.mxu0 %v4985
    %6937 = vmatprep.subr.bf16.mxu0 %v5002
    %6938 = vmatpush1.bf16.msra.mxu0 %v5001
    %6939 = vmatprep.subr.bf16.mxu0 %v5018
    %6940 = vmatpush1.bf16.msra.mxu0 %v5017
    %6941 = vmatprep.subr.bf16.mxu0 %v5034
    %6942 = vmatpush1.bf16.msra.mxu0 %v5033
    %6943 = vmatprep.subr.bf16.mxu0 %v5050
    %6944 = vmatpush1.bf16.msra.mxu0 %v5049
    %6945 = vmatprep.mubr.bf16.mxu0 %v1206
    %6946 = vmatmul.mubr.bf16.gmra.mrb[0].mxu0 %v1192
    %v6947 = vpop.f32.mrb[0].mxu0
    %v6948 = vadd.f32 %v6907, %v6947
    %v6949 = vpop.f32.mrb[0].mxu0
    %v6950 = vadd.f32 %v6909, %v6949
    %v6951 = vpop.f32.mrb[0].mxu0
    %v6952 = vpop.f32.mrb[0].mxu0
    %6953 = vdwg.mxu0
    %6954 = vmatprep.subr.bf16.mxu0 %v5066
    %6955 = vmatpush1.bf16.msra.mxu0 %v5065
    %6956 = vmatprep.subr.bf16.mxu0 %v5082
    %6957 = vmatpush1.bf16.msra.mxu0 %v5081
    %6958 = vmatprep.subr.bf16.mxu0 %v5098
    %6959 = vmatpush1.bf16.msra.mxu0 %v5097
    %6960 = vmatprep.subr.bf16.mxu0 %v5114
    %6961 = vmatpush1.bf16.msra.mxu0 %v5113
    %6962 = vmatprep.subr.bf16.mxu0 %v5130
    %6963 = vmatpush1.bf16.msra.mxu0 %v5129
    %6964 = vmatprep.subr.bf16.mxu0 %v5146
    %6965 = vmatpush1.bf16.msra.mxu0 %v5145
    %6966 = vmatprep.subr.bf16.mxu0 %v5162
    %6967 = vmatpush1.bf16.msra.mxu0 %v5161
    %6968 = vmatprep.subr.bf16.mxu0 %v5178
    %6969 = vmatpush1.bf16.msra.mxu0 %v5177
    %6970 = vmatprep.subr.bf16.mxu0 %v5194
    %6971 = vmatpush1.bf16.msra.mxu0 %v5193
    %6972 = vmatprep.subr.bf16.mxu0 %v5210
    %6973 = vmatpush1.bf16.msra.mxu0 %v5209
    %6974 = vmatprep.subr.bf16.mxu0 %v5226
    %6975 = vmatpush1.bf16.msra.mxu0 %v5225
    %6976 = vmatprep.subr.bf16.mxu0 %v5242
    %6977 = vmatpush1.bf16.msra.mxu0 %v5241
    %6978 = vmatprep.subr.bf16.mxu0 %v5258
    %6979 = vmatpush1.bf16.msra.mxu0 %v5257
    %6980 = vmatprep.subr.bf16.mxu0 %v5274
    %6981 = vmatpush1.bf16.msra.mxu0 %v5273
    %6982 = vmatprep.subr.bf16.mxu0 %v5290
    %6983 = vmatpush1.bf16.msra.mxu0 %v5289
    %6984 = vmatprep.subr.bf16.mxu0 %v5306
    %6985 = vmatpush1.bf16.msra.mxu0 %v5305
    %6986 = vmatprep.mubr.bf16.mxu0 %v1210
    %6987 = vmatmul.mubr.bf16.gmra.mrb[0].mxu0 %v1208
    %v6988 = vpop.f32.mrb[0].mxu0
    %v6989 = vadd.f32 %v6948, %v6988
    %v6990 = vpop.f32.mrb[0].mxu0
    %v6991 = vadd.f32 %v6950, %v6990
    %v6992 = vpop.f32.mrb[0].mxu0
    %v6993 = vpop.f32.mrb[0].mxu0
    %6994 = vdwg.mxu0
    %6995 = vmatprep.subr.bf16.mxu0 %v4300
    %6996 = vmatpush1.bf16.msra.mxu0 %v4299
    %6997 = vmatprep.subr.bf16.mxu0 %v4316
    %6998 = vmatpush1.bf16.msra.mxu0 %v4315
    %6999 = vmatprep.subr.bf16.mxu0 %v4332
    %7000 = vmatpush1.bf16.msra.mxu0 %v4331
    %7001 = vmatprep.subr.bf16.mxu0 %v4348
    %7002 = vmatpush1.bf16.msra.mxu0 %v4347
    %7003 = vmatprep.subr.bf16.mxu0 %v4364
    %7004 = vmatpush1.bf16.msra.mxu0 %v4363
    %7005 = vmatprep.subr.bf16.mxu0 %v4380
    %7006 = vmatpush1.bf16.msra.mxu0 %v4379
    %7007 = vmatprep.subr.bf16.mxu0 %v4396
    %7008 = vmatpush1.bf16.msra.mxu0 %v4395
    %7009 = vmatprep.subr.bf16.mxu0 %v4412
    %7010 = vmatpush1.bf16.msra.mxu0 %v4411
    %7011 = vmatprep.subr.bf16.mxu0 %v4428
    %7012 = vmatpush1.bf16.msra.mxu0 %v4427
    %7013 = vmatprep.subr.bf16.mxu0 %v4444
    %7014 = vmatpush1.bf16.msra.mxu0 %v4443
    %7015 = vmatprep.subr.bf16.mxu0 %v4460
    %7016 = vmatpush1.bf16.msra.mxu0 %v4459
    %7017 = vmatprep.subr.bf16.mxu0 %v4476
    %7018 = vmatpush1.bf16.msra.mxu0 %v4475
    %7019 = vmatprep.subr.bf16.mxu0 %v4492
    %7020 = vmatpush1.bf16.msra.mxu0 %v4491
    %7021 = vmatprep.subr.bf16.mxu0 %v4508
    %7022 = vmatpush1.bf16.msra.mxu0 %v4507
    %7023 = vmatprep.subr.bf16.mxu0 %v4524
    %7024 = vmatpush1.bf16.msra.mxu0 %v4523
    %7025 = vmatprep.subr.bf16.mxu0 %v4540
    %7026 = vmatpush1.bf16.msra.mxu0 %v4539
    %7027 = vmatprep.mubr.bf16.mxu0 %v1199
    %7028 = vmatmul.mubr.bf16.gmra.mrb[0].mxu0 %v1185
    %v7029 = vpop.f32.mrb[0].mxu0
    %v7030 = vadd.f32 %v1116, %v7029
    %v7031 = vpop.f32.mrb[0].mxu0
    %v7032 = vadd.f32 %v1120, %v7031
    %v7033 = vpop.f32.mrb[0].mxu0
    %v7034 = vpop.f32.mrb[0].mxu0
    %7035 = vdwg.mxu0
    %7036 = vmatprep.subr.bf16.mxu0 %v4556
    %7037 = vmatpush1.bf16.msra.mxu0 %v4555
    %7038 = vmatprep.subr.bf16.mxu0 %v4572
    %7039 = vmatpush1.bf16.msra.mxu0 %v4571
    %7040 = vmatprep.subr.bf16.mxu0 %v4588
    %7041 = vmatpush1.bf16.msra.mxu0 %v4587
    %7042 = vmatprep.subr.bf16.mxu0 %v4604
    %7043 = vmatpush1.bf16.msra.mxu0 %v4603
    %7044 = vmatprep.subr.bf16.mxu0 %v4620
    %7045 = vmatpush1.bf16.msra.mxu0 %v4619
    %7046 = vmatprep.subr.bf16.mxu0 %v4636
    %7047 = vmatpush1.bf16.msra.mxu0 %v4635
    %7048 = vmatprep.subr.bf16.mxu0 %v4652
    %7049 = vmatpush1.bf16.msra.mxu0 %v4651
    %7050 = vmatprep.subr.bf16.mxu0 %v4668
    %7051 = vmatpush1.bf16.msra.mxu0 %v4667
    %7052 = vmatprep.subr.bf16.mxu0 %v4684
    %7053 = vmatpush1.bf16.msra.mxu0 %v4683
    %7054 = vmatprep.subr.bf16.mxu0 %v4700
    %7055 = vmatpush1.bf16.msra.mxu0 %v4699
    %7056 = vmatprep.subr.bf16.mxu0 %v4716
    %7057 = vmatpush1.bf16.msra.mxu0 %v4715
    %7058 = vmatprep.subr.bf16.mxu0 %v4732
    %7059 = vmatpush1.bf16.msra.mxu0 %v4731
    %7060 = vmatprep.subr.bf16.mxu0 %v4748
    %7061 = vmatpush1.bf16.msra.mxu0 %v4747
    %7062 = vmatprep.subr.bf16.mxu0 %v4764
    %7063 = vmatpush1.bf16.msra.mxu0 %v4763
    %7064 = vmatprep.subr.bf16.mxu0 %v4780
    %7065 = vmatpush1.bf16.msra.mxu0 %v4779
    %7066 = vmatprep.subr.bf16.mxu0 %v4796
    %7067 = vmatpush1.bf16.msra.mxu0 %v4795
    %7068 = vmatprep.mubr.bf16.mxu0 %v1209
    %7069 = vmatmul.mubr.bf16.gmra.mrb[0].mxu0 %v1207
    %v7070 = vpop.f32.mrb[0].mxu0
    %v7071 = vadd.f32 %v7030, %v7070
    %v7072 = vpop.f32.mrb[0].mxu0
    %v7073 = vadd.f32 %v7032, %v7072
    %v7074 = vpop.f32.mrb[0].mxu0
    %v7075 = vpop.f32.mrb[0].mxu0
    %7076 = vdwg.mxu0
    %7077 = vmatprep.subr.bf16.mxu0 %v4812
    %7078 = vmatpush1.bf16.msra.mxu0 %v4811
    %7079 = vmatprep.subr.bf16.mxu0 %v4828
    %7080 = vmatpush1.bf16.msra.mxu0 %v4827
    %7081 = vmatprep.subr.bf16.mxu0 %v4844
    %7082 = vmatpush1.bf16.msra.mxu0 %v4843
    %7083 = vmatprep.subr.bf16.mxu0 %v4860
    %7084 = vmatpush1.bf16.msra.mxu0 %v4859
    %7085 = vmatprep.subr.bf16.mxu0 %v4876
    %7086 = vmatpush1.bf16.msra.mxu0 %v4875
    %7087 = vmatprep.subr.bf16.mxu0 %v4892
    %7088 = vmatpush1.bf16.msra.mxu0 %v4891
    %7089 = vmatprep.subr.bf16.mxu0 %v4908
    %7090 = vmatpush1.bf16.msra.mxu0 %v4907
    %7091 = vmatprep.subr.bf16.mxu0 %v4924
    %7092 = vmatpush1.bf16.msra.mxu0 %v4923
    %7093 = vmatprep.subr.bf16.mxu0 %v4940
    %7094 = vmatpush1.bf16.msra.mxu0 %v4939
    %7095 = vmatprep.subr.bf16.mxu0 %v4956
    %7096 = vmatpush1.bf16.msra.mxu0 %v4955
    %7097 = vmatprep.subr.bf16.mxu0 %v4972
    %7098 = vmatpush1.bf16.msra.mxu0 %v4971
    %7099 = vmatprep.subr.bf16.mxu0 %v4988
    %7100 = vmatpush1.bf16.msra.mxu0 %v4987
    %7101 = vmatprep.subr.bf16.mxu0 %v5004
    %7102 = vmatpush1.bf16.msra.mxu0 %v5003
    %7103 = vmatprep.subr.bf16.mxu0 %v5020
    %7104 = vmatpush1.bf16.msra.mxu0 %v5019
    %7105 = vmatprep.subr.bf16.mxu0 %v5036
    %7106 = vmatpush1.bf16.msra.mxu0 %v5035
    %7107 = vmatprep.subr.bf16.mxu0 %v5052
    %7108 = vmatpush1.bf16.msra.mxu0 %v5051
    %7109 = vmatprep.mubr.bf16.mxu0 %v1206
    %7110 = vmatmul.mubr.bf16.gmra.mrb[0].mxu0 %v1192
    %v7111 = vpop.f32.mrb[0].mxu0
    %v7112 = vadd.f32 %v7071, %v7111
    %v7113 = vpop.f32.mrb[0].mxu0
    %v7114 = vadd.f32 %v7073, %v7113
    %v7115 = vpop.f32.mrb[0].mxu0
    %v7116 = vpop.f32.mrb[0].mxu0
    %7117 = vdwg.mxu0
    %7118 = vmatprep.subr.bf16.mxu0 %v5068
    %7119 = vmatpush1.bf16.msra.mxu0 %v5067
    %7120 = vmatprep.subr.bf16.mxu0 %v5084
    %7121 = vmatpush1.bf16.msra.mxu0 %v5083
    %7122 = vmatprep.subr.bf16.mxu0 %v5100
    %7123 = vmatpush1.bf16.msra.mxu0 %v5099
    %7124 = vmatprep.subr.bf16.mxu0 %v5116
    %7125 = vmatpush1.bf16.msra.mxu0 %v5115
    %7126 = vmatprep.subr.bf16.mxu0 %v5132
    %7127 = vmatpush1.bf16.msra.mxu0 %v5131
    %7128 = vmatprep.subr.bf16.mxu0 %v5148
    %7129 = vmatpush1.bf16.msra.mxu0 %v5147
    %7130 = vmatprep.subr.bf16.mxu0 %v5164
    %7131 = vmatpush1.bf16.msra.mxu0 %v5163
    %7132 = vmatprep.subr.bf16.mxu0 %v5180
    %7133 = vmatpush1.bf16.msra.mxu0 %v5179
    %7134 = vmatprep.subr.bf16.mxu0 %v5196
    %7135 = vmatpush1.bf16.msra.mxu0 %v5195
    %7136 = vmatprep.subr.bf16.mxu0 %v5212
    %7137 = vmatpush1.bf16.msra.mxu0 %v5211
    %7138 = vmatprep.subr.bf16.mxu0 %v5228
    %7139 = vmatpush1.bf16.msra.mxu0 %v5227
    %7140 = vmatprep.subr.bf16.mxu0 %v5244
    %7141 = vmatpush1.bf16.msra.mxu0 %v5243
    %7142 = vmatprep.subr.bf16.mxu0 %v5260
    %7143 = vmatpush1.bf16.msra.mxu0 %v5259
    %7144 = vmatprep.subr.bf16.mxu0 %v5276
    %7145 = vmatpush1.bf16.msra.mxu0 %v5275
    %7146 = vmatprep.subr.bf16.mxu0 %v5292
    %7147 = vmatpush1.bf16.msra.mxu0 %v5291
    %7148 = vmatprep.subr.bf16.mxu0 %v5308
    %7149 = vmatpush1.bf16.msra.mxu0 %v5307
    %7150 = vmatprep.mubr.bf16.mxu0 %v1210
    %7151 = vmatmul.mubr.bf16.gmra.mrb[0].mxu0 %v1208
    %v7152 = vpop.f32.mrb[0].mxu0
    %v7153 = vadd.f32 %v7112, %v7152
    %v7154 = vpop.f32.mrb[0].mxu0
    %v7155 = vadd.f32 %v7114, %v7154
    %v7156 = vpop.f32.mrb[0].mxu0
    %v7157 = vpop.f32.mrb[0].mxu0
    %7158 = vdwg.mxu0
    %7159 = vmatprep.subr.bf16.mxu0 %v4302
    %7160 = vmatpush1.bf16.msra.mxu0 %v4301
    %7161 = vmatprep.subr.bf16.mxu0 %v4318
    %7162 = vmatpush1.bf16.msra.mxu0 %v4317
    %7163 = vmatprep.subr.bf16.mxu0 %v4334
    %7164 = vmatpush1.bf16.msra.mxu0 %v4333
    %7165 = vmatprep.subr.bf16.mxu0 %v4350
    %7166 = vmatpush1.bf16.msra.mxu0 %v4349
    %7167 = vmatprep.subr.bf16.mxu0 %v4366
    %7168 = vmatpush1.bf16.msra.mxu0 %v4365
    %7169 = vmatprep.subr.bf16.mxu0 %v4382
    %7170 = vmatpush1.bf16.msra.mxu0 %v4381
    %7171 = vmatprep.subr.bf16.mxu0 %v4398
    %7172 = vmatpush1.bf16.msra.mxu0 %v4397
    %7173 = vmatprep.subr.bf16.mxu0 %v4414
    %7174 = vmatpush1.bf16.msra.mxu0 %v4413
    %7175 = vmatprep.subr.bf16.mxu0 %v4430
    %7176 = vmatpush1.bf16.msra.mxu0 %v4429
    %7177 = vmatprep.subr.bf16.mxu0 %v4446
    %7178 = vmatpush1.bf16.msra.mxu0 %v4445
    %7179 = vmatprep.subr.bf16.mxu0 %v4462
    %7180 = vmatpush1.bf16.msra.mxu0 %v4461
    %7181 = vmatprep.subr.bf16.mxu0 %v4478
    %7182 = vmatpush1.bf16.msra.mxu0 %v4477
    %7183 = vmatprep.subr.bf16.mxu0 %v4494
    %7184 = vmatpush1.bf16.msra.mxu0 %v4493
    %7185 = vmatprep.subr.bf16.mxu0 %v4510
    %7186 = vmatpush1.bf16.msra.mxu0 %v4509
    %7187 = vmatprep.subr.bf16.mxu0 %v4526
    %7188 = vmatpush1.bf16.msra.mxu0 %v4525
    %7189 = vmatprep.subr.bf16.mxu0 %v4542
    %7190 = vmatpush1.bf16.msra.mxu0 %v4541
    %7191 = vmatprep.mubr.bf16.mxu0 %v1199
    %7192 = vmatmul.mubr.bf16.gmra.mrb[0].mxu0 %v1185
    %v7193 = vpop.f32.mrb[0].mxu0
    %v7194 = vadd.f32 %v1124, %v7193
    %v7195 = vpop.f32.mrb[0].mxu0
    %v7196 = vadd.f32 %v1128, %v7195
    %v7197 = vpop.f32.mrb[0].mxu0
    %v7198 = vpop.f32.mrb[0].mxu0
    %7199 = vdwg.mxu0
    %7200 = vmatprep.subr.bf16.mxu0 %v4558
    %7201 = vmatpush1.bf16.msra.mxu0 %v4557
    %7202 = vmatprep.subr.bf16.mxu0 %v4574
    %7203 = vmatpush1.bf16.msra.mxu0 %v4573
    %7204 = vmatprep.subr.bf16.mxu0 %v4590
    %7205 = vmatpush1.bf16.msra.mxu0 %v4589
    %7206 = vmatprep.subr.bf16.mxu0 %v4606
    %7207 = vmatpush1.bf16.msra.mxu0 %v4605
    %7208 = vmatprep.subr.bf16.mxu0 %v4622
    %7209 = vmatpush1.bf16.msra.mxu0 %v4621
    %7210 = vmatprep.subr.bf16.mxu0 %v4638
    %7211 = vmatpush1.bf16.msra.mxu0 %v4637
    %7212 = vmatprep.subr.bf16.mxu0 %v4654
    %7213 = vmatpush1.bf16.msra.mxu0 %v4653
    %7214 = vmatprep.subr.bf16.mxu0 %v4670
    %7215 = vmatpush1.bf16.msra.mxu0 %v4669
    %7216 = vmatprep.subr.bf16.mxu0 %v4686
    %7217 = vmatpush1.bf16.msra.mxu0 %v4685
    %7218 = vmatprep.subr.bf16.mxu0 %v4702
    %7219 = vmatpush1.bf16.msra.mxu0 %v4701
    %7220 = vmatprep.subr.bf16.mxu0 %v4718
    %7221 = vmatpush1.bf16.msra.mxu0 %v4717
    %7222 = vmatprep.subr.bf16.mxu0 %v4734
    %7223 = vmatpush1.bf16.msra.mxu0 %v4733
    %7224 = vmatprep.subr.bf16.mxu0 %v4750
    %7225 = vmatpush1.bf16.msra.mxu0 %v4749
    %7226 = vmatprep.subr.bf16.mxu0 %v4766
    %7227 = vmatpush1.bf16.msra.mxu0 %v4765
    %7228 = vmatprep.subr.bf16.mxu0 %v4782
    %7229 = vmatpush1.bf16.msra.mxu0 %v4781
    %7230 = vmatprep.subr.bf16.mxu0 %v4798
    %7231 = vmatpush1.bf16.msra.mxu0 %v4797
    %7232 = vmatprep.mubr.bf16.mxu0 %v1209
    %7233 = vmatmul.mubr.bf16.gmra.mrb[0].mxu0 %v1207
    %v7234 = vpop.f32.mrb[0].mxu0
    %v7235 = vadd.f32 %v7194, %v7234
    %v7236 = vpop.f32.mrb[0].mxu0
    %v7237 = vadd.f32 %v7196, %v7236
    %v7238 = vpop.f32.mrb[0].mxu0
    %v7239 = vpop.f32.mrb[0].mxu0
    %7240 = vdwg.mxu0
    %7241 = vmatprep.subr.bf16.mxu0 %v4814
    %7242 = vmatpush1.bf16.msra.mxu0 %v4813
    %7243 = vmatprep.subr.bf16.mxu0 %v4830
    %7244 = vmatpush1.bf16.msra.mxu0 %v4829
    %7245 = vmatprep.subr.bf16.mxu0 %v4846
    %7246 = vmatpush1.bf16.msra.mxu0 %v4845
    %7247 = vmatprep.subr.bf16.mxu0 %v4862
    %7248 = vmatpush1.bf16.msra.mxu0 %v4861
    %7249 = vmatprep.subr.bf16.mxu0 %v4878
    %7250 = vmatpush1.bf16.msra.mxu0 %v4877
    %7251 = vmatprep.subr.bf16.mxu0 %v4894
    %7252 = vmatpush1.bf16.msra.mxu0 %v4893
    %7253 = vmatprep.subr.bf16.mxu0 %v4910
    %7254 = vmatpush1.bf16.msra.mxu0 %v4909
    %7255 = vmatprep.subr.bf16.mxu0 %v4926
    %7256 = vmatpush1.bf16.msra.mxu0 %v4925
    %7257 = vmatprep.subr.bf16.mxu0 %v4942
    %7258 = vmatpush1.bf16.msra.mxu0 %v4941
    %7259 = vmatprep.subr.bf16.mxu0 %v4958
    %7260 = vmatpush1.bf16.msra.mxu0 %v4957
    %7261 = vmatprep.subr.bf16.mxu0 %v4974
    %7262 = vmatpush1.bf16.msra.mxu0 %v4973
    %7263 = vmatprep.subr.bf16.mxu0 %v4990
    %7264 = vmatpush1.bf16.msra.mxu0 %v4989
    %7265 = vmatprep.subr.bf16.mxu0 %v5006
    %7266 = vmatpush1.bf16.msra.mxu0 %v5005
    %7267 = vmatprep.subr.bf16.mxu0 %v5022
    %7268 = vmatpush1.bf16.msra.mxu0 %v5021
    %7269 = vmatprep.subr.bf16.mxu0 %v5038
    %7270 = vmatpush1.bf16.msra.mxu0 %v5037
    %7271 = vmatprep.subr.bf16.mxu0 %v5054
    %7272 = vmatpush1.bf16.msra.mxu0 %v5053
    %7273 = vmatprep.mubr.bf16.mxu0 %v1206
    %7274 = vmatmul.mubr.bf16.gmra.mrb[0].mxu0 %v1192
    %v7275 = vpop.f32.mrb[0].mxu0
    %v7276 = vadd.f32 %v7235, %v7275
    %v7277 = vpop.f32.mrb[0].mxu0
    %v7278 = vadd.f32 %v7237, %v7277
    %v7279 = vpop.f32.mrb[0].mxu0
    %v7280 = vpop.f32.mrb[0].mxu0
    %7281 = vdwg.mxu0
    %7282 = vmatprep.subr.bf16.mxu0 %v5070
    %7283 = vmatpush1.bf16.msra.mxu0 %v5069
    %7284 = vmatprep.subr.bf16.mxu0 %v5086
    %7285 = vmatpush1.bf16.msra.mxu0 %v5085
    %7286 = vmatprep.subr.bf16.mxu0 %v5102
    %7287 = vmatpush1.bf16.msra.mxu0 %v5101
    %7288 = vmatprep.subr.bf16.mxu0 %v5118
    %7289 = vmatpush1.bf16.msra.mxu0 %v5117
    %7290 = vmatprep.subr.bf16.mxu0 %v5134
    %7291 = vmatpush1.bf16.msra.mxu0 %v5133
    %7292 = vmatprep.subr.bf16.mxu0 %v5150
    %7293 = vmatpush1.bf16.msra.mxu0 %v5149
    %7294 = vmatprep.subr.bf16.mxu0 %v5166
    %7295 = vmatpush1.bf16.msra.mxu0 %v5165
    %7296 = vmatprep.subr.bf16.mxu0 %v5182
    %7297 = vmatpush1.bf16.msra.mxu0 %v5181
    %7298 = vmatprep.subr.bf16.mxu0 %v5198
    %7299 = vmatpush1.bf16.msra.mxu0 %v5197
    %7300 = vmatprep.subr.bf16.mxu0 %v5214
    %7301 = vmatpush1.bf16.msra.mxu0 %v5213
    %7302 = vmatprep.subr.bf16.mxu0 %v5230
    %7303 = vmatpush1.bf16.msra.mxu0 %v5229
    %7304 = vmatprep.subr.bf16.mxu0 %v5246
    %7305 = vmatpush1.bf16.msra.mxu0 %v5245
    %7306 = vmatprep.subr.bf16.mxu0 %v5262
    %7307 = vmatpush1.bf16.msra.mxu0 %v5261
    %7308 = vmatprep.subr.bf16.mxu0 %v5278
    %7309 = vmatpush1.bf16.msra.mxu0 %v5277
    %7310 = vmatprep.subr.bf16.mxu0 %v5294
    %7311 = vmatpush1.bf16.msra.mxu0 %v5293
    %7312 = vmatprep.subr.bf16.mxu0 %v5310
    %7313 = vmatpush1.bf16.msra.mxu0 %v5309
    %7314 = vmatprep.mubr.bf16.mxu0 %v1210
    %7315 = vmatmul.mubr.bf16.gmra.mrb[0].mxu0 %v1208
    %v7316 = vpop.f32.mrb[0].mxu0
    %v7317 = vadd.f32 %v7276, %v7316
    %v7318 = vpop.f32.mrb[0].mxu0
    %v7319 = vadd.f32 %v7278, %v7318
    %v7320 = vpop.f32.mrb[0].mxu0
    %v7321 = vpop.f32.mrb[0].mxu0
    %7322 = vdwg.mxu0
    %7323 = vmatprep.subr.bf16.mxu0 %v4304
    %7324 = vmatpush1.bf16.msra.mxu0 %v4303
    %7325 = vmatprep.subr.bf16.mxu0 %v4320
    %7326 = vmatpush1.bf16.msra.mxu0 %v4319
    %7327 = vmatprep.subr.bf16.mxu0 %v4336
    %7328 = vmatpush1.bf16.msra.mxu0 %v4335
    %7329 = vmatprep.subr.bf16.mxu0 %v4352
    %7330 = vmatpush1.bf16.msra.mxu0 %v4351
    %7331 = vmatprep.subr.bf16.mxu0 %v4368
    %7332 = vmatpush1.bf16.msra.mxu0 %v4367
    %7333 = vmatprep.subr.bf16.mxu0 %v4384
    %7334 = vmatpush1.bf16.msra.mxu0 %v4383
    %7335 = vmatprep.subr.bf16.mxu0 %v4400
    %7336 = vmatpush1.bf16.msra.mxu0 %v4399
    %7337 = vmatprep.subr.bf16.mxu0 %v4416
    %7338 = vmatpush1.bf16.msra.mxu0 %v4415
    %7339 = vmatprep.subr.bf16.mxu0 %v4432
    %7340 = vmatpush1.bf16.msra.mxu0 %v4431
    %7341 = vmatprep.subr.bf16.mxu0 %v4448
    %7342 = vmatpush1.bf16.msra.mxu0 %v4447
    %7343 = vmatprep.subr.bf16.mxu0 %v4464
    %7344 = vmatpush1.bf16.msra.mxu0 %v4463
    %7345 = vmatprep.subr.bf16.mxu0 %v4480
    %7346 = vmatpush1.bf16.msra.mxu0 %v4479
    %7347 = vmatprep.subr.bf16.mxu0 %v4496
    %7348 = vmatpush1.bf16.msra.mxu0 %v4495
    %7349 = vmatprep.subr.bf16.mxu0 %v4512
    %7350 = vmatpush1.bf16.msra.mxu0 %v4511
    %7351 = vmatprep.subr.bf16.mxu0 %v4528
    %7352 = vmatpush1.bf16.msra.mxu0 %v4527
    %7353 = vmatprep.subr.bf16.mxu0 %v4544
    %7354 = vmatpush1.bf16.msra.mxu0 %v4543
    %7355 = vmatprep.mubr.bf16.mxu0 %v1199
    %7356 = vmatmul.mubr.bf16.gmra.mrb[0].mxu0 %v1185
    %v7357 = vpop.f32.mrb[0].mxu0
    %v7358 = vadd.f32 %v1132, %v7357
    %v7359 = vpop.f32.mrb[0].mxu0
    %v7360 = vadd.f32 %v1136, %v7359
    %v7361 = vpop.f32.mrb[0].mxu0
    %v7362 = vpop.f32.mrb[0].mxu0
    %7363 = vdwg.mxu0
    %7364 = vmatprep.subr.bf16.mxu0 %v4560
    %7365 = vmatpush1.bf16.msra.mxu0 %v4559
    %7366 = vmatprep.subr.bf16.mxu0 %v4576
    %7367 = vmatpush1.bf16.msra.mxu0 %v4575
    %7368 = vmatprep.subr.bf16.mxu0 %v4592
    %7369 = vmatpush1.bf16.msra.mxu0 %v4591
    %7370 = vmatprep.subr.bf16.mxu0 %v4608
    %7371 = vmatpush1.bf16.msra.mxu0 %v4607
    %7372 = vmatprep.subr.bf16.mxu0 %v4624
    %7373 = vmatpush1.bf16.msra.mxu0 %v4623
    %7374 = vmatprep.subr.bf16.mxu0 %v4640
    %7375 = vmatpush1.bf16.msra.mxu0 %v4639
    %7376 = vmatprep.subr.bf16.mxu0 %v4656
    %7377 = vmatpush1.bf16.msra.mxu0 %v4655
    %7378 = vmatprep.subr.bf16.mxu0 %v4672
    %7379 = vmatpush1.bf16.msra.mxu0 %v4671
    %7380 = vmatprep.subr.bf16.mxu0 %v4688
    %7381 = vmatpush1.bf16.msra.mxu0 %v4687
    %7382 = vmatprep.subr.bf16.mxu0 %v4704
    %7383 = vmatpush1.bf16.msra.mxu0 %v4703
    %7384 = vmatprep.subr.bf16.mxu0 %v4720
    %7385 = vmatpush1.bf16.msra.mxu0 %v4719
    %7386 = vmatprep.subr.bf16.mxu0 %v4736
    %7387 = vmatpush1.bf16.msra.mxu0 %v4735
    %7388 = vmatprep.subr.bf16.mxu0 %v4752
    %7389 = vmatpush1.bf16.msra.mxu0 %v4751
    %7390 = vmatprep.subr.bf16.mxu0 %v4768
    %7391 = vmatpush1.bf16.msra.mxu0 %v4767
    %7392 = vmatprep.subr.bf16.mxu0 %v4784
    %7393 = vmatpush1.bf16.msra.mxu0 %v4783
    %7394 = vmatprep.subr.bf16.mxu0 %v4800
    %7395 = vmatpush1.bf16.msra.mxu0 %v4799
    %7396 = vmatprep.mubr.bf16.mxu0 %v1209
    %7397 = vmatmul.mubr.bf16.gmra.mrb[0].mxu0 %v1207
    %v7398 = vpop.f32.mrb[0].mxu0
    %v7399 = vadd.f32 %v7358, %v7398
    %v7400 = vpop.f32.mrb[0].mxu0
    %v7401 = vadd.f32 %v7360, %v7400
    %v7402 = vpop.f32.mrb[0].mxu0
    %v7403 = vpop.f32.mrb[0].mxu0
    %7404 = vdwg.mxu0
    %7405 = vmatprep.subr.bf16.mxu0 %v4816
    %7406 = vmatpush1.bf16.msra.mxu0 %v4815
    %7407 = vmatprep.subr.bf16.mxu0 %v4832
    %7408 = vmatpush1.bf16.msra.mxu0 %v4831
    %7409 = vmatprep.subr.bf16.mxu0 %v4848
    %7410 = vmatpush1.bf16.msra.mxu0 %v4847
    %7411 = vmatprep.subr.bf16.mxu0 %v4864
    %7412 = vmatpush1.bf16.msra.mxu0 %v4863
    %7413 = vmatprep.subr.bf16.mxu0 %v4880
    %7414 = vmatpush1.bf16.msra.mxu0 %v4879
    %7415 = vmatprep.subr.bf16.mxu0 %v4896
    %7416 = vmatpush1.bf16.msra.mxu0 %v4895
    %7417 = vmatprep.subr.bf16.mxu0 %v4912
    %7418 = vmatpush1.bf16.msra.mxu0 %v4911
    %7419 = vmatprep.subr.bf16.mxu0 %v4928
    %7420 = vmatpush1.bf16.msra.mxu0 %v4927
    %7421 = vmatprep.subr.bf16.mxu0 %v4944
    %7422 = vmatpush1.bf16.msra.mxu0 %v4943
    %7423 = vmatprep.subr.bf16.mxu0 %v4960
    %7424 = vmatpush1.bf16.msra.mxu0 %v4959
    %7425 = vmatprep.subr.bf16.mxu0 %v4976
    %7426 = vmatpush1.bf16.msra.mxu0 %v4975
    %7427 = vmatprep.subr.bf16.mxu0 %v4992
    %7428 = vmatpush1.bf16.msra.mxu0 %v4991
    %7429 = vmatprep.subr.bf16.mxu0 %v5008
    %7430 = vmatpush1.bf16.msra.mxu0 %v5007
    %7431 = vmatprep.subr.bf16.mxu0 %v5024
    %7432 = vmatpush1.bf16.msra.mxu0 %v5023
    %7433 = vmatprep.subr.bf16.mxu0 %v5040
    %7434 = vmatpush1.bf16.msra.mxu0 %v5039
    %7435 = vmatprep.subr.bf16.mxu0 %v5056
    %7436 = vmatpush1.bf16.msra.mxu0 %v5055
    %7437 = vmatprep.mubr.bf16.mxu0 %v1206
    %7438 = vmatmul.mubr.bf16.gmra.mrb[0].mxu0 %v1192
    %v7439 = vpop.f32.mrb[0].mxu0
    %v7440 = vadd.f32 %v7399, %v7439
    %v7441 = vpop.f32.mrb[0].mxu0
    %v7442 = vadd.f32 %v7401, %v7441
    %v7443 = vpop.f32.mrb[0].mxu0
    %v7444 = vpop.f32.mrb[0].mxu0
    %7445 = vdwg.mxu0
    %7446 = vmatprep.subr.bf16.mxu0 %v5072
    %7447 = vmatpush1.bf16.msra.mxu0 %v5071
    %7448 = vmatprep.subr.bf16.mxu0 %v5088
    %7449 = vmatpush1.bf16.msra.mxu0 %v5087
    %7450 = vmatprep.subr.bf16.mxu0 %v5104
    %7451 = vmatpush1.bf16.msra.mxu0 %v5103
    %7452 = vmatprep.subr.bf16.mxu0 %v5120
    %7453 = vmatpush1.bf16.msra.mxu0 %v5119
    %7454 = vmatprep.subr.bf16.mxu0 %v5136
    %7455 = vmatpush1.bf16.msra.mxu0 %v5135
    %7456 = vmatprep.subr.bf16.mxu0 %v5152
    %7457 = vmatpush1.bf16.msra.mxu0 %v5151
    %7458 = vmatprep.subr.bf16.mxu0 %v5168
    %7459 = vmatpush1.bf16.msra.mxu0 %v5167
    %7460 = vmatprep.subr.bf16.mxu0 %v5184
    %7461 = vmatpush1.bf16.msra.mxu0 %v5183
    %7462 = vmatprep.subr.bf16.mxu0 %v5200
    %7463 = vmatpush1.bf16.msra.mxu0 %v5199
    %7464 = vmatprep.subr.bf16.mxu0 %v5216
    %7465 = vmatpush1.bf16.msra.mxu0 %v5215
    %7466 = vmatprep.subr.bf16.mxu0 %v5232
    %7467 = vmatpush1.bf16.msra.mxu0 %v5231
    %7468 = vmatprep.subr.bf16.mxu0 %v5248
    %7469 = vmatpush1.bf16.msra.mxu0 %v5247
    %7470 = vmatprep.subr.bf16.mxu0 %v5264
    %7471 = vmatpush1.bf16.msra.mxu0 %v5263
    %7472 = vmatprep.subr.bf16.mxu0 %v5280
    %7473 = vmatpush1.bf16.msra.mxu0 %v5279
    %7474 = vmatprep.subr.bf16.mxu0 %v5296
    %7475 = vmatpush1.bf16.msra.mxu0 %v5295
    %7476 = vmatprep.subr.bf16.mxu0 %v5312
    %7477 = vmatpush1.bf16.msra.mxu0 %v5311
    %7478 = vmatprep.mubr.bf16.mxu0 %v1210
    %7479 = vmatmul.mubr.bf16.gmra.mrb[0].mxu0 %v1208
    %v7480 = vpop.f32.mrb[0].mxu0
    %v7481 = vadd.f32 %v7440, %v7480
    %v7482 = vpop.f32.mrb[0].mxu0
    %v7483 = vadd.f32 %v7442, %v7482
    %v7484 = vpop.f32.mrb[0].mxu0
    %v7485 = vpop.f32.mrb[0].mxu0
    %7486 = vdwg.mxu0
    %7487 = vmatprep.subr.bf16.mxu0 %v4306
    %7488 = vmatpush1.bf16.msra.mxu0 %v4305
    %7489 = vmatprep.subr.bf16.mxu0 %v4322
    %7490 = vmatpush1.bf16.msra.mxu0 %v4321
    %7491 = vmatprep.subr.bf16.mxu0 %v4338
    %7492 = vmatpush1.bf16.msra.mxu0 %v4337
    %7493 = vmatprep.subr.bf16.mxu0 %v4354
    %7494 = vmatpush1.bf16.msra.mxu0 %v4353
    %7495 = vmatprep.subr.bf16.mxu0 %v4370
    %7496 = vmatpush1.bf16.msra.mxu0 %v4369
    %7497 = vmatprep.subr.bf16.mxu0 %v4386
    %7498 = vmatpush1.bf16.msra.mxu0 %v4385
    %7499 = vmatprep.subr.bf16.mxu0 %v4402
    %7500 = vmatpush1.bf16.msra.mxu0 %v4401
    %7501 = vmatprep.subr.bf16.mxu0 %v4418
    %7502 = vmatpush1.bf16.msra.mxu0 %v4417
    %7503 = vmatprep.subr.bf16.mxu0 %v4434
    %7504 = vmatpush1.bf16.msra.mxu0 %v4433
    %7505 = vmatprep.subr.bf16.mxu0 %v4450
    %7506 = vmatpush1.bf16.msra.mxu0 %v4449
    %7507 = vmatprep.subr.bf16.mxu0 %v4466
    %7508 = vmatpush1.bf16.msra.mxu0 %v4465
    %7509 = vmatprep.subr.bf16.mxu0 %v4482
    %7510 = vmatpush1.bf16.msra.mxu0 %v4481
    %7511 = vmatprep.subr.bf16.mxu0 %v4498
    %7512 = vmatpush1.bf16.msra.mxu0 %v4497
    %7513 = vmatprep.subr.bf16.mxu0 %v4514
    %7514 = vmatpush1.bf16.msra.mxu0 %v4513
    %7515 = vmatprep.subr.bf16.mxu0 %v4530
    %7516 = vmatpush1.bf16.msra.mxu0 %v4529
    %7517 = vmatprep.subr.bf16.mxu0 %v4546
    %7518 = vmatpush1.bf16.msra.mxu0 %v4545
    %7519 = vmatprep.mubr.bf16.mxu0 %v1199
    %7520 = vmatmul.mubr.bf16.gmra.mrb[0].mxu0 %v1185
    %v7521 = vpop.f32.mrb[0].mxu0
    %v7522 = vadd.f32 %v1140, %v7521
    %v7523 = vpop.f32.mrb[0].mxu0
    %v7524 = vadd.f32 %v1144, %v7523
    %v7525 = vpop.f32.mrb[0].mxu0
    %v7526 = vpop.f32.mrb[0].mxu0
    %7527 = vdwg.mxu0
    %7528 = vmatprep.subr.bf16.mxu0 %v4562
    %7529 = vmatpush1.bf16.msra.mxu0 %v4561
    %7530 = vmatprep.subr.bf16.mxu0 %v4578
    %7531 = vmatpush1.bf16.msra.mxu0 %v4577
    %7532 = vmatprep.subr.bf16.mxu0 %v4594
    %7533 = vmatpush1.bf16.msra.mxu0 %v4593
    %7534 = vmatprep.subr.bf16.mxu0 %v4610
    %7535 = vmatpush1.bf16.msra.mxu0 %v4609
    %7536 = vmatprep.subr.bf16.mxu0 %v4626
    %7537 = vmatpush1.bf16.msra.mxu0 %v4625
    %7538 = vmatprep.subr.bf16.mxu0 %v4642
    %7539 = vmatpush1.bf16.msra.mxu0 %v4641
    %7540 = vmatprep.subr.bf16.mxu0 %v4658
    %7541 = vmatpush1.bf16.msra.mxu0 %v4657
    %7542 = vmatprep.subr.bf16.mxu0 %v4674
    %7543 = vmatpush1.bf16.msra.mxu0 %v4673
    %7544 = vmatprep.subr.bf16.mxu0 %v4690
    %7545 = vmatpush1.bf16.msra.mxu0 %v4689
    %7546 = vmatprep.subr.bf16.mxu0 %v4706
    %7547 = vmatpush1.bf16.msra.mxu0 %v4705
    %7548 = vmatprep.subr.bf16.mxu0 %v4722
    %7549 = vmatpush1.bf16.msra.mxu0 %v4721
    %7550 = vmatprep.subr.bf16.mxu0 %v4738
    %7551 = vmatpush1.bf16.msra.mxu0 %v4737
    %7552 = vmatprep.subr.bf16.mxu0 %v4754
    %7553 = vmatpush1.bf16.msra.mxu0 %v4753
    %7554 = vmatprep.subr.bf16.mxu0 %v4770
    %7555 = vmatpush1.bf16.msra.mxu0 %v4769
    %7556 = vmatprep.subr.bf16.mxu0 %v4786
    %7557 = vmatpush1.bf16.msra.mxu0 %v4785
    %7558 = vmatprep.subr.bf16.mxu0 %v4802
    %7559 = vmatpush1.bf16.msra.mxu0 %v4801
    %7560 = vmatprep.mubr.bf16.mxu0 %v1209
    %7561 = vmatmul.mubr.bf16.gmra.mrb[0].mxu0 %v1207
    %v7562 = vpop.f32.mrb[0].mxu0
    %v7563 = vadd.f32 %v7522, %v7562
    %v7564 = vpop.f32.mrb[0].mxu0
    %v7565 = vadd.f32 %v7524, %v7564
    %v7566 = vpop.f32.mrb[0].mxu0
    %v7567 = vpop.f32.mrb[0].mxu0
    %7568 = vdwg.mxu0
    %7569 = vmatprep.subr.bf16.mxu0 %v4818
    %7570 = vmatpush1.bf16.msra.mxu0 %v4817
    %7571 = vmatprep.subr.bf16.mxu0 %v4834
    %7572 = vmatpush1.bf16.msra.mxu0 %v4833
    %7573 = vmatprep.subr.bf16.mxu0 %v4850
    %7574 = vmatpush1.bf16.msra.mxu0 %v4849
    %7575 = vmatprep.subr.bf16.mxu0 %v4866
    %7576 = vmatpush1.bf16.msra.mxu0 %v4865
    %7577 = vmatprep.subr.bf16.mxu0 %v4882
    %7578 = vmatpush1.bf16.msra.mxu0 %v4881
    %7579 = vmatprep.subr.bf16.mxu0 %v4898
    %7580 = vmatpush1.bf16.msra.mxu0 %v4897
    %7581 = vmatprep.subr.bf16.mxu0 %v4914
    %7582 = vmatpush1.bf16.msra.mxu0 %v4913
    %7583 = vmatprep.subr.bf16.mxu0 %v4930
    %7584 = vmatpush1.bf16.msra.mxu0 %v4929
    %7585 = vmatprep.subr.bf16.mxu0 %v4946
    %7586 = vmatpush1.bf16.msra.mxu0 %v4945
    %7587 = vmatprep.subr.bf16.mxu0 %v4962
    %7588 = vmatpush1.bf16.msra.mxu0 %v4961
    %7589 = vmatprep.subr.bf16.mxu0 %v4978
    %7590 = vmatpush1.bf16.msra.mxu0 %v4977
    %7591 = vmatprep.subr.bf16.mxu0 %v4994
    %7592 = vmatpush1.bf16.msra.mxu0 %v4993
    %7593 = vmatprep.subr.bf16.mxu0 %v5010
    %7594 = vmatpush1.bf16.msra.mxu0 %v5009
    %7595 = vmatprep.subr.bf16.mxu0 %v5026
    %7596 = vmatpush1.bf16.msra.mxu0 %v5025
    %7597 = vmatprep.subr.bf16.mxu0 %v5042
    %7598 = vmatpush1.bf16.msra.mxu0 %v5041
    %7599 = vmatprep.subr.bf16.mxu0 %v5058
    %7600 = vmatpush1.bf16.msra.mxu0 %v5057
    %7601 = vmatprep.mubr.bf16.mxu0 %v1206
    %7602 = vmatmul.mubr.bf16.gmra.mrb[0].mxu0 %v1192
    %v7603 = vpop.f32.mrb[0].mxu0
    %v7604 = vadd.f32 %v7563, %v7603
    %v7605 = vpop.f32.mrb[0].mxu0
    %v7606 = vadd.f32 %v7565, %v7605
    %v7607 = vpop.f32.mrb[0].mxu0
    %v7608 = vpop.f32.mrb[0].mxu0
    %7609 = vdwg.mxu0
    %7610 = vmatprep.subr.bf16.mxu0 %v5074
    %7611 = vmatpush1.bf16.msra.mxu0 %v5073
    %7612 = vmatprep.subr.bf16.mxu0 %v5090
    %7613 = vmatpush1.bf16.msra.mxu0 %v5089
    %7614 = vmatprep.subr.bf16.mxu0 %v5106
    %7615 = vmatpush1.bf16.msra.mxu0 %v5105
    %7616 = vmatprep.subr.bf16.mxu0 %v5122
    %7617 = vmatpush1.bf16.msra.mxu0 %v5121
    %7618 = vmatprep.subr.bf16.mxu0 %v5138
    %7619 = vmatpush1.bf16.msra.mxu0 %v5137
    %7620 = vmatprep.subr.bf16.mxu0 %v5154
    %7621 = vmatpush1.bf16.msra.mxu0 %v5153
    %7622 = vmatprep.subr.bf16.mxu0 %v5170
    %7623 = vmatpush1.bf16.msra.mxu0 %v5169
    %7624 = vmatprep.subr.bf16.mxu0 %v5186
    %7625 = vmatpush1.bf16.msra.mxu0 %v5185
    %7626 = vmatprep.subr.bf16.mxu0 %v5202
    %7627 = vmatpush1.bf16.msra.mxu0 %v5201
    %7628 = vmatprep.subr.bf16.mxu0 %v5218
    %7629 = vmatpush1.bf16.msra.mxu0 %v5217
    %7630 = vmatprep.subr.bf16.mxu0 %v5234
    %7631 = vmatpush1.bf16.msra.mxu0 %v5233
    %7632 = vmatprep.subr.bf16.mxu0 %v5250
    %7633 = vmatpush1.bf16.msra.mxu0 %v5249
    %7634 = vmatprep.subr.bf16.mxu0 %v5266
    %7635 = vmatpush1.bf16.msra.mxu0 %v5265
    %7636 = vmatprep.subr.bf16.mxu0 %v5282
    %7637 = vmatpush1.bf16.msra.mxu0 %v5281
    %7638 = vmatprep.subr.bf16.mxu0 %v5298
    %7639 = vmatpush1.bf16.msra.mxu0 %v5297
    %7640 = vmatprep.subr.bf16.mxu0 %v5314
    %7641 = vmatpush1.bf16.msra.mxu0 %v5313
    %7642 = vmatprep.mubr.bf16.mxu0 %v1210
    %7643 = vmatmul.mubr.bf16.gmra.mrb[0].mxu0 %v1208
    %v7644 = vpop.f32.mrb[0].mxu0
    %v7645 = vadd.f32 %v7604, %v7644
    %v7646 = vpop.f32.mrb[0].mxu0
    %v7647 = vadd.f32 %v7606, %v7646
    %v7648 = vpop.f32.mrb[0].mxu0
    %v7649 = vpop.f32.mrb[0].mxu0
    %7650 = vdwg.mxu0
    %v7667 = vcombine.low %v6497, %v6499
    %v7668 = vcombine.low %v6661, %v6663
    %v7670 = vunpack.c.l.s4 1983009808
    %v7671 = vunpack.c.0.s8 %v7670
    %v7672 = vlaneseq
    %v7673 = vshrl.u32 %v7672, 7
    %v7674 = vsub.s32 %v7671, %v7673
    %v7675 = vrot.slane %v7667, %v7674
    %v7677 = vunpack.c.l.s4 1983009808
    %v7678 = vunpack.c.0.s8 %v7677
    %v7679 = vlaneseq
    %v7680 = vshrl.u32 %v7679, 7
    %v7681 = vsub.s32 %v7678, %v7680
    %v7682 = vrot.slane %v7668, %v7681
    %v7683 = vcombine.low %v7675, %v7682
    %v7684 = vcombine.low %v6825, %v6827
    %v7685 = vcombine.low %v6989, %v6991
    %v7687 = vunpack.c.l.s4 1983009808
    %v7688 = vunpack.c.0.s8 %v7687
    %v7689 = vlaneseq
    %v7690 = vshrl.u32 %v7689, 7
    %v7691 = vsub.s32 %v7688, %v7690
    %v7692 = vrot.slane %v7684, %v7691
    %v7694 = vunpack.c.l.s4 1983009808
    %v7695 = vunpack.c.0.s8 %v7694
    %v7696 = vlaneseq
    %v7697 = vshrl.u32 %v7696, 7
    %v7698 = vsub.s32 %v7695, %v7697
    %v7699 = vrot.slane %v7685, %v7698
    %v7700 = vcombine.low %v7692, %v7699
    %v7701 = vcombine.low %v7153, %v7155
    %v7702 = vcombine.low %v7317, %v7319
    %v7704 = vunpack.c.l.s4 1983009808
    %v7705 = vunpack.c.0.s8 %v7704
    %v7706 = vlaneseq
    %v7707 = vshrl.u32 %v7706, 7
    %v7708 = vsub.s32 %v7705, %v7707
    %v7709 = vrot.slane %v7701, %v7708
    %v7711 = vunpack.c.l.s4 1983009808
    %v7712 = vunpack.c.0.s8 %v7711
    %v7713 = vlaneseq
    %v7714 = vshrl.u32 %v7713, 7
    %v7715 = vsub.s32 %v7712, %v7714
    %v7716 = vrot.slane %v7702, %v7715
    %v7717 = vcombine.low %v7709, %v7716
    %v7718 = vcombine.low %v7481, %v7483
    %v7719 = vcombine.low %v7645, %v7647
    %v7721 = vunpack.c.l.s4 1983009808
    %v7722 = vunpack.c.0.s8 %v7721
    %v7723 = vlaneseq
    %v7724 = vshrl.u32 %v7723, 7
    %v7725 = vsub.s32 %v7722, %v7724
    %v7726 = vrot.slane %v7718, %v7725
    %v7728 = vunpack.c.l.s4 1983009808
    %v7729 = vunpack.c.0.s8 %v7728
    %v7730 = vlaneseq
    %v7731 = vshrl.u32 %v7730, 7
    %v7732 = vsub.s32 %v7729, %v7731
    %v7733 = vrot.slane %v7719, %v7732
    %v7734 = vcombine.low %v7726, %v7733
    %7739 = vst [vmem:[#allocation8] sm:$0xff] %v7683
    %7740 = vst [vmem:[#allocation8 + $0x8] sm:$0xff] %v7700
    %7741 = vst [vmem:[#allocation8 + $0x10] sm:$0xff] %v7717
    %7742 = vst [vmem:[#allocation8 + $0x18] sm:$0xff] %v7734
    // Predicated region
    $region26: #{tpu_custom_call.1} parent=1 // pred_check
      _
    $region27: #{tpu_custom_call.1} parent=1 // pred_check_branch
      %7744 = sbr.rel (0) target = $region29
    $region28: #{tpu_custom_call.1} parent=1 // pred_region
      %s7746 = ssub.s32 512, 512
      %7747 = vsyncadd [#allocation4], %s7746
      %s7749 = sshll.u32 [#allocation8], 4
      %s7750 = int_to_ptr.vmem [resolvable:$true] %s7749
      %7752 = dma.vmem_to_hbm [thread:$0]  %s7750, 512, %s3, [#allocation4]
    $region29: #{tpu_custom_call.1} parent=1 // pred_fallthru
      _
    // Predicated region
    $region30: #{tpu_custom_call.1} parent=1 // pred_check
      _
    $region31: #{tpu_custom_call.1} parent=1 // pred_check_branch
      %7754 = sbr.rel (0) target = $region33
    $region32: #{tpu_custom_call.1} parent=1 // pred_region
      %7755 = dma.done [#allocation4], 512
    $region33: #{tpu_custom_call.1} parent=1 // pred_fallthru
      _
    %7756 = vsyncpa [#allocation3], 1
    %7757 = vsyncpa [#allocation6], 1
    %7758 = vsyncpa [#allocation4], 1

</llo_original>
